<compile_context>
chip_gen: v5e
topology: v5e:2x2
jax: 0.10.0
libtpu: 0.0.40
codegen_flags: <defaults>
</compile_context>

<pallas_src>
import math
from functools import partial

import jax
import jax.numpy as jnp
from jax.experimental import pallas as pl
from jax.experimental.pallas import tpu as pltpu

_VMEM = pl.BlockSpec(memory_space=pltpu.MemorySpace.VMEM)
_SMEM = pl.BlockSpec(memory_space=pltpu.MemorySpace.SMEM)


# ------------------------------ kernel pieces ------------------------------ #

def _eca_gate(pooled, e_ref):
    """Conv1d(1, 1, ks, padding=(ks-1)//2, bias=False) over channels + sigmoid.

    pooled: (B, C) f32.  Implemented as pooled @ band with a banded matrix so
    zero-padded 'same' cross-correlation semantics are exact by construction:
        out[c] = sum_j w[j] * pooled[c + j - p]   (0 outside [0, C))
    """
    B, C = pooled.shape
    ks = e_ref.shape[0]
    p = (ks - 1) // 2
    row = jax.lax.broadcasted_iota(jnp.int32, (C, C), 0)   # input channel c'
    col = jax.lax.broadcasted_iota(jnp.int32, (C, C), 1)   # output channel c
    band = jnp.zeros((C, C), jnp.float32)
    for j in range(ks):                                    # static unroll (ks is tiny)
        band = band + e_ref[j] * (row == col + (j - p)).astype(jnp.float32)
    conv = jnp.dot(pooled, band, preferred_element_type=jnp.float32)
    return jax.nn.sigmoid(conv)                            # (B, C)


def _backbone_eca_stage(x4d, pad_ref, dww_ref, dwb_ref, pww_ref, pwb_ref, e_ref):
    """depthwise 3x3 s2 p1 + ReLU -> pointwise 1x1 + ReLU -> ECA scale.

    x4d: (B, Hi, Wi, Ci) value (NHWC).  Returns (B, Hi//2, Wi//2, Co).
    """
    B, Hi, Wi, Ci = x4d.shape
    Ho, Wo = Hi // 2, Wi // 2
    Co = pww_ref.shape[1]

    # Zero-padded copy of the stage input in VMEM scratch (pad = 1 each side).
    pad_ref[...] = jnp.zeros(pad_ref.shape, pad_ref.dtype)
    pad_ref[:, 1:Hi + 1, 1:Wi + 1, :] = x4d

    # Depthwise 3x3 stride-2 conv: 9-tap MAC, each tap a strided in-kernel view
    # of the padded scratch (stride 2 over H and W); taps read one at a time.
    acc = jnp.zeros((B, Ho, Wo, Ci), jnp.float32)
    for kh in range(3):
        for kw in range(3):
            k = 3 * kh + kw
            tap = pad_ref[:, pl.ds(kh, Ho, 2), pl.ds(kw, Wo, 2), :]
            acc = acc + tap * dww_ref[k:k + 1, :, :, :]     # (1,1,1,Ci) broadcast
    acc = jnp.maximum(acc + dwb_ref[...], 0.0)              # depthwise bias + ReLU

    # Pointwise 1x1 conv on the MXU (+bias, ReLU).
    y = jnp.dot(acc.reshape(B * Ho * Wo, Ci), pww_ref[...],
                preferred_element_type=jnp.float32) + pwb_ref[...]
    y = jnp.maximum(y, 0.0).reshape(B, Ho * Wo, Co)

    # ECA: global average pool -> channel conv -> sigmoid -> scale.
    gate = _eca_gate(jnp.mean(y, axis=1), e_ref)            # (B, Co)
    return (y * gate[:, None, :]).reshape(B, Ho, Wo, Co)


def _mobile_encoder_kernel(x_ref, wi_ref, bi_ref,
                           dww1, dwb1, pww1, pwb1,
                           dww2, dwb2, pww2, pwb2,
                           dww3, dwb3, pww3, pwb3,
                           e1, e2, e3,
                           o1_ref, o2_ref, o3_ref,
                           pad1, pad2, pad3, *, B, H, W):
    # conv_init applied to the three frames == one block-diagonal matmul
    # (shared weights; block order == torch.cat([.., .., ..], dim=1) order).
    c1 = wi_ref.shape[1]
    x0 = jnp.dot(x_ref[...], wi_ref[...],
                 preferred_element_type=jnp.float32) + bi_ref[...]
    x0 = x0.reshape(B, H, W, c1)                            # (B, H, W, 9*Cin)
    # dropout_init: identity at inference.

    s1 = _backbone_eca_stage(x0, pad1, dww1, dwb1, pww1, pwb1, e1)
    o1_ref[...] = s1.astype(o1_ref.dtype)                   # x_first_out
    s2 = _backbone_eca_stage(s1, pad2, dww2, dwb2, pww2, pwb2, e2)
    o2_ref[...] = s2.astype(o2_ref.dtype)                   # x_second_out
    s3 = _backbone_eca_stage(s2, pad3, dww3, dwb3, pww3, pwb3, e3)
    o3_ref[...] = s3.astype(o3_ref.dtype)                   # final output


# ------------------------------ public wrapper ------------------------------ #

def mobile_encoder_forward(params, x_t, x_t_1, x_t_2):
    B, Cin, H, W = x_t.shape
    assert H % 8 == 0 and W % 8 == 0, "three stride-2 stages need H, W % 8 == 0"
    to_nhwc = lambda a: jnp.transpose(a, (0, 2, 3, 1))
    to_nchw = lambda a: jnp.transpose(a, (0, 3, 1, 2))

    # Frames concatenated along channels; shared conv_init becomes one
    # block-diagonal matmul inside the kernel.
    xcat = jnp.concatenate([to_nhwc(x_t), to_nhwc(x_t_1), to_nhwc(x_t_2)], axis=-1)
    x2d = xcat.reshape(B * H * W, 3 * Cin)
    w_init = params["conv_init_w"]                          # (Cin, 3*Cin)
    b_init = params["conv_init_b"]                          # (3*Cin,)
    w_big = jnp.kron(jnp.eye(3, dtype=w_init.dtype), w_init)  # (3*Cin, 9*Cin)
    b_big = jnp.tile(b_init, 3).reshape(1, 9 * Cin)

    dww1, dwb1, pww1, pwb1 = params["enc1"]
    dww2, dwb2, pww2, pwb2 = params["enc2"]
    dww3, dwb3, pww3, pwb3 = params["enc3"]
    c1, co1 = pww1.shape                                    # 9*Cin, 32
    co2 = pww2.shape[1]                                     # 64
    co3 = pww3.shape[1]                                     # out_channels
    H1, W1, H2, W2, H3, W3 = H // 2, W // 2, H // 4, W // 4, H // 8, W // 8

    out_shape = (
        jax.ShapeDtypeStruct((B, H1, W1, co1), jnp.float32),   # x_first_out
        jax.ShapeDtypeStruct((B, H2, W2, co2), jnp.float32),   # x_second_out
        jax.ShapeDtypeStruct((B, H3, W3, co3), jnp.float32),   # final
    )
    scratch_shapes = [                                     # zero-padded stage inputs
        pltpu.VMEM((B, H + 2, W + 2, c1), jnp.float32),
        pltpu.VMEM((B, H1 + 2, W1 + 2, co1), jnp.float32),
        pltpu.VMEM((B, H2 + 2, W2 + 2, co2), jnp.float32),
    ]

    o1, o2, o3 = pl.pallas_call(
        partial(_mobile_encoder_kernel, B=B, H=H, W=W),
        out_shape=out_shape,
        in_specs=[_VMEM] * 15 + [_SMEM] * 3,
        out_specs=(_VMEM, _VMEM, _VMEM),
        scratch_shapes=scratch_shapes,
        compiler_params=pltpu.CompilerParams(vmem_limit_bytes=32 * 1024 * 1024),
    )(x2d, w_big, b_big,
      dww1.reshape(9, 1, 1, c1), dwb1.reshape(1, 1, 1, c1), pww1, pwb1.reshape(1, co1),
      dww2.reshape(9, 1, 1, co1), dwb2.reshape(1, 1, 1, co1), pww2, pwb2.reshape(1, co2),
      dww3.reshape(9, 1, 1, co2), dwb3.reshape(1, 1, 1, co2), pww3, pwb3.reshape(1, co3),
      params["eca1"], params["eca2"], params["eca3"])

    # Module returns (x_total, x_first_out, x_second_out); dropouts = identity (eval).
    return to_nchw(o3), to_nchw(o1), to_nchw(o2)


# ---------------------------- parameter setup ------------------------------ #

def _eca_kernel_size(channel, b=1, gamma=2):
    ks = int(abs((math.log(channel, 2) + b) / gamma))
    return ks if ks % 2 else ks + 1


def init_params(key, in_channels, out_channels):
    keys = iter(jax.random.split(key, 32))

    def nrm(shape, fan_in):
        return jax.random.normal(next(keys), shape, jnp.float32) / jnp.sqrt(float(fan_in))

    params = {}
    params["conv_init_w"] = nrm((in_channels, in_channels * 3), in_channels)  # (Cin, Cout)
    params["conv_init_b"] = nrm((in_channels * 3,), in_channels)

    def backbone(cin, cout):
        dww = nrm((9, cin), 9)            # depthwise taps (kh*3+kw, C)
        dwb = nrm((cin,), 9)
        pww = nrm((cin, cout), cin)       # pointwise (Cin, Cout)
        pwb = nrm((cout,), cin)
        return (dww, dwb, pww, pwb)

    params["enc1"] = backbone(in_channels * 9, 32)
    params["enc2"] = backbone(32, 64)
    params["enc3"] = backbone(64, out_channels)

    params["eca1"] = nrm((_eca_kernel_size(32),), 3)
    params["eca2"] = nrm((_eca_kernel_size(64),), 3)
    params["eca3"] = nrm((_eca_kernel_size(out_channels),), 3)
    return params


# ---------------------------------- main ----------------------------------- #

if __name__ == "__main__":
    key = jax.random.PRNGKey(0)
    kp, k1, k2, k3 = jax.random.split(key, 4)

    in_channels, out_channels = 4, 32
    B, H, W = 2, 16, 16

    params = init_params(kp, in_channels, out_channels)
    x_t = jax.random.normal(k1, (B, in_channels, H, W), jnp.float32)
    x_t_1 = jax.random.normal(k2, (B, in_channels, H, W), jnp.float32)
    x_t_2 = jax.random.normal(k3, (B, in_channels, H, W), jnp.float32)

    fwd = jax.jit(mobile_encoder_forward)
    out, first, second = fwd(params, x_t, x_t_1, x_t_2)
    jax.block_until_ready((out, first, second))

    assert out.shape == (B, out_channels, H // 8, W // 8)
    assert first.shape == (B, 32, H // 2, W // 2)
    assert second.shape == (B, 64, H // 4, W // 4)
    print("KERNEL_OK")
</pallas_src>

<mosaic_0001>
module attributes {stable_mosaic.version = 11 : i64} {
  func.func @_mobile_encoder_kernel(%arg0: memref<512x12xf32, #tpu.memory_space<vmem>>, %arg1: memref<12x36xf32, #tpu.memory_space<vmem>>, %arg2: memref<1x36xf32, #tpu.memory_space<vmem>>, %arg3: memref<9x1x1x36xf32, #tpu.memory_space<vmem>>, %arg4: memref<1x1x1x36xf32, #tpu.memory_space<vmem>>, %arg5: memref<36x32xf32, #tpu.memory_space<vmem>>, %arg6: memref<1x32xf32, #tpu.memory_space<vmem>>, %arg7: memref<9x1x1x32xf32, #tpu.memory_space<vmem>>, %arg8: memref<1x1x1x32xf32, #tpu.memory_space<vmem>>, %arg9: memref<32x64xf32, #tpu.memory_space<vmem>>, %arg10: memref<1x64xf32, #tpu.memory_space<vmem>>, %arg11: memref<9x1x1x64xf32, #tpu.memory_space<vmem>>, %arg12: memref<1x1x1x64xf32, #tpu.memory_space<vmem>>, %arg13: memref<64x32xf32, #tpu.memory_space<vmem>>, %arg14: memref<1x32xf32, #tpu.memory_space<vmem>>, %arg15: memref<3xf32, #tpu.memory_space<smem>>, %arg16: memref<3xf32, #tpu.memory_space<smem>>, %arg17: memref<3xf32, #tpu.memory_space<smem>>, %arg18: memref<2x8x8x32xf32, #tpu.memory_space<vmem>>, %arg19: memref<2x4x4x64xf32, #tpu.memory_space<vmem>>, %arg20: memref<2x2x2x32xf32, #tpu.memory_space<vmem>>, %arg21: memref<2x18x18x36xf32, #tpu.memory_space<vmem>>, %arg22: memref<2x10x10x32xf32, #tpu.memory_space<vmem>>, %arg23: memref<2x6x6x64xf32, #tpu.memory_space<vmem>>) attributes {dimension_semantics = [], scalar_prefetch = 0 : i64, scratch_operands = 3 : i64, tpu.core_type = #tpu.core_type<tc>} {
    %c0 = arith.constant 0 : index
    %c0_0 = arith.constant 0 : index
    %0 = vector.load %arg0[%c0, %c0_0] : memref<512x12xf32, #tpu.memory_space<vmem>>, vector<512x12xf32>
    %c0_1 = arith.constant 0 : index
    %c0_2 = arith.constant 0 : index
    %1 = vector.load %arg1[%c0_1, %c0_2] : memref<12x36xf32, #tpu.memory_space<vmem>>, vector<12x36xf32>
    %cst = arith.constant dense<0.000000e+00> : vector<512x36xf32>
    %2 = tpu.matmul %0, %1, %cst {dimension_numbers = #tpu.dot_dimension_numbers<[1], [0], [0], [1], [0, 0, 1, 1], [], []>} : vector<512x12xf32>, vector<12x36xf32>, vector<512x36xf32> -> vector<512x36xf32>
    %c0_3 = arith.constant 0 : index
    %c0_4 = arith.constant 0 : index
    %3 = vector.load %arg2[%c0_3, %c0_4] : memref<1x36xf32, #tpu.memory_space<vmem>>, vector<1x36xf32>
    %4 = vector.broadcast %3 : vector<1x36xf32> to vector<512x36xf32>
    %5 = arith.addf %2, %4 : vector<512x36xf32>
    %6 = vector.shape_cast %5 : vector<512x36xf32> to vector<2x16x16x36xf32>
    %cst_5 = arith.constant 0.000000e+00 : f32
    %7 = vector.broadcast %cst_5 : f32 to vector<2x18x18x36xf32>
    %c0_6 = arith.constant 0 : index
    %c0_7 = arith.constant 0 : index
    %c0_8 = arith.constant 0 : index
    %c0_9 = arith.constant 0 : index
    %8 = vector.load %arg21[%c0_6, %c0_7, %c0_8, %c0_9] : memref<2x18x18x36xf32, #tpu.memory_space<vmem>>, vector<2x18x18x36xf32>
    tpu.vector_store %arg21[%c0_6, %c0_7, %c0_8, %c0_9], %7 {strides = array<i32>} : memref<2x18x18x36xf32, #tpu.memory_space<vmem>>, vector<2x18x18x36xf32>,
    %c0_10 = arith.constant 0 : index
    %c1 = arith.constant 1 : index
    %c1_11 = arith.constant 1 : index
    %c0_12 = arith.constant 0 : index
    %9 = vector.load %arg21[%c0_10, %c1, %c1_11, %c0_12] : memref<2x18x18x36xf32, #tpu.memory_space<vmem>>, vector<2x16x16x36xf32>
    tpu.vector_store %arg21[%c0_10, %c1, %c1_11, %c0_12], %6 {strides = array<i32>} : memref<2x18x18x36xf32, #tpu.memory_space<vmem>>, vector<2x16x16x36xf32>,
    %cst_13 = arith.constant 0.000000e+00 : f32
    %10 = vector.broadcast %cst_13 : f32 to vector<2x8x8x36xf32>
    %c0_14 = arith.constant 0 : index
    %c0_15 = arith.constant 0 : index
    %c0_16 = arith.constant 0 : index
    %c0_17 = arith.constant 0 : index
    %11 = tpu.strided_load %arg21[%c0_14, %c0_15, %c0_16, %c0_17] {strides = array<i32: 1, 2, 2, 1>} : memref<2x18x18x36xf32, #tpu.memory_space<vmem>>, vector<2x8x8x36xf32>
    %c0_18 = arith.constant 0 : index
    %c0_19 = arith.constant 0 : index
    %c0_20 = arith.constant 0 : index
    %c0_21 = arith.constant 0 : index
    %12 = vector.load %arg3[%c0_18, %c0_19, %c0_20, %c0_21] : memref<9x1x1x36xf32, #tpu.memory_space<vmem>>, vector<1x1x1x36xf32>
    %13 = vector.broadcast %12 : vector<1x1x1x36xf32> to vector<2x8x8x36xf32>
    %14 = arith.mulf %11, %13 : vector<2x8x8x36xf32>
    %15 = arith.addf %10, %14 : vector<2x8x8x36xf32>
    %c0_22 = arith.constant 0 : index
    %c0_23 = arith.constant 0 : index
    %c1_24 = arith.constant 1 : index
    %c0_25 = arith.constant 0 : index
    %16 = tpu.strided_load %arg21[%c0_22, %c0_23, %c1_24, %c0_25] {strides = array<i32: 1, 2, 2, 1>} : memref<2x18x18x36xf32, #tpu.memory_space<vmem>>, vector<2x8x8x36xf32>
    %c1_26 = arith.constant 1 : index
    %c0_27 = arith.constant 0 : index
    %c0_28 = arith.constant 0 : index
    %c0_29 = arith.constant 0 : index
    %17 = vector.load %arg3[%c1_26, %c0_27, %c0_28, %c0_29] : memref<9x1x1x36xf32, #tpu.memory_space<vmem>>, vector<1x1x1x36xf32>
    %18 = vector.broadcast %17 : vector<1x1x1x36xf32> to vector<2x8x8x36xf32>
    %19 = arith.mulf %16, %18 : vector<2x8x8x36xf32>
    %20 = arith.addf %15, %19 : vector<2x8x8x36xf32>
    %c0_30 = arith.constant 0 : index
    %c0_31 = arith.constant 0 : index
    %c2 = arith.constant 2 : index
    %c0_32 = arith.constant 0 : index
    %21 = tpu.strided_load %arg21[%c0_30, %c0_31, %c2, %c0_32] {strides = array<i32: 1, 2, 2, 1>} : memref<2x18x18x36xf32, #tpu.memory_space<vmem>>, vector<2x8x8x36xf32>
    %c2_33 = arith.constant 2 : index
    %c0_34 = arith.constant 0 : index
    %c0_35 = arith.constant 0 : index
    %c0_36 = arith.constant 0 : index
    %22 = vector.load %arg3[%c2_33, %c0_34, %c0_35, %c0_36] : memref<9x1x1x36xf32, #tpu.memory_space<vmem>>, vector<1x1x1x36xf32>
    %23 = vector.broadcast %22 : vector<1x1x1x36xf32> to vector<2x8x8x36xf32>
    %24 = arith.mulf %21, %23 : vector<2x8x8x36xf32>
    %25 = arith.addf %20, %24 : vector<2x8x8x36xf32>
    %c0_37 = arith.constant 0 : index
    %c1_38 = arith.constant 1 : index
    %c0_39 = arith.constant 0 : index
    %c0_40 = arith.constant 0 : index
    %26 = tpu.strided_load %arg21[%c0_37, %c1_38, %c0_39, %c0_40] {strides = array<i32: 1, 2, 2, 1>} : memref<2x18x18x36xf32, #tpu.memory_space<vmem>>, vector<2x8x8x36xf32>
    %c3 = arith.constant 3 : index
    %c0_41 = arith.constant 0 : index
    %c0_42 = arith.constant 0 : index
    %c0_43 = arith.constant 0 : index
    %27 = vector.load %arg3[%c3, %c0_41, %c0_42, %c0_43] : memref<9x1x1x36xf32, #tpu.memory_space<vmem>>, vector<1x1x1x36xf32>
    %28 = vector.broadcast %27 : vector<1x1x1x36xf32> to vector<2x8x8x36xf32>
    %29 = arith.mulf %26, %28 : vector<2x8x8x36xf32>
    %30 = arith.addf %25, %29 : vector<2x8x8x36xf32>
    %c0_44 = arith.constant 0 : index
    %c1_45 = arith.constant 1 : index
    %c1_46 = arith.constant 1 : index
    %c0_47 = arith.constant 0 : index
    %31 = tpu.strided_load %arg21[%c0_44, %c1_45, %c1_46, %c0_47] {strides = array<i32: 1, 2, 2, 1>} : memref<2x18x18x36xf32, #tpu.memory_space<vmem>>, vector<2x8x8x36xf32>
    %c4 = arith.constant 4 : index
    %c0_48 = arith.constant 0 : index
    %c0_49 = arith.constant 0 : index
    %c0_50 = arith.constant 0 : index
    %32 = vector.load %arg3[%c4, %c0_48, %c0_49, %c0_50] : memref<9x1x1x36xf32, #tpu.memory_space<vmem>>, vector<1x1x1x36xf32>
    %33 = vector.broadcast %32 : vector<1x1x1x36xf32> to vector<2x8x8x36xf32>
    %34 = arith.mulf %31, %33 : vector<2x8x8x36xf32>
    %35 = arith.addf %30, %34 : vector<2x8x8x36xf32>
    %c0_51 = arith.constant 0 : index
    %c1_52 = arith.constant 1 : index
    %c2_53 = arith.constant 2 : index
    %c0_54 = arith.constant 0 : index
    %36 = tpu.strided_load %arg21[%c0_51, %c1_52, %c2_53, %c0_54] {strides = array<i32: 1, 2, 2, 1>} : memref<2x18x18x36xf32, #tpu.memory_space<vmem>>, vector<2x8x8x36xf32>
    %c5 = arith.constant 5 : index
    %c0_55 = arith.constant 0 : index
    %c0_56 = arith.constant 0 : index
    %c0_57 = arith.constant 0 : index
    %37 = vector.load %arg3[%c5, %c0_55, %c0_56, %c0_57] : memref<9x1x1x36xf32, #tpu.memory_space<vmem>>, vector<1x1x1x36xf32>
    %38 = vector.broadcast %37 : vector<1x1x1x36xf32> to vector<2x8x8x36xf32>
    %39 = arith.mulf %36, %38 : vector<2x8x8x36xf32>
    %40 = arith.addf %35, %39 : vector<2x8x8x36xf32>
    %c0_58 = arith.constant 0 : index
    %c2_59 = arith.constant 2 : index
    %c0_60 = arith.constant 0 : index
    %c0_61 = arith.constant 0 : index
    %41 = tpu.strided_load %arg21[%c0_58, %c2_59, %c0_60, %c0_61] {strides = array<i32: 1, 2, 2, 1>} : memref<2x18x18x36xf32, #tpu.memory_space<vmem>>, vector<2x8x8x36xf32>
    %c6 = arith.constant 6 : index
    %c0_62 = arith.constant 0 : index
    %c0_63 = arith.constant 0 : index
    %c0_64 = arith.constant 0 : index
    %42 = vector.load %arg3[%c6, %c0_62, %c0_63, %c0_64] : memref<9x1x1x36xf32, #tpu.memory_space<vmem>>, vector<1x1x1x36xf32>
    %43 = vector.broadcast %42 : vector<1x1x1x36xf32> to vector<2x8x8x36xf32>
    %44 = arith.mulf %41, %43 : vector<2x8x8x36xf32>
    %45 = arith.addf %40, %44 : vector<2x8x8x36xf32>
    %c0_65 = arith.constant 0 : index
    %c2_66 = arith.constant 2 : index
    %c1_67 = arith.constant 1 : index
    %c0_68 = arith.constant 0 : index
    %46 = tpu.strided_load %arg21[%c0_65, %c2_66, %c1_67, %c0_68] {strides = array<i32: 1, 2, 2, 1>} : memref<2x18x18x36xf32, #tpu.memory_space<vmem>>, vector<2x8x8x36xf32>
    %c7 = arith.constant 7 : index
    %c0_69 = arith.constant 0 : index
    %c0_70 = arith.constant 0 : index
    %c0_71 = arith.constant 0 : index
    %47 = vector.load %arg3[%c7, %c0_69, %c0_70, %c0_71] : memref<9x1x1x36xf32, #tpu.memory_space<vmem>>, vector<1x1x1x36xf32>
    %48 = vector.broadcast %47 : vector<1x1x1x36xf32> to vector<2x8x8x36xf32>
    %49 = arith.mulf %46, %48 : vector<2x8x8x36xf32>
    %50 = arith.addf %45, %49 : vector<2x8x8x36xf32>
    %c0_72 = arith.constant 0 : index
    %c2_73 = arith.constant 2 : index
    %c2_74 = arith.constant 2 : index
    %c0_75 = arith.constant 0 : index
    %51 = tpu.strided_load %arg21[%c0_72, %c2_73, %c2_74, %c0_75] {strides = array<i32: 1, 2, 2, 1>} : memref<2x18x18x36xf32, #tpu.memory_space<vmem>>, vector<2x8x8x36xf32>
    %c8 = arith.constant 8 : index
    %c0_76 = arith.constant 0 : index
    %c0_77 = arith.constant 0 : index
    %c0_78 = arith.constant 0 : index
    %52 = vector.load %arg3[%c8, %c0_76, %c0_77, %c0_78] : memref<9x1x1x36xf32, #tpu.memory_space<vmem>>, vector<1x1x1x36xf32>
    %53 = vector.broadcast %52 : vector<1x1x1x36xf32> to vector<2x8x8x36xf32>
    %54 = arith.mulf %51, %53 : vector<2x8x8x36xf32>
    %55 = arith.addf %50, %54 : vector<2x8x8x36xf32>
    %c0_79 = arith.constant 0 : index
    %c0_80 = arith.constant 0 : index
    %c0_81 = arith.constant 0 : index
    %c0_82 = arith.constant 0 : index
    %56 = vector.load %arg4[%c0_79, %c0_80, %c0_81, %c0_82] : memref<1x1x1x36xf32, #tpu.memory_space<vmem>>, vector<1x1x1x36xf32>
    %57 = vector.broadcast %56 : vector<1x1x1x36xf32> to vector<2x8x8x36xf32>
    %58 = arith.addf %55, %57 : vector<2x8x8x36xf32>
    %cst_83 = arith.constant 0.000000e+00 : f32
    %59 = vector.broadcast %cst_83 : f32 to vector<2x8x8x36xf32>
    %60 = arith.maximumf %58, %59 : vector<2x8x8x36xf32>
    %61 = vector.shape_cast %60 : vector<2x8x8x36xf32> to vector<128x36xf32>
    %c0_84 = arith.constant 0 : index
    %c0_85 = arith.constant 0 : index
    %62 = vector.load %arg5[%c0_84, %c0_85] : memref<36x32xf32, #tpu.memory_space<vmem>>, vector<36x32xf32>
    %cst_86 = arith.constant dense<0.000000e+00> : vector<128x32xf32>
    %63 = tpu.matmul %61, %62, %cst_86 {dimension_numbers = #tpu.dot_dimension_numbers<[1], [0], [0], [1], [0, 0, 1, 1], [], []>} : vector<128x36xf32>, vector<36x32xf32>, vector<128x32xf32> -> vector<128x32xf32>
    %c0_87 = arith.constant 0 : index
    %c0_88 = arith.constant 0 : index
    %64 = vector.load %arg6[%c0_87, %c0_88] : memref<1x32xf32, #tpu.memory_space<vmem>>, vector<1x32xf32>
    %65 = vector.broadcast %64 : vector<1x32xf32> to vector<128x32xf32>
    %66 = arith.addf %63, %65 : vector<128x32xf32>
    %cst_89 = arith.constant 0.000000e+00 : f32
    %67 = vector.broadcast %cst_89 : f32 to vector<128x32xf32>
    %68 = arith.maximumf %66, %67 : vector<128x32xf32>
    %69 = vector.shape_cast %68 : vector<128x32xf32> to vector<2x64x32xf32>
    %cst_90 = arith.constant dense<0.000000e+00> : vector<2x32xf32>
    %70 = vector.multi_reduction <add>, %69, %cst_90 [1] : vector<2x64x32xf32> to vector<2x32xf32>
    %cst_91 = arith.constant 6.400000e+01 : f32
    %71 = vector.broadcast %cst_91 : f32 to vector<2x32xf32>
    %72 = arith.divf %70, %71 : vector<2x32xf32>
    %73 = tpu.iota {dimensions = array<i32: 0>} : vector<32x32xi32>
    %74 = tpu.iota {dimensions = array<i32: 1>} : vector<32x32xi32>
    %cst_92 = arith.constant 0.000000e+00 : f32
    %75 = vector.broadcast %cst_92 : f32 to vector<32x32xf32>
    %c0_93 = arith.constant 0 : index
    %76 = memref.load %arg15[%c0_93] : memref<3xf32, #tpu.memory_space<smem>>
    %c-1_i32 = arith.constant -1 : i32
    %77 = vector.broadcast %c-1_i32 : i32 to vector<32x32xi32>
    %78 = arith.addi %74, %77 : vector<32x32xi32>
    %79 = arith.cmpi eq, %73, %78 : vector<32x32xi32>
    %80 = arith.extui %79 : vector<32x32xi1> to vector<32x32xi32>
    %81 = arith.sitofp %80 : vector<32x32xi32> to vector<32x32xf32>
    %82 = vector.broadcast %76 : f32 to vector<32x32xf32>
    %83 = arith.mulf %82, %81 : vector<32x32xf32>
    %84 = arith.addf %75, %83 : vector<32x32xf32>
    %c1_94 = arith.constant 1 : index
    %85 = memref.load %arg15[%c1_94] : memref<3xf32, #tpu.memory_space<smem>>
    %c0_i32 = arith.constant 0 : i32
    %86 = vector.broadcast %c0_i32 : i32 to vector<32x32xi32>
    %87 = arith.addi %74, %86 : vector<32x32xi32>
    %88 = arith.cmpi eq, %73, %87 : vector<32x32xi32>
    %89 = arith.extui %88 : vector<32x32xi1> to vector<32x32xi32>
    %90 = arith.sitofp %89 : vector<32x32xi32> to vector<32x32xf32>
    %91 = vector.broadcast %85 : f32 to vector<32x32xf32>
    %92 = arith.mulf %91, %90 : vector<32x32xf32>
    %93 = arith.addf %84, %92 : vector<32x32xf32>
    %c2_95 = arith.constant 2 : index
    %94 = memref.load %arg15[%c2_95] : memref<3xf32, #tpu.memory_space<smem>>
    %c1_i32 = arith.constant 1 : i32
    %95 = vector.broadcast %c1_i32 : i32 to vector<32x32xi32>
    %96 = arith.addi %74, %95 : vector<32x32xi32>
    %97 = arith.cmpi eq, %73, %96 : vector<32x32xi32>
    %98 = arith.extui %97 : vector<32x32xi1> to vector<32x32xi32>
    %99 = arith.sitofp %98 : vector<32x32xi32> to vector<32x32xf32>
    %100 = vector.broadcast %94 : f32 to vector<32x32xf32>
    %101 = arith.mulf %100, %99 : vector<32x32xf32>
    %102 = arith.addf %93, %101 : vector<32x32xf32>
    %cst_96 = arith.constant dense<0.000000e+00> : vector<2x32xf32>
    %103 = tpu.matmul %72, %102, %cst_96 {dimension_numbers = #tpu.dot_dimension_numbers<[1], [0], [0], [1], [0, 0, 1, 1], [], []>} : vector<2x32xf32>, vector<32x32xf32>, vector<2x32xf32> -> vector<2x32xf32>
    %104 = arith.negf %103 : vector<2x32xf32>
    %105 = math.exp %104 : vector<2x32xf32>
    %cst_97 = arith.constant 1.000000e+00 : f32
    %106 = vector.broadcast %cst_97 : f32 to vector<2x32xf32>
    %107 = arith.addf %106, %105 : vector<2x32xf32>
    %108 = arith.divf %106, %107 : vector<2x32xf32>
    %109 = vector.shape_cast %108 : vector<2x32xf32> to vector<2x1x32xf32>
    %110 = vector.broadcast %109 : vector<2x1x32xf32> to vector<2x64x32xf32>
    %111 = arith.mulf %69, %110 : vector<2x64x32xf32>
    %112 = vector.shape_cast %111 : vector<2x64x32xf32> to vector<2x8x8x32xf32>
    %c0_98 = arith.constant 0 : index
    %c0_99 = arith.constant 0 : index
    %c0_100 = arith.constant 0 : index
    %c0_101 = arith.constant 0 : index
    %113 = vector.load %arg18[%c0_98, %c0_99, %c0_100, %c0_101] : memref<2x8x8x32xf32, #tpu.memory_space<vmem>>, vector<2x8x8x32xf32>
    tpu.vector_store %arg18[%c0_98, %c0_99, %c0_100, %c0_101], %112 {strides = array<i32>} : memref<2x8x8x32xf32, #tpu.memory_space<vmem>>, vector<2x8x8x32xf32>,
    %cst_102 = arith.constant 0.000000e+00 : f32
    %114 = vector.broadcast %cst_102 : f32 to vector<2x10x10x32xf32>
    %c0_103 = arith.constant 0 : index
    %c0_104 = arith.constant 0 : index
    %c0_105 = arith.constant 0 : index
    %c0_106 = arith.constant 0 : index
    %115 = vector.load %arg22[%c0_103, %c0_104, %c0_105, %c0_106] : memref<2x10x10x32xf32, #tpu.memory_space<vmem>>, vector<2x10x10x32xf32>
    tpu.vector_store %arg22[%c0_103, %c0_104, %c0_105, %c0_106], %114 {strides = array<i32>} : memref<2x10x10x32xf32, #tpu.memory_space<vmem>>, vector<2x10x10x32xf32>,
    %c0_107 = arith.constant 0 : index
    %c1_108 = arith.constant 1 : index
    %c1_109 = arith.constant 1 : index
    %c0_110 = arith.constant 0 : index
    %116 = vector.load %arg22[%c0_107, %c1_108, %c1_109, %c0_110] : memref<2x10x10x32xf32, #tpu.memory_space<vmem>>, vector<2x8x8x32xf32>
    tpu.vector_store %arg22[%c0_107, %c1_108, %c1_109, %c0_110], %112 {strides = array<i32>} : memref<2x10x10x32xf32, #tpu.memory_space<vmem>>, vector<2x8x8x32xf32>,
    %cst_111 = arith.constant 0.000000e+00 : f32
    %117 = vector.broadcast %cst_111 : f32 to vector<2x4x4x32xf32>
    %c0_112 = arith.constant 0 : index
    %c0_113 = arith.constant 0 : index
    %c0_114 = arith.constant 0 : index
    %c0_115 = arith.constant 0 : index
    %118 = tpu.strided_load %arg22[%c0_112, %c0_113, %c0_114, %c0_115] {strides = array<i32: 1, 2, 2, 1>} : memref<2x10x10x32xf32, #tpu.memory_space<vmem>>, vector<2x4x4x32xf32>
    %c0_116 = arith.constant 0 : index
    %c0_117 = arith.constant 0 : index
    %c0_118 = arith.constant 0 : index
    %c0_119 = arith.constant 0 : index
    %119 = vector.load %arg7[%c0_116, %c0_117, %c0_118, %c0_119] : memref<9x1x1x32xf32, #tpu.memory_space<vmem>>, vector<1x1x1x32xf32>
    %120 = vector.broadcast %119 : vector<1x1x1x32xf32> to vector<2x4x4x32xf32>
    %121 = arith.mulf %118, %120 : vector<2x4x4x32xf32>
    %122 = arith.addf %117, %121 : vector<2x4x4x32xf32>
    %c0_120 = arith.constant 0 : index
    %c0_121 = arith.constant 0 : index
    %c1_122 = arith.constant 1 : index
    %c0_123 = arith.constant 0 : index
    %123 = tpu.strided_load %arg22[%c0_120, %c0_121, %c1_122, %c0_123] {strides = array<i32: 1, 2, 2, 1>} : memref<2x10x10x32xf32, #tpu.memory_space<vmem>>, vector<2x4x4x32xf32>
    %c1_124 = arith.constant 1 : index
    %c0_125 = arith.constant 0 : index
    %c0_126 = arith.constant 0 : index
    %c0_127 = arith.constant 0 : index
    %124 = vector.load %arg7[%c1_124, %c0_125, %c0_126, %c0_127] : memref<9x1x1x32xf32, #tpu.memory_space<vmem>>, vector<1x1x1x32xf32>
    %125 = vector.broadcast %124 : vector<1x1x1x32xf32> to vector<2x4x4x32xf32>
    %126 = arith.mulf %123, %125 : vector<2x4x4x32xf32>
    %127 = arith.addf %122, %126 : vector<2x4x4x32xf32>
    %c0_128 = arith.constant 0 : index
    %c0_129 = arith.constant 0 : index
    %c2_130 = arith.constant 2 : index
    %c0_131 = arith.constant 0 : index
    %128 = tpu.strided_load %arg22[%c0_128, %c0_129, %c2_130, %c0_131] {strides = array<i32: 1, 2, 2, 1>} : memref<2x10x10x32xf32, #tpu.memory_space<vmem>>, vector<2x4x4x32xf32>
    %c2_132 = arith.constant 2 : index
    %c0_133 = arith.constant 0 : index
    %c0_134 = arith.constant 0 : index
    %c0_135 = arith.constant 0 : index
    %129 = vector.load %arg7[%c2_132, %c0_133, %c0_134, %c0_135] : memref<9x1x1x32xf32, #tpu.memory_space<vmem>>, vector<1x1x1x32xf32>
    %130 = vector.broadcast %129 : vector<1x1x1x32xf32> to vector<2x4x4x32xf32>
    %131 = arith.mulf %128, %130 : vector<2x4x4x32xf32>
    %132 = arith.addf %127, %131 : vector<2x4x4x32xf32>
    %c0_136 = arith.constant 0 : index
    %c1_137 = arith.constant 1 : index
    %c0_138 = arith.constant 0 : index
    %c0_139 = arith.constant 0 : index
    %133 = tpu.strided_load %arg22[%c0_136, %c1_137, %c0_138, %c0_139] {strides = array<i32: 1, 2, 2, 1>} : memref<2x10x10x32xf32, #tpu.memory_space<vmem>>, vector<2x4x4x32xf32>
    %c3_140 = arith.constant 3 : index
    %c0_141 = arith.constant 0 : index
    %c0_142 = arith.constant 0 : index
    %c0_143 = arith.constant 0 : index
    %134 = vector.load %arg7[%c3_140, %c0_141, %c0_142, %c0_143] : memref<9x1x1x32xf32, #tpu.memory_space<vmem>>, vector<1x1x1x32xf32>
    %135 = vector.broadcast %134 : vector<1x1x1x32xf32> to vector<2x4x4x32xf32>
    %136 = arith.mulf %133, %135 : vector<2x4x4x32xf32>
    %137 = arith.addf %132, %136 : vector<2x4x4x32xf32>
    %c0_144 = arith.constant 0 : index
    %c1_145 = arith.constant 1 : index
    %c1_146 = arith.constant 1 : index
    %c0_147 = arith.constant 0 : index
    %138 = tpu.strided_load %arg22[%c0_144, %c1_145, %c1_146, %c0_147] {strides = array<i32: 1, 2, 2, 1>} : memref<2x10x10x32xf32, #tpu.memory_space<vmem>>, vector<2x4x4x32xf32>
    %c4_148 = arith.constant 4 : index
    %c0_149 = arith.constant 0 : index
    %c0_150 = arith.constant 0 : index
    %c0_151 = arith.constant 0 : index
    %139 = vector.load %arg7[%c4_148, %c0_149, %c0_150, %c0_151] : memref<9x1x1x32xf32, #tpu.memory_space<vmem>>, vector<1x1x1x32xf32>
    %140 = vector.broadcast %139 : vector<1x1x1x32xf32> to vector<2x4x4x32xf32>
    %141 = arith.mulf %138, %140 : vector<2x4x4x32xf32>
    %142 = arith.addf %137, %141 : vector<2x4x4x32xf32>
    %c0_152 = arith.constant 0 : index
    %c1_153 = arith.constant 1 : index
    %c2_154 = arith.constant 2 : index
    %c0_155 = arith.constant 0 : index
    %143 = tpu.strided_load %arg22[%c0_152, %c1_153, %c2_154, %c0_155] {strides = array<i32: 1, 2, 2, 1>} : memref<2x10x10x32xf32, #tpu.memory_space<vmem>>, vector<2x4x4x32xf32>
    %c5_156 = arith.constant 5 : index
    %c0_157 = arith.constant 0 : index
    %c0_158 = arith.constant 0 : index
    %c0_159 = arith.constant 0 : index
    %144 = vector.load %arg7[%c5_156, %c0_157, %c0_158, %c0_159] : memref<9x1x1x32xf32, #tpu.memory_space<vmem>>, vector<1x1x1x32xf32>
    %145 = vector.broadcast %144 : vector<1x1x1x32xf32> to vector<2x4x4x32xf32>
    %146 = arith.mulf %143, %145 : vector<2x4x4x32xf32>
    %147 = arith.addf %142, %146 : vector<2x4x4x32xf32>
    %c0_160 = arith.constant 0 : index
    %c2_161 = arith.constant 2 : index
    %c0_162 = arith.constant 0 : index
    %c0_163 = arith.constant 0 : index
    %148 = tpu.strided_load %arg22[%c0_160, %c2_161, %c0_162, %c0_163] {strides = array<i32: 1, 2, 2, 1>} : memref<2x10x10x32xf32, #tpu.memory_space<vmem>>, vector<2x4x4x32xf32>
    %c6_164 = arith.constant 6 : index
    %c0_165 = arith.constant 0 : index
    %c0_166 = arith.constant 0 : index
    %c0_167 = arith.constant 0 : index
    %149 = vector.load %arg7[%c6_164, %c0_165, %c0_166, %c0_167] : memref<9x1x1x32xf32, #tpu.memory_space<vmem>>, vector<1x1x1x32xf32>
    %150 = vector.broadcast %149 : vector<1x1x1x32xf32> to vector<2x4x4x32xf32>
    %151 = arith.mulf %148, %150 : vector<2x4x4x32xf32>
    %152 = arith.addf %147, %151 : vector<2x4x4x32xf32>
    %c0_168 = arith.constant 0 : index
    %c2_169 = arith.constant 2 : index
    %c1_170 = arith.constant 1 : index
    %c0_171 = arith.constant 0 : index
    %153 = tpu.strided_load %arg22[%c0_168, %c2_169, %c1_170, %c0_171] {strides = array<i32: 1, 2, 2, 1>} : memref<2x10x10x32xf32, #tpu.memory_space<vmem>>, vector<2x4x4x32xf32>
    %c7_172 = arith.constant 7 : index
    %c0_173 = arith.constant 0 : index
    %c0_174 = arith.constant 0 : index
    %c0_175 = arith.constant 0 : index
    %154 = vector.load %arg7[%c7_172, %c0_173, %c0_174, %c0_175] : memref<9x1x1x32xf32, #tpu.memory_space<vmem>>, vector<1x1x1x32xf32>
    %155 = vector.broadcast %154 : vector<1x1x1x32xf32> to vector<2x4x4x32xf32>
    %156 = arith.mulf %153, %155 : vector<2x4x4x32xf32>
    %157 = arith.addf %152, %156 : vector<2x4x4x32xf32>
    %c0_176 = arith.constant 0 : index
    %c2_177 = arith.constant 2 : index
    %c2_178 = arith.constant 2 : index
    %c0_179 = arith.constant 0 : index
    %158 = tpu.strided_load %arg22[%c0_176, %c2_177, %c2_178, %c0_179] {strides = array<i32: 1, 2, 2, 1>} : memref<2x10x10x32xf32, #tpu.memory_space<vmem>>, vector<2x4x4x32xf32>
    %c8_180 = arith.constant 8 : index
    %c0_181 = arith.constant 0 : index
    %c0_182 = arith.constant 0 : index
    %c0_183 = arith.constant 0 : index
    %159 = vector.load %arg7[%c8_180, %c0_181, %c0_182, %c0_183] : memref<9x1x1x32xf32, #tpu.memory_space<vmem>>, vector<1x1x1x32xf32>
    %160 = vector.broadcast %159 : vector<1x1x1x32xf32> to vector<2x4x4x32xf32>
    %161 = arith.mulf %158, %160 : vector<2x4x4x32xf32>
    %162 = arith.addf %157, %161 : vector<2x4x4x32xf32>
    %c0_184 = arith.constant 0 : index
    %c0_185 = arith.constant 0 : index
    %c0_186 = arith.constant 0 : index
    %c0_187 = arith.constant 0 : index
    %163 = vector.load %arg8[%c0_184, %c0_185, %c0_186, %c0_187] : memref<1x1x1x32xf32, #tpu.memory_space<vmem>>, vector<1x1x1x32xf32>
    %164 = vector.broadcast %163 : vector<1x1x1x32xf32> to vector<2x4x4x32xf32>
    %165 = arith.addf %162, %164 : vector<2x4x4x32xf32>
    %cst_188 = arith.constant 0.000000e+00 : f32
    %166 = vector.broadcast %cst_188 : f32 to vector<2x4x4x32xf32>
    %167 = arith.maximumf %165, %166 : vector<2x4x4x32xf32>
    %168 = vector.shape_cast %167 : vector<2x4x4x32xf32> to vector<32x32xf32>
    %c0_189 = arith.constant 0 : index
    %c0_190 = arith.constant 0 : index
    %169 = vector.load %arg9[%c0_189, %c0_190] : memref<32x64xf32, #tpu.memory_space<vmem>>, vector<32x64xf32>
    %cst_191 = arith.constant dense<0.000000e+00> : vector<32x64xf32>
    %170 = tpu.matmul %168, %169, %cst_191 {dimension_numbers = #tpu.dot_dimension_numbers<[1], [0], [0], [1], [0, 0, 1, 1], [], []>} : vector<32x32xf32>, vector<32x64xf32>, vector<32x64xf32> -> vector<32x64xf32>
    %c0_192 = arith.constant 0 : index
    %c0_193 = arith.constant 0 : index
    %171 = vector.load %arg10[%c0_192, %c0_193] : memref<1x64xf32, #tpu.memory_space<vmem>>, vector<1x64xf32>
    %172 = vector.broadcast %171 : vector<1x64xf32> to vector<32x64xf32>
    %173 = arith.addf %170, %172 : vector<32x64xf32>
    %cst_194 = arith.constant 0.000000e+00 : f32
    %174 = vector.broadcast %cst_194 : f32 to vector<32x64xf32>
    %175 = arith.maximumf %173, %174 : vector<32x64xf32>
    %176 = vector.shape_cast %175 : vector<32x64xf32> to vector<2x16x64xf32>
    %cst_195 = arith.constant dense<0.000000e+00> : vector<2x64xf32>
    %177 = vector.multi_reduction <add>, %176, %cst_195 [1] : vector<2x16x64xf32> to vector<2x64xf32>
    %cst_196 = arith.constant 1.600000e+01 : f32
    %178 = vector.broadcast %cst_196 : f32 to vector<2x64xf32>
    %179 = arith.divf %177, %178 : vector<2x64xf32>
    %180 = tpu.iota {dimensions = array<i32: 0>} : vector<64x64xi32>
    %181 = tpu.iota {dimensions = array<i32: 1>} : vector<64x64xi32>
    %cst_197 = arith.constant 0.000000e+00 : f32
    %182 = vector.broadcast %cst_197 : f32 to vector<64x64xf32>
    %c0_198 = arith.constant 0 : index
    %183 = memref.load %arg16[%c0_198] : memref<3xf32, #tpu.memory_space<smem>>
    %c-1_i32_199 = arith.constant -1 : i32
    %184 = vector.broadcast %c-1_i32_199 : i32 to vector<64x64xi32>
    %185 = arith.addi %181, %184 : vector<64x64xi32>
    %186 = arith.cmpi eq, %180, %185 : vector<64x64xi32>
    %187 = arith.extui %186 : vector<64x64xi1> to vector<64x64xi32>
    %188 = arith.sitofp %187 : vector<64x64xi32> to vector<64x64xf32>
    %189 = vector.broadcast %183 : f32 to vector<64x64xf32>
    %190 = arith.mulf %189, %188 : vector<64x64xf32>
    %191 = arith.addf %182, %190 : vector<64x64xf32>
    %c1_200 = arith.constant 1 : index
    %192 = memref.load %arg16[%c1_200] : memref<3xf32, #tpu.memory_space<smem>>
    %c0_i32_201 = arith.constant 0 : i32
    %193 = vector.broadcast %c0_i32_201 : i32 to vector<64x64xi32>
    %194 = arith.addi %181, %193 : vector<64x64xi32>
    %195 = arith.cmpi eq, %180, %194 : vector<64x64xi32>
    %196 = arith.extui %195 : vector<64x64xi1> to vector<64x64xi32>
    %197 = arith.sitofp %196 : vector<64x64xi32> to vector<64x64xf32>
    %198 = vector.broadcast %192 : f32 to vector<64x64xf32>
    %199 = arith.mulf %198, %197 : vector<64x64xf32>
    %200 = arith.addf %191, %199 : vector<64x64xf32>
    %c2_202 = arith.constant 2 : index
    %201 = memref.load %arg16[%c2_202] : memref<3xf32, #tpu.memory_space<smem>>
    %c1_i32_203 = arith.constant 1 : i32
    %202 = vector.broadcast %c1_i32_203 : i32 to vector<64x64xi32>
    %203 = arith.addi %181, %202 : vector<64x64xi32>
    %204 = arith.cmpi eq, %180, %203 : vector<64x64xi32>
    %205 = arith.extui %204 : vector<64x64xi1> to vector<64x64xi32>
    %206 = arith.sitofp %205 : vector<64x64xi32> to vector<64x64xf32>
    %207 = vector.broadcast %201 : f32 to vector<64x64xf32>
    %208 = arith.mulf %207, %206 : vector<64x64xf32>
    %209 = arith.addf %200, %208 : vector<64x64xf32>
    %cst_204 = arith.constant dense<0.000000e+00> : vector<2x64xf32>
    %210 = tpu.matmul %179, %209, %cst_204 {dimension_numbers = #tpu.dot_dimension_numbers<[1], [0], [0], [1], [0, 0, 1, 1], [], []>} : vector<2x64xf32>, vector<64x64xf32>, vector<2x64xf32> -> vector<2x64xf32>
    %211 = arith.negf %210 : vector<2x64xf32>
    %212 = math.exp %211 : vector<2x64xf32>
    %cst_205 = arith.constant 1.000000e+00 : f32
    %213 = vector.broadcast %cst_205 : f32 to vector<2x64xf32>
    %214 = arith.addf %213, %212 : vector<2x64xf32>
    %215 = arith.divf %213, %214 : vector<2x64xf32>
    %216 = vector.shape_cast %215 : vector<2x64xf32> to vector<2x1x64xf32>
    %217 = vector.broadcast %216 : vector<2x1x64xf32> to vector<2x16x64xf32>
    %218 = arith.mulf %176, %217 : vector<2x16x64xf32>
    %219 = vector.shape_cast %218 : vector<2x16x64xf32> to vector<2x4x4x64xf32>
    %c0_206 = arith.constant 0 : index
    %c0_207 = arith.constant 0 : index
    %c0_208 = arith.constant 0 : index
    %c0_209 = arith.constant 0 : index
    %220 = vector.load %arg19[%c0_206, %c0_207, %c0_208, %c0_209] : memref<2x4x4x64xf32, #tpu.memory_space<vmem>>, vector<2x4x4x64xf32>
    tpu.vector_store %arg19[%c0_206, %c0_207, %c0_208, %c0_209], %219 {strides = array<i32>} : memref<2x4x4x64xf32, #tpu.memory_space<vmem>>, vector<2x4x4x64xf32>,
    %cst_210 = arith.constant 0.000000e+00 : f32
    %221 = vector.broadcast %cst_210 : f32 to vector<2x6x6x64xf32>
    %c0_211 = arith.constant 0 : index
    %c0_212 = arith.constant 0 : index
    %c0_213 = arith.constant 0 : index
    %c0_214 = arith.constant 0 : index
    %222 = vector.load %arg23[%c0_211, %c0_212, %c0_213, %c0_214] : memref<2x6x6x64xf32, #tpu.memory_space<vmem>>, vector<2x6x6x64xf32>
    tpu.vector_store %arg23[%c0_211, %c0_212, %c0_213, %c0_214], %221 {strides = array<i32>} : memref<2x6x6x64xf32, #tpu.memory_space<vmem>>, vector<2x6x6x64xf32>,
    %c0_215 = arith.constant 0 : index
    %c1_216 = arith.constant 1 : index
    %c1_217 = arith.constant 1 : index
    %c0_218 = arith.constant 0 : index
    %223 = vector.load %arg23[%c0_215, %c1_216, %c1_217, %c0_218] : memref<2x6x6x64xf32, #tpu.memory_space<vmem>>, vector<2x4x4x64xf32>
    tpu.vector_store %arg23[%c0_215, %c1_216, %c1_217, %c0_218], %219 {strides = array<i32>} : memref<2x6x6x64xf32, #tpu.memory_space<vmem>>, vector<2x4x4x64xf32>,
    %cst_219 = arith.constant 0.000000e+00 : f32
    %224 = vector.broadcast %cst_219 : f32 to vector<2x2x2x64xf32>
    %c0_220 = arith.constant 0 : index
    %c0_221 = arith.constant 0 : index
    %c0_222 = arith.constant 0 : index
    %c0_223 = arith.constant 0 : index
    %225 = tpu.strided_load %arg23[%c0_220, %c0_221, %c0_222, %c0_223] {strides = array<i32: 1, 2, 2, 1>} : memref<2x6x6x64xf32, #tpu.memory_space<vmem>>, vector<2x2x2x64xf32>
    %c0_224 = arith.constant 0 : index
    %c0_225 = arith.constant 0 : index
    %c0_226 = arith.constant 0 : index
    %c0_227 = arith.constant 0 : index
    %226 = vector.load %arg11[%c0_224, %c0_225, %c0_226, %c0_227] : memref<9x1x1x64xf32, #tpu.memory_space<vmem>>, vector<1x1x1x64xf32>
    %227 = vector.broadcast %226 : vector<1x1x1x64xf32> to vector<2x2x2x64xf32>
    %228 = arith.mulf %225, %227 : vector<2x2x2x64xf32>
    %229 = arith.addf %224, %228 : vector<2x2x2x64xf32>
    %c0_228 = arith.constant 0 : index
    %c0_229 = arith.constant 0 : index
    %c1_230 = arith.constant 1 : index
    %c0_231 = arith.constant 0 : index
    %230 = tpu.strided_load %arg23[%c0_228, %c0_229, %c1_230, %c0_231] {strides = array<i32: 1, 2, 2, 1>} : memref<2x6x6x64xf32, #tpu.memory_space<vmem>>, vector<2x2x2x64xf32>
    %c1_232 = arith.constant 1 : index
    %c0_233 = arith.constant 0 : index
    %c0_234 = arith.constant 0 : index
    %c0_235 = arith.constant 0 : index
    %231 = vector.load %arg11[%c1_232, %c0_233, %c0_234, %c0_235] : memref<9x1x1x64xf32, #tpu.memory_space<vmem>>, vector<1x1x1x64xf32>
    %232 = vector.broadcast %231 : vector<1x1x1x64xf32> to vector<2x2x2x64xf32>
    %233 = arith.mulf %230, %232 : vector<2x2x2x64xf32>
    %234 = arith.addf %229, %233 : vector<2x2x2x64xf32>
    %c0_236 = arith.constant 0 : index
    %c0_237 = arith.constant 0 : index
    %c2_238 = arith.constant 2 : index
    %c0_239 = arith.constant 0 : index
    %235 = tpu.strided_load %arg23[%c0_236, %c0_237, %c2_238, %c0_239] {strides = array<i32: 1, 2, 2, 1>} : memref<2x6x6x64xf32, #tpu.memory_space<vmem>>, vector<2x2x2x64xf32>
    %c2_240 = arith.constant 2 : index
    %c0_241 = arith.constant 0 : index
    %c0_242 = arith.constant 0 : index
    %c0_243 = arith.constant 0 : index
    %236 = vector.load %arg11[%c2_240, %c0_241, %c0_242, %c0_243] : memref<9x1x1x64xf32, #tpu.memory_space<vmem>>, vector<1x1x1x64xf32>
    %237 = vector.broadcast %236 : vector<1x1x1x64xf32> to vector<2x2x2x64xf32>
    %238 = arith.mulf %235, %237 : vector<2x2x2x64xf32>
    %239 = arith.addf %234, %238 : vector<2x2x2x64xf32>
    %c0_244 = arith.constant 0 : index
    %c1_245 = arith.constant 1 : index
    %c0_246 = arith.constant 0 : index
    %c0_247 = arith.constant 0 : index
    %240 = tpu.strided_load %arg23[%c0_244, %c1_245, %c0_246, %c0_247] {strides = array<i32: 1, 2, 2, 1>} : memref<2x6x6x64xf32, #tpu.memory_space<vmem>>, vector<2x2x2x64xf32>
    %c3_248 = arith.constant 3 : index
    %c0_249 = arith.constant 0 : index
    %c0_250 = arith.constant 0 : index
    %c0_251 = arith.constant 0 : index
    %241 = vector.load %arg11[%c3_248, %c0_249, %c0_250, %c0_251] : memref<9x1x1x64xf32, #tpu.memory_space<vmem>>, vector<1x1x1x64xf32>
    %242 = vector.broadcast %241 : vector<1x1x1x64xf32> to vector<2x2x2x64xf32>
    %243 = arith.mulf %240, %242 : vector<2x2x2x64xf32>
    %244 = arith.addf %239, %243 : vector<2x2x2x64xf32>
    %c0_252 = arith.constant 0 : index
    %c1_253 = arith.constant 1 : index
    %c1_254 = arith.constant 1 : index
    %c0_255 = arith.constant 0 : index
    %245 = tpu.strided_load %arg23[%c0_252, %c1_253, %c1_254, %c0_255] {strides = array<i32: 1, 2, 2, 1>} : memref<2x6x6x64xf32, #tpu.memory_space<vmem>>, vector<2x2x2x64xf32>
    %c4_256 = arith.constant 4 : index
    %c0_257 = arith.constant 0 : index
    %c0_258 = arith.constant 0 : index
    %c0_259 = arith.constant 0 : index
    %246 = vector.load %arg11[%c4_256, %c0_257, %c0_258, %c0_259] : memref<9x1x1x64xf32, #tpu.memory_space<vmem>>, vector<1x1x1x64xf32>
    %247 = vector.broadcast %246 : vector<1x1x1x64xf32> to vector<2x2x2x64xf32>
    %248 = arith.mulf %245, %247 : vector<2x2x2x64xf32>
    %249 = arith.addf %244, %248 : vector<2x2x2x64xf32>
    %c0_260 = arith.constant 0 : index
    %c1_261 = arith.constant 1 : index
    %c2_262 = arith.constant 2 : index
    %c0_263 = arith.constant 0 : index
    %250 = tpu.strided_load %arg23[%c0_260, %c1_261, %c2_262, %c0_263] {strides = array<i32: 1, 2, 2, 1>} : memref<2x6x6x64xf32, #tpu.memory_space<vmem>>, vector<2x2x2x64xf32>
    %c5_264 = arith.constant 5 : index
    %c0_265 = arith.constant 0 : index
    %c0_266 = arith.constant 0 : index
    %c0_267 = arith.constant 0 : index
    %251 = vector.load %arg11[%c5_264, %c0_265, %c0_266, %c0_267] : memref<9x1x1x64xf32, #tpu.memory_space<vmem>>, vector<1x1x1x64xf32>
    %252 = vector.broadcast %251 : vector<1x1x1x64xf32> to vector<2x2x2x64xf32>
    %253 = arith.mulf %250, %252 : vector<2x2x2x64xf32>
    %254 = arith.addf %249, %253 : vector<2x2x2x64xf32>
    %c0_268 = arith.constant 0 : index
    %c2_269 = arith.constant 2 : index
    %c0_270 = arith.constant 0 : index
    %c0_271 = arith.constant 0 : index
    %255 = tpu.strided_load %arg23[%c0_268, %c2_269, %c0_270, %c0_271] {strides = array<i32: 1, 2, 2, 1>} : memref<2x6x6x64xf32, #tpu.memory_space<vmem>>, vector<2x2x2x64xf32>
    %c6_272 = arith.constant 6 : index
    %c0_273 = arith.constant 0 : index
    %c0_274 = arith.constant 0 : index
    %c0_275 = arith.constant 0 : index
    %256 = vector.load %arg11[%c6_272, %c0_273, %c0_274, %c0_275] : memref<9x1x1x64xf32, #tpu.memory_space<vmem>>, vector<1x1x1x64xf32>
    %257 = vector.broadcast %256 : vector<1x1x1x64xf32> to vector<2x2x2x64xf32>
    %258 = arith.mulf %255, %257 : vector<2x2x2x64xf32>
    %259 = arith.addf %254, %258 : vector<2x2x2x64xf32>
    %c0_276 = arith.constant 0 : index
    %c2_277 = arith.constant 2 : index
    %c1_278 = arith.constant 1 : index
    %c0_279 = arith.constant 0 : index
    %260 = tpu.strided_load %arg23[%c0_276, %c2_277, %c1_278, %c0_279] {strides = array<i32: 1, 2, 2, 1>} : memref<2x6x6x64xf32, #tpu.memory_space<vmem>>, vector<2x2x2x64xf32>
    %c7_280 = arith.constant 7 : index
    %c0_281 = arith.constant 0 : index
    %c0_282 = arith.constant 0 : index
    %c0_283 = arith.constant 0 : index
    %261 = vector.load %arg11[%c7_280, %c0_281, %c0_282, %c0_283] : memref<9x1x1x64xf32, #tpu.memory_space<vmem>>, vector<1x1x1x64xf32>
    %262 = vector.broadcast %261 : vector<1x1x1x64xf32> to vector<2x2x2x64xf32>
    %263 = arith.mulf %260, %262 : vector<2x2x2x64xf32>
    %264 = arith.addf %259, %263 : vector<2x2x2x64xf32>
    %c0_284 = arith.constant 0 : index
    %c2_285 = arith.constant 2 : index
    %c2_286 = arith.constant 2 : index
    %c0_287 = arith.constant 0 : index
    %265 = tpu.strided_load %arg23[%c0_284, %c2_285, %c2_286, %c0_287] {strides = array<i32: 1, 2, 2, 1>} : memref<2x6x6x64xf32, #tpu.memory_space<vmem>>, vector<2x2x2x64xf32>
    %c8_288 = arith.constant 8 : index
    %c0_289 = arith.constant 0 : index
    %c0_290 = arith.constant 0 : index
    %c0_291 = arith.constant 0 : index
    %266 = vector.load %arg11[%c8_288, %c0_289, %c0_290, %c0_291] : memref<9x1x1x64xf32, #tpu.memory_space<vmem>>, vector<1x1x1x64xf32>
    %267 = vector.broadcast %266 : vector<1x1x1x64xf32> to vector<2x2x2x64xf32>
    %268 = arith.mulf %265, %267 : vector<2x2x2x64xf32>
    %269 = arith.addf %264, %268 : vector<2x2x2x64xf32>
    %c0_292 = arith.constant 0 : index
    %c0_293 = arith.constant 0 : index
    %c0_294 = arith.constant 0 : index
    %c0_295 = arith.constant 0 : index
    %270 = vector.load %arg12[%c0_292, %c0_293, %c0_294, %c0_295] : memref<1x1x1x64xf32, #tpu.memory_space<vmem>>, vector<1x1x1x64xf32>
    %271 = vector.broadcast %270 : vector<1x1x1x64xf32> to vector<2x2x2x64xf32>
    %272 = arith.addf %269, %271 : vector<2x2x2x64xf32>
    %cst_296 = arith.constant 0.000000e+00 : f32
    %273 = vector.broadcast %cst_296 : f32 to vector<2x2x2x64xf32>
    %274 = arith.maximumf %272, %273 : vector<2x2x2x64xf32>
    %275 = vector.shape_cast %274 : vector<2x2x2x64xf32> to vector<8x64xf32>
    %c0_297 = arith.constant 0 : index
    %c0_298 = arith.constant 0 : index
    %276 = vector.load %arg13[%c0_297, %c0_298] : memref<64x32xf32, #tpu.memory_space<vmem>>, vector<64x32xf32>
    %cst_299 = arith.constant dense<0.000000e+00> : vector<8x32xf32>
    %277 = tpu.matmul %275, %276, %cst_299 {dimension_numbers = #tpu.dot_dimension_numbers<[1], [0], [0], [1], [0, 0, 1, 1], [], []>} : vector<8x64xf32>, vector<64x32xf32>, vector<8x32xf32> -> vector<8x32xf32>
    %c0_300 = arith.constant 0 : index
    %c0_301 = arith.constant 0 : index
    %278 = vector.load %arg14[%c0_300, %c0_301] : memref<1x32xf32, #tpu.memory_space<vmem>>, vector<1x32xf32>
    %279 = vector.broadcast %278 : vector<1x32xf32> to vector<8x32xf32>
    %280 = arith.addf %277, %279 : vector<8x32xf32>
    %cst_302 = arith.constant 0.000000e+00 : f32
    %281 = vector.broadcast %cst_302 : f32 to vector<8x32xf32>
    %282 = arith.maximumf %280, %281 : vector<8x32xf32>
    %283 = vector.shape_cast %282 : vector<8x32xf32> to vector<2x4x32xf32>
    %cst_303 = arith.constant dense<0.000000e+00> : vector<2x32xf32>
    %284 = vector.multi_reduction <add>, %283, %cst_303 [1] : vector<2x4x32xf32> to vector<2x32xf32>
    %cst_304 = arith.constant 4.000000e+00 : f32
    %285 = vector.broadcast %cst_304 : f32 to vector<2x32xf32>
    %286 = arith.divf %284, %285 : vector<2x32xf32>
    %287 = tpu.iota {dimensions = array<i32: 0>} : vector<32x32xi32>
    %288 = tpu.iota {dimensions = array<i32: 1>} : vector<32x32xi32>
    %cst_305 = arith.constant 0.000000e+00 : f32
    %289 = vector.broadcast %cst_305 : f32 to vector<32x32xf32>
    %c0_306 = arith.constant 0 : index
    %290 = memref.load %arg17[%c0_306] : memref<3xf32, #tpu.memory_space<smem>>
    %c-1_i32_307 = arith.constant -1 : i32
    %291 = vector.broadcast %c-1_i32_307 : i32 to vector<32x32xi32>
    %292 = arith.addi %288, %291 : vector<32x32xi32>
    %293 = arith.cmpi eq, %287, %292 : vector<32x32xi32>
    %294 = arith.extui %293 : vector<32x32xi1> to vector<32x32xi32>
    %295 = arith.sitofp %294 : vector<32x32xi32> to vector<32x32xf32>
    %296 = vector.broadcast %290 : f32 to vector<32x32xf32>
    %297 = arith.mulf %296, %295 : vector<32x32xf32>
    %298 = arith.addf %289, %297 : vector<32x32xf32>
    %c1_308 = arith.constant 1 : index
    %299 = memref.load %arg17[%c1_308] : memref<3xf32, #tpu.memory_space<smem>>
    %c0_i32_309 = arith.constant 0 : i32
    %300 = vector.broadcast %c0_i32_309 : i32 to vector<32x32xi32>
    %301 = arith.addi %288, %300 : vector<32x32xi32>
    %302 = arith.cmpi eq, %287, %301 : vector<32x32xi32>
    %303 = arith.extui %302 : vector<32x32xi1> to vector<32x32xi32>
    %304 = arith.sitofp %303 : vector<32x32xi32> to vector<32x32xf32>
    %305 = vector.broadcast %299 : f32 to vector<32x32xf32>
    %306 = arith.mulf %305, %304 : vector<32x32xf32>
    %307 = arith.addf %298, %306 : vector<32x32xf32>
    %c2_310 = arith.constant 2 : index
    %308 = memref.load %arg17[%c2_310] : memref<3xf32, #tpu.memory_space<smem>>
    %c1_i32_311 = arith.constant 1 : i32
    %309 = vector.broadcast %c1_i32_311 : i32 to vector<32x32xi32>
    %310 = arith.addi %288, %309 : vector<32x32xi32>
    %311 = arith.cmpi eq, %287, %310 : vector<32x32xi32>
    %312 = arith.extui %311 : vector<32x32xi1> to vector<32x32xi32>
    %313 = arith.sitofp %312 : vector<32x32xi32> to vector<32x32xf32>
    %314 = vector.broadcast %308 : f32 to vector<32x32xf32>
    %315 = arith.mulf %314, %313 : vector<32x32xf32>
    %316 = arith.addf %307, %315 : vector<32x32xf32>
    %cst_312 = arith.constant dense<0.000000e+00> : vector<2x32xf32>
    %317 = tpu.matmul %286, %316, %cst_312 {dimension_numbers = #tpu.dot_dimension_numbers<[1], [0], [0], [1], [0, 0, 1, 1], [], []>} : vector<2x32xf32>, vector<32x32xf32>, vector<2x32xf32> -> vector<2x32xf32>
    %318 = arith.negf %317 : vector<2x32xf32>
    %319 = math.exp %318 : vector<2x32xf32>
    %cst_313 = arith.constant 1.000000e+00 : f32
    %320 = vector.broadcast %cst_313 : f32 to vector<2x32xf32>
    %321 = arith.addf %320, %319 : vector<2x32xf32>
    %322 = arith.divf %320, %321 : vector<2x32xf32>
    %323 = vector.shape_cast %322 : vector<2x32xf32> to vector<2x1x32xf32>
    %324 = vector.broadcast %323 : vector<2x1x32xf32> to vector<2x4x32xf32>
    %325 = arith.mulf %283, %324 : vector<2x4x32xf32>
    %326 = vector.shape_cast %325 : vector<2x4x32xf32> to vector<2x2x2x32xf32>
    %c0_314 = arith.constant 0 : index
    %c0_315 = arith.constant 0 : index
    %c0_316 = arith.constant 0 : index
    %c0_317 = arith.constant 0 : index
    %327 = vector.load %arg20[%c0_314, %c0_315, %c0_316, %c0_317] : memref<2x2x2x32xf32, #tpu.memory_space<vmem>>, vector<2x2x2x32xf32>
    tpu.vector_store %arg20[%c0_314, %c0_315, %c0_316, %c0_317], %326 {strides = array<i32>} : memref<2x2x2x32xf32, #tpu.memory_space<vmem>>, vector<2x2x2x32xf32>,
    return
  }
}

</mosaic_0001>

<llo_original>
// kernel: tile.8
$region0: #{tile.8}
  #allocation0 [shape = 's32[1]{0}', space=sflag, size = 0x4, scoped, tag = 'scoped memory for tile.8']
  %s0 = inlined_call_operand.vmem [shape: f32[12], index: 0, kind: input, shape index: {}]
  %s1 = inlined_call_operand.vmem [shape: f32[3,12], index: 1, kind: output, shape index: {}]
  // Predicated region
  $region2: #{tile.8} parent=0 // pred_check
    _
  $region3: #{tile.8} parent=0 // pred_check_branch
    %3 = sbr.rel (0) target = $region5
  $region4: #{tile.8} parent=0 // pred_region
    _
  $region5: #{tile.8} parent=0 // pred_fallthru
    _
  %v4 = vld [vmem:[%s0] ss:$0 sm:$0xff]
  %5 = vst [vmem:[%s1] sm:$0xf] %v4

// kernel: tile.9
$region0: #{tile.9}
  %s0 = inlined_call_operand.vmem [shape: f32[3,12], index: 0, kind: input, shape index: {}]
  %s1 = inlined_call_operand.vmem [shape: f32[1,36], index: 1, kind: output, shape index: {}]
  $region1: #{tile.9} parent=0
    #allocation0 [shape = 'u8[4096]{0}', space=vmem, size = 0x1000, scoped, tag = 'scoped mem for output reshape']
    #allocation1 [shape = 'u8[4096]{0}', space=vmem, size = 0x1000, scoped, tag = 'scoped mem for input reshape']
    %s3 = ssub.s32 16, 1
    %v4 = vld [vmem:[%s0] sm:%s3]
    %5 = vst [vmem:[#allocation1] sm:%s3] %v4
    %v6 = vld [vmem:[#allocation1] sm:$0x1]
    %vm7 = vcmask 97280
    %8 = vst.msk [vmem:[#allocation0] sm:$0x1] %vm7, %v6
    %s9 = scalar_lea.vmem [#allocation1], 2
    %v10 = vld [vmem:[%s9] sm:$0x1]
    %11 = vrot.lane.b32.xlu0 %v10, 24
    %v12 = vpop.permute.xlu0 %11
    %vm13 = vcmask 294080
    %14 = vst.msk [vmem:[#allocation0] sm:$0x1] %vm13, %v12
    %s15 = scalar_lea.vmem [#allocation1], 1
    %v16 = vld [vmem:[%s15] sm:$0x1]
    %17 = vrot.lane.b32.xlu0 %v16, 12
    %v18 = vpop.permute.xlu0 %17
    %vm19 = vcmask 195680
    %20 = vst.msk [vmem:[#allocation0] sm:$0x1] %vm19, %v18
    %s22 = ssub.s32 2, 1
    %v23 = vld [vmem:[#allocation0] sm:%s22]
    %s25 = ssub.s32 2, 1
    %26 = vst [vmem:[%s1] sm:%s25] %v23

// kernel: mobile_encoder_forward.1
$region0: #{mobile_encoder_forward.1}
  #allocation0 [shape = 'u32[]', space=smem, size = 0x4, offset = 0x4, fixed_abs, tag = 'smem constant byte address 0x4 - core index']
  #allocation1 [shape = 'u32[72,128]{1,0:T(1,128)}', space=vmem, size = 0x9000, scoped, tag = 'internal scratch']
  #allocation2 [shape = 'f32[2,18,18,36]{3,2,1,0:T(8,128)}', space=vmem, size = 0x6c000, scoped, tag = 'scratch operand']
  #allocation3 [shape = 'f32[2,10,10,32]{3,2,1,0:T(8,128)}', space=vmem, size = 0x28000, scoped, tag = 'scratch operand']
  #allocation4 [shape = 'f32[2,6,6,64]{3,2,1,0:T(8,128)}', space=vmem, size = 0xc000, scoped, tag = 'scratch operand']
  %s0 = inlined_call_operand.vmem [shape: f32[512,12], index: 0, kind: input, shape index: {}]
  %s1 = inlined_call_operand.vmem [shape: f32[12,36], index: 1, kind: input, shape index: {}]
  %s2 = inlined_call_operand.vmem [shape: f32[1,36], index: 2, kind: input, shape index: {}]
  %s3 = inlined_call_operand.vmem [shape: f32[9,1,1,36], index: 3, kind: input, shape index: {}]
  %s4 = inlined_call_operand.vmem [shape: f32[1,1,1,36], index: 4, kind: input, shape index: {}]
  %s5 = inlined_call_operand.vmem [shape: f32[36,32], index: 5, kind: input, shape index: {}]
  %s6 = inlined_call_operand.vmem [shape: f32[1,32], index: 6, kind: input, shape index: {}]
  %s7 = inlined_call_operand.vmem [shape: f32[9,1,1,32], index: 7, kind: input, shape index: {}]
  %s8 = inlined_call_operand.vmem [shape: f32[1,1,1,32], index: 8, kind: input, shape index: {}]
  %s9 = inlined_call_operand.vmem [shape: f32[32,64], index: 9, kind: input, shape index: {}]
  %s10 = inlined_call_operand.vmem [shape: f32[1,64], index: 10, kind: input, shape index: {}]
  %s11 = inlined_call_operand.vmem [shape: f32[9,1,1,64], index: 11, kind: input, shape index: {}]
  %s12 = inlined_call_operand.vmem [shape: f32[1,1,1,64], index: 12, kind: input, shape index: {}]
  %s13 = inlined_call_operand.vmem [shape: f32[64,32], index: 13, kind: input, shape index: {}]
  %s14 = inlined_call_operand.vmem [shape: f32[1,32], index: 14, kind: input, shape index: {}]
  %s15 = inlined_call_operand.vmem [shape: f32[3], index: 15, kind: input, shape index: {}]
  %s16 = inlined_call_operand.vmem [shape: f32[3], index: 16, kind: input, shape index: {}]
  %s17 = inlined_call_operand.vmem [shape: f32[3], index: 17, kind: input, shape index: {}]
  %s18 = inlined_call_operand.hbm [shape: f32[2,8,8,32], index: 18, kind: output, shape index: {0}]
  %s19 = inlined_call_operand.hbm [shape: f32[2,4,4,64], index: 19, kind: output, shape index: {1}]
  %s20 = inlined_call_operand.hbm [shape: f32[2,2,2,32], index: 20, kind: output, shape index: {2}]
  %21 = xla_tuple %s18, %s19, %s20
  %s22 = sld [smem:[#allocation0]]
  $region110: #{mobile_encoder_forward.1} parent=0
    _
  %s24 = ssub.s32 1, %s22
  %s25 = scalar_select 0, %s24, %s22
  $region1: #{mobile_encoder_forward.1} parent=0
    #allocation5 [shape = 'u8[512]{0}', space=smem, size = 0x200, scoped, tag = 'input window, operand 15, single buffered']
    #allocation6 [shape = 's32[1]{0}', space=sflag, size = 0x4, scoped, tag = 'scoped memory for mobile_encoder_forward.1']
    #allocation7 [shape = 's32[1]{0}', space=sflag, size = 0x4, scoped, tag = 'scoped memory for mobile_encoder_forward.1']
    #allocation8 [shape = 'u8[512]{0}', space=smem, size = 0x200, scoped, tag = 'input window, operand 16, single buffered']
    #allocation9 [shape = 's32[1]{0}', space=sflag, size = 0x4, scoped, tag = 'scoped memory for mobile_encoder_forward.1']
    #allocation10 [shape = 'u8[512]{0}', space=smem, size = 0x200, scoped, tag = 'input window, operand 17, single buffered']
    #allocation11 [shape = 'u8[65536]{0}', space=vmem, size = 0x10000, scoped, tag = 'output window, operand 0, single buffered']
    #allocation12 [shape = 'u8[16384]{0}', space=vmem, size = 0x4000, scoped, tag = 'output window, operand 1, single buffered']
    #allocation13 [shape = 's32[1]{0}', space=sflag, size = 0x4, scoped, tag = 'scoped memory for mobile_encoder_forward.1']
    #allocation14 [shape = 'u8[4096]{0}', space=vmem, size = 0x1000, scoped, tag = 'output window, operand 2, single buffered']
    %26 = vsyncpa [#allocation7], 0
    %27 = vsyncpa [#allocation9], 0
    %28 = vsyncpa [#allocation6], 0
    %29 = vsyncpa [#allocation13], 0
    // Predicated region
    $region2: #{mobile_encoder_forward.1} parent=1 // pred_check
      _
    $region3: #{mobile_encoder_forward.1} parent=1 // pred_check_branch
      %31 = sbr.rel (0) target = $region5
    $region4: #{mobile_encoder_forward.1} parent=1 // pred_region
      _
    $region5: #{mobile_encoder_forward.1} parent=1 // pred_fallthru
      _
    // Predicated region
    $region6: #{mobile_encoder_forward.1} parent=1 // pred_check
      _
    $region7: #{mobile_encoder_forward.1} parent=1 // pred_check_branch
      %33 = sbr.rel (0) target = $region9
    $region8: #{mobile_encoder_forward.1} parent=1 // pred_region
      _
    $region9: #{mobile_encoder_forward.1} parent=1 // pred_fallthru
      _
    // Predicated region
    $region10: #{mobile_encoder_forward.1} parent=1 // pred_check
      _
    $region11: #{mobile_encoder_forward.1} parent=1 // pred_check_branch
      %35 = sbr.rel (0) target = $region13
    $region12: #{mobile_encoder_forward.1} parent=1 // pred_region
      _
    $region13: #{mobile_encoder_forward.1} parent=1 // pred_fallthru
      _
    // Predicated region
    $region14: #{mobile_encoder_forward.1} parent=1 // pred_check
      _
    $region15: #{mobile_encoder_forward.1} parent=1 // pred_check_branch
      %37 = sbr.rel (0) target = $region17
    $region16: #{mobile_encoder_forward.1} parent=1 // pred_region
      _
    $region17: #{mobile_encoder_forward.1} parent=1 // pred_fallthru
      _
    // Predicated region
    $region18: #{mobile_encoder_forward.1} parent=1 // pred_check
      _
    $region19: #{mobile_encoder_forward.1} parent=1 // pred_check_branch
      %39 = sbr.rel (0) target = $region21
    $region20: #{mobile_encoder_forward.1} parent=1 // pred_region
      _
    $region21: #{mobile_encoder_forward.1} parent=1 // pred_fallthru
      _
    // Predicated region
    $region22: #{mobile_encoder_forward.1} parent=1 // pred_check
      _
    $region23: #{mobile_encoder_forward.1} parent=1 // pred_check_branch
      %41 = sbr.rel (0) target = $region25
    $region24: #{mobile_encoder_forward.1} parent=1 // pred_region
      _
    $region25: #{mobile_encoder_forward.1} parent=1 // pred_fallthru
      _
    // Predicated region
    $region26: #{mobile_encoder_forward.1} parent=1 // pred_check
      _
    $region27: #{mobile_encoder_forward.1} parent=1 // pred_check_branch
      %43 = sbr.rel (0) target = $region29
    $region28: #{mobile_encoder_forward.1} parent=1 // pred_region
      _
    $region29: #{mobile_encoder_forward.1} parent=1 // pred_fallthru
      _
    // Predicated region
    $region30: #{mobile_encoder_forward.1} parent=1 // pred_check
      _
    $region31: #{mobile_encoder_forward.1} parent=1 // pred_check_branch
      %45 = sbr.rel (0) target = $region33
    $region32: #{mobile_encoder_forward.1} parent=1 // pred_region
      _
    $region33: #{mobile_encoder_forward.1} parent=1 // pred_fallthru
      _
    // Predicated region
    $region34: #{mobile_encoder_forward.1} parent=1 // pred_check
      _
    $region35: #{mobile_encoder_forward.1} parent=1 // pred_check_branch
      %47 = sbr.rel (0) target = $region37
    $region36: #{mobile_encoder_forward.1} parent=1 // pred_region
      _
    $region37: #{mobile_encoder_forward.1} parent=1 // pred_fallthru
      _
    // Predicated region
    $region38: #{mobile_encoder_forward.1} parent=1 // pred_check
      _
    $region39: #{mobile_encoder_forward.1} parent=1 // pred_check_branch
      %49 = sbr.rel (0) target = $region41
    $region40: #{mobile_encoder_forward.1} parent=1 // pred_region
      _
    $region41: #{mobile_encoder_forward.1} parent=1 // pred_fallthru
      _
    // Predicated region
    $region42: #{mobile_encoder_forward.1} parent=1 // pred_check
      _
    $region43: #{mobile_encoder_forward.1} parent=1 // pred_check_branch
      %51 = sbr.rel (0) target = $region45
    $region44: #{mobile_encoder_forward.1} parent=1 // pred_region
      _
    $region45: #{mobile_encoder_forward.1} parent=1 // pred_fallthru
      _
    // Predicated region
    $region46: #{mobile_encoder_forward.1} parent=1 // pred_check
      _
    $region47: #{mobile_encoder_forward.1} parent=1 // pred_check_branch
      %53 = sbr.rel (0) target = $region49
    $region48: #{mobile_encoder_forward.1} parent=1 // pred_region
      _
    $region49: #{mobile_encoder_forward.1} parent=1 // pred_fallthru
      _
    // Predicated region
    $region50: #{mobile_encoder_forward.1} parent=1 // pred_check
      _
    $region51: #{mobile_encoder_forward.1} parent=1 // pred_check_branch
      %55 = sbr.rel (0) target = $region53
    $region52: #{mobile_encoder_forward.1} parent=1 // pred_region
      _
    $region53: #{mobile_encoder_forward.1} parent=1 // pred_fallthru
      _
    // Predicated region
    $region54: #{mobile_encoder_forward.1} parent=1 // pred_check
      _
    $region55: #{mobile_encoder_forward.1} parent=1 // pred_check_branch
      %57 = sbr.rel (0) target = $region57
    $region56: #{mobile_encoder_forward.1} parent=1 // pred_region
      _
    $region57: #{mobile_encoder_forward.1} parent=1 // pred_fallthru
      _
    // Predicated region
    $region58: #{mobile_encoder_forward.1} parent=1 // pred_check
      _
    $region59: #{mobile_encoder_forward.1} parent=1 // pred_check_branch
      %59 = sbr.rel (0) target = $region61
    $region60: #{mobile_encoder_forward.1} parent=1 // pred_region
      _
    $region61: #{mobile_encoder_forward.1} parent=1 // pred_fallthru
      _
    // Predicated region
    $region62: #{mobile_encoder_forward.1} parent=1 // pred_check
      _
    $region63: #{mobile_encoder_forward.1} parent=1 // pred_check_branch
      %61 = sbr.rel (0) target = $region65
    $region64: #{mobile_encoder_forward.1} parent=1 // pred_region
      %63 = vsyncadd [#allocation7], 0
      %s65 = sshll.u32 %s15, 4
      %s66 = int_to_ptr.vmem [resolvable:$true] %s65
      %68 = dma.vmem_to_smem %s66, 16, [#allocation5], [#allocation7]
    $region65: #{mobile_encoder_forward.1} parent=1 // pred_fallthru
      _
    // Predicated region
    $region66: #{mobile_encoder_forward.1} parent=1 // pred_check
      _
    $region67: #{mobile_encoder_forward.1} parent=1 // pred_check_branch
      %70 = sbr.rel (0) target = $region69
    $region68: #{mobile_encoder_forward.1} parent=1 // pred_region
      %72 = vsyncadd [#allocation9], 0
      %s74 = sshll.u32 %s16, 4
      %s75 = int_to_ptr.vmem [resolvable:$true] %s74
      %77 = dma.vmem_to_smem %s75, 16, [#allocation8], [#allocation9]
    $region69: #{mobile_encoder_forward.1} parent=1 // pred_fallthru
      _
    // Predicated region
    $region70: #{mobile_encoder_forward.1} parent=1 // pred_check
      _
    $region71: #{mobile_encoder_forward.1} parent=1 // pred_check_branch
      %79 = sbr.rel (0) target = $region73
    $region72: #{mobile_encoder_forward.1} parent=1 // pred_region
      %81 = vsyncadd [#allocation9], 0
      %s83 = sshll.u32 %s17, 4
      %s84 = int_to_ptr.vmem [resolvable:$true] %s83
      %86 = dma.vmem_to_smem %s84, 16, [#allocation10], [#allocation9]
    $region73: #{mobile_encoder_forward.1} parent=1 // pred_fallthru
      _
    // Predicated region
    $region74: #{mobile_encoder_forward.1} parent=1 // pred_check
      _
    $region75: #{mobile_encoder_forward.1} parent=1 // pred_check_branch
      %88 = sbr.rel (0) target = $region77
    $region76: #{mobile_encoder_forward.1} parent=1 // pred_region
      %90 = dma.done [#allocation7], 16
    $region77: #{mobile_encoder_forward.1} parent=1 // pred_fallthru
      _
    // Predicated region
    $region78: #{mobile_encoder_forward.1} parent=1 // pred_check
      _
    $region79: #{mobile_encoder_forward.1} parent=1 // pred_check_branch
      %92 = sbr.rel (0) target = $region81
    $region80: #{mobile_encoder_forward.1} parent=1 // pred_region
      %94 = dma.done [#allocation9], 16
    $region81: #{mobile_encoder_forward.1} parent=1 // pred_fallthru
      _
    // Predicated region
    $region82: #{mobile_encoder_forward.1} parent=1 // pred_check
      _
    $region83: #{mobile_encoder_forward.1} parent=1 // pred_check_branch
      %96 = sbr.rel (0) target = $region85
    $region84: #{mobile_encoder_forward.1} parent=1 // pred_region
      %98 = dma.done [#allocation9], 16
    $region85: #{mobile_encoder_forward.1} parent=1 // pred_fallthru
      _
    %99 = sfence
    %v100 = vld [vmem:[%s0] sm:$0xff]
    %v101 = vld [vmem:[%s0 + $0x8] sm:$0xff]
    %v102 = vld [vmem:[%s0 + $0x10] sm:$0xff]
    %v103 = vld [vmem:[%s0 + $0x18] sm:$0xff]
    %v104 = vld [vmem:[%s0 + $0x20] sm:$0xff]
    %v105 = vld [vmem:[%s0 + $0x28] sm:$0xff]
    %v106 = vld [vmem:[%s0 + $0x30] sm:$0xff]
    %v107 = vld [vmem:[%s0 + $0x38] sm:$0xff]
    %v108 = vld [vmem:[%s0 + $0x40] sm:$0xff]
    %v109 = vld [vmem:[%s0 + $0x48] sm:$0xff]
    %v110 = vld [vmem:[%s0 + $0x50] sm:$0xff]
    %v111 = vld [vmem:[%s0 + $0x58] sm:$0xff]
    %v112 = vld [vmem:[%s0 + $0x60] sm:$0xff]
    %v113 = vld [vmem:[%s0 + $0x68] sm:$0xff]
    %v114 = vld [vmem:[%s0 + $0x70] sm:$0xff]
    %v115 = vld [vmem:[%s0 + $0x78] sm:$0xff]
    %v116 = vld [vmem:[%s0 + $0x80] sm:$0xff]
    %v117 = vld [vmem:[%s0 + $0x88] sm:$0xff]
    %v118 = vld [vmem:[%s0 + $0x90] sm:$0xff]
    %v119 = vld [vmem:[%s0 + $0x98] sm:$0xff]
    %v120 = vld [vmem:[%s0 + $0xa0] sm:$0xff]
    %v121 = vld [vmem:[%s0 + $0xa8] sm:$0xff]
    %v122 = vld [vmem:[%s0 + $0xb0] sm:$0xff]
    %v123 = vld [vmem:[%s0 + $0xb8] sm:$0xff]
    %v124 = vld [vmem:[%s0 + $0xc0] sm:$0xff]
    %v125 = vld [vmem:[%s0 + $0xc8] sm:$0xff]
    %v126 = vld [vmem:[%s0 + $0xd0] sm:$0xff]
    %v127 = vld [vmem:[%s0 + $0xd8] sm:$0xff]
    %v128 = vld [vmem:[%s0 + $0xe0] sm:$0xff]
    %v129 = vld [vmem:[%s0 + $0xe8] sm:$0xff]
    %v130 = vld [vmem:[%s0 + $0xf0] sm:$0xff]
    %v131 = vld [vmem:[%s0 + $0xf8] sm:$0xff]
    %v132 = vld [vmem:[%s0 + $0x100] sm:$0xff]
    %v133 = vld [vmem:[%s0 + $0x108] sm:$0xff]
    %v134 = vld [vmem:[%s0 + $0x110] sm:$0xff]
    %v135 = vld [vmem:[%s0 + $0x118] sm:$0xff]
    %v136 = vld [vmem:[%s0 + $0x120] sm:$0xff]
    %v137 = vld [vmem:[%s0 + $0x128] sm:$0xff]
    %v138 = vld [vmem:[%s0 + $0x130] sm:$0xff]
    %v139 = vld [vmem:[%s0 + $0x138] sm:$0xff]
    %v140 = vld [vmem:[%s0 + $0x140] sm:$0xff]
    %v141 = vld [vmem:[%s0 + $0x148] sm:$0xff]
    %v142 = vld [vmem:[%s0 + $0x150] sm:$0xff]
    %v143 = vld [vmem:[%s0 + $0x158] sm:$0xff]
    %v144 = vld [vmem:[%s0 + $0x160] sm:$0xff]
    %v145 = vld [vmem:[%s0 + $0x168] sm:$0xff]
    %v146 = vld [vmem:[%s0 + $0x170] sm:$0xff]
    %v147 = vld [vmem:[%s0 + $0x178] sm:$0xff]
    %v148 = vld [vmem:[%s0 + $0x180] sm:$0xff]
    %v149 = vld [vmem:[%s0 + $0x188] sm:$0xff]
    %v150 = vld [vmem:[%s0 + $0x190] sm:$0xff]
    %v151 = vld [vmem:[%s0 + $0x198] sm:$0xff]
    %v152 = vld [vmem:[%s0 + $0x1a0] sm:$0xff]
    %v153 = vld [vmem:[%s0 + $0x1a8] sm:$0xff]
    %v154 = vld [vmem:[%s0 + $0x1b0] sm:$0xff]
    %v155 = vld [vmem:[%s0 + $0x1b8] sm:$0xff]
    %v156 = vld [vmem:[%s0 + $0x1c0] sm:$0xff]
    %v157 = vld [vmem:[%s0 + $0x1c8] sm:$0xff]
    %v158 = vld [vmem:[%s0 + $0x1d0] sm:$0xff]
    %v159 = vld [vmem:[%s0 + $0x1d8] sm:$0xff]
    %v160 = vld [vmem:[%s0 + $0x1e0] sm:$0xff]
    %v161 = vld [vmem:[%s0 + $0x1e8] sm:$0xff]
    %v162 = vld [vmem:[%s0 + $0x1f0] sm:$0xff]
    %v163 = vld [vmem:[%s0 + $0x1f8] sm:$0xff]
    %v164 = vld [vmem:[%s1] sm:$0xff]
    %v165 = vld [vmem:[%s1 + $0x8] sm:$0xf]
    %v166 = vld [vmem:[%s2] sm:$0x1]
    %v168 = vperm.slane %v166, 0
    %vm170 = vcmask 97280
    %v172 = vsel %vm170, %v100, 0
    %v175 = vsel %vm170, %v101, 0
    %v178 = vsel %vm170, %v102, 0
    %v181 = vsel %vm170, %v103, 0
    %v184 = vsel %vm170, %v104, 0
    %v187 = vsel %vm170, %v105, 0
    %v190 = vsel %vm170, %v106, 0
    %v193 = vsel %vm170, %v107, 0
    %v196 = vsel %vm170, %v108, 0
    %v199 = vsel %vm170, %v109, 0
    %v202 = vsel %vm170, %v110, 0
    %v205 = vsel %vm170, %v111, 0
    %v208 = vsel %vm170, %v112, 0
    %v211 = vsel %vm170, %v113, 0
    %v214 = vsel %vm170, %v114, 0
    %v217 = vsel %vm170, %v115, 0
    %v220 = vsel %vm170, %v116, 0
    %v223 = vsel %vm170, %v117, 0
    %v226 = vsel %vm170, %v118, 0
    %v229 = vsel %vm170, %v119, 0
    %v232 = vsel %vm170, %v120, 0
    %v235 = vsel %vm170, %v121, 0
    %v238 = vsel %vm170, %v122, 0
    %v241 = vsel %vm170, %v123, 0
    %v244 = vsel %vm170, %v124, 0
    %v247 = vsel %vm170, %v125, 0
    %v250 = vsel %vm170, %v126, 0
    %v253 = vsel %vm170, %v127, 0
    %v256 = vsel %vm170, %v128, 0
    %v259 = vsel %vm170, %v129, 0
    %v262 = vsel %vm170, %v130, 0
    %v265 = vsel %vm170, %v131, 0
    %v268 = vsel %vm170, %v132, 0
    %v271 = vsel %vm170, %v133, 0
    %v274 = vsel %vm170, %v134, 0
    %v277 = vsel %vm170, %v135, 0
    %v280 = vsel %vm170, %v136, 0
    %v283 = vsel %vm170, %v137, 0
    %v286 = vsel %vm170, %v138, 0
    %v289 = vsel %vm170, %v139, 0
    %v292 = vsel %vm170, %v140, 0
    %v295 = vsel %vm170, %v141, 0
    %v298 = vsel %vm170, %v142, 0
    %v301 = vsel %vm170, %v143, 0
    %v304 = vsel %vm170, %v144, 0
    %v307 = vsel %vm170, %v145, 0
    %v310 = vsel %vm170, %v146, 0
    %v313 = vsel %vm170, %v147, 0
    %v316 = vsel %vm170, %v148, 0
    %v319 = vsel %vm170, %v149, 0
    %v322 = vsel %vm170, %v150, 0
    %v325 = vsel %vm170, %v151, 0
    %v328 = vsel %vm170, %v152, 0
    %v331 = vsel %vm170, %v153, 0
    %v334 = vsel %vm170, %v154, 0
    %v337 = vsel %vm170, %v155, 0
    %v340 = vsel %vm170, %v156, 0
    %v343 = vsel %vm170, %v157, 0
    %v346 = vsel %vm170, %v158, 0
    %v349 = vsel %vm170, %v159, 0
    %v352 = vsel %vm170, %v160, 0
    %v355 = vsel %vm170, %v161, 0
    %v358 = vsel %vm170, %v162, 0
    %v361 = vsel %vm170, %v163, 0
    %vm363 = vcmask 1043456
    %v365 = vsel %vm363, %v165, 0
    %367 = vmatpush.msra.mxu0 0.0
    %368 = vmatpush.msra.mxu0 0.0
    %369 = vmatpush.msra.mxu0 0.0
    %370 = vmatpush.msra.mxu0 0.0
    %371 = vmatpush.msra.mxu0 0.0
    %372 = vmatpush.msra.mxu0 0.0
    %373 = vmatpush.msra.mxu0 0.0
    %374 = vmatpush.msra.mxu0 0.0
    %375 = vmatpush.msra.mxu0 0.0
    %376 = vmatpush.msra.mxu0 0.0
    %377 = vmatpush.msra.mxu0 0.0
    %378 = vmatpush.msra.mxu0 0.0
    %379 = vmatpush.msra.mxu0 0.0
    %380 = vmatpush.msra.mxu0 0.0
    %381 = vmatpush.msra.mxu0 %v365
    %382 = vmatpush.msra.mxu0 %v164
    %383 = vmatmul.f32.gmra.mxu0 %v172
    %v384 = vpop.f32.mrf.mxu0
    %v385 = vadd.f32 %v168, %v384
    %386 = vmatmul.f32.gmra.mxu0 %v175
    %v387 = vpop.f32.mrf.mxu0
    %v388 = vadd.f32 %v168, %v387
    %389 = vmatmul.f32.gmra.mxu0 %v178
    %v390 = vpop.f32.mrf.mxu0
    %v391 = vadd.f32 %v168, %v390
    %392 = vmatmul.f32.gmra.mxu0 %v181
    %v393 = vpop.f32.mrf.mxu0
    %v394 = vadd.f32 %v168, %v393
    %395 = vmatmul.f32.gmra.mxu0 %v184
    %v396 = vpop.f32.mrf.mxu0
    %v397 = vadd.f32 %v168, %v396
    %398 = vmatmul.f32.gmra.mxu0 %v187
    %v399 = vpop.f32.mrf.mxu0
    %v400 = vadd.f32 %v168, %v399
    %401 = vmatmul.f32.gmra.mxu0 %v190
    %v402 = vpop.f32.mrf.mxu0
    %v403 = vadd.f32 %v168, %v402
    %404 = vmatmul.f32.gmra.mxu0 %v193
    %v405 = vpop.f32.mrf.mxu0
    %v406 = vadd.f32 %v168, %v405
    %407 = vmatmul.f32.gmra.mxu0 %v196
    %v408 = vpop.f32.mrf.mxu0
    %v409 = vadd.f32 %v168, %v408
    %410 = vmatmul.f32.gmra.mxu0 %v199
    %v411 = vpop.f32.mrf.mxu0
    %v412 = vadd.f32 %v168, %v411
    %413 = vmatmul.f32.gmra.mxu0 %v202
    %v414 = vpop.f32.mrf.mxu0
    %v415 = vadd.f32 %v168, %v414
    %416 = vmatmul.f32.gmra.mxu0 %v205
    %v417 = vpop.f32.mrf.mxu0
    %v418 = vadd.f32 %v168, %v417
    %419 = vmatmul.f32.gmra.mxu0 %v208
    %v420 = vpop.f32.mrf.mxu0
    %v421 = vadd.f32 %v168, %v420
    %422 = vmatmul.f32.gmra.mxu0 %v211
    %v423 = vpop.f32.mrf.mxu0
    %v424 = vadd.f32 %v168, %v423
    %425 = vmatmul.f32.gmra.mxu0 %v214
    %v426 = vpop.f32.mrf.mxu0
    %v427 = vadd.f32 %v168, %v426
    %428 = vmatmul.f32.gmra.mxu0 %v217
    %v429 = vpop.f32.mrf.mxu0
    %v430 = vadd.f32 %v168, %v429
    %431 = vmatmul.f32.gmra.mxu0 %v220
    %v432 = vpop.f32.mrf.mxu0
    %v433 = vadd.f32 %v168, %v432
    %434 = vmatmul.f32.gmra.mxu0 %v223
    %v435 = vpop.f32.mrf.mxu0
    %v436 = vadd.f32 %v168, %v435
    %437 = vmatmul.f32.gmra.mxu0 %v226
    %v438 = vpop.f32.mrf.mxu0
    %v439 = vadd.f32 %v168, %v438
    %440 = vmatmul.f32.gmra.mxu0 %v229
    %v441 = vpop.f32.mrf.mxu0
    %v442 = vadd.f32 %v168, %v441
    %443 = vmatmul.f32.gmra.mxu0 %v232
    %v444 = vpop.f32.mrf.mxu0
    %v445 = vadd.f32 %v168, %v444
    %446 = vmatmul.f32.gmra.mxu0 %v235
    %v447 = vpop.f32.mrf.mxu0
    %v448 = vadd.f32 %v168, %v447
    %449 = vmatmul.f32.gmra.mxu0 %v238
    %v450 = vpop.f32.mrf.mxu0
    %v451 = vadd.f32 %v168, %v450
    %452 = vmatmul.f32.gmra.mxu0 %v241
    %v453 = vpop.f32.mrf.mxu0
    %v454 = vadd.f32 %v168, %v453
    %455 = vmatmul.f32.gmra.mxu0 %v244
    %v456 = vpop.f32.mrf.mxu0
    %v457 = vadd.f32 %v168, %v456
    %458 = vmatmul.f32.gmra.mxu0 %v247
    %v459 = vpop.f32.mrf.mxu0
    %v460 = vadd.f32 %v168, %v459
    %461 = vmatmul.f32.gmra.mxu0 %v250
    %v462 = vpop.f32.mrf.mxu0
    %v463 = vadd.f32 %v168, %v462
    %464 = vmatmul.f32.gmra.mxu0 %v253
    %v465 = vpop.f32.mrf.mxu0
    %v466 = vadd.f32 %v168, %v465
    %467 = vmatmul.f32.gmra.mxu0 %v256
    %v468 = vpop.f32.mrf.mxu0
    %v469 = vadd.f32 %v168, %v468
    %470 = vmatmul.f32.gmra.mxu0 %v259
    %v471 = vpop.f32.mrf.mxu0
    %v472 = vadd.f32 %v168, %v471
    %473 = vmatmul.f32.gmra.mxu0 %v262
    %v474 = vpop.f32.mrf.mxu0
    %v475 = vadd.f32 %v168, %v474
    %476 = vmatmul.f32.gmra.mxu0 %v265
    %v477 = vpop.f32.mrf.mxu0
    %v478 = vadd.f32 %v168, %v477
    %479 = vmatmul.f32.gmra.mxu0 %v268
    %v480 = vpop.f32.mrf.mxu0
    %v481 = vadd.f32 %v168, %v480
    %482 = vmatmul.f32.gmra.mxu0 %v271
    %v483 = vpop.f32.mrf.mxu0
    %v484 = vadd.f32 %v168, %v483
    %485 = vmatmul.f32.gmra.mxu0 %v274
    %v486 = vpop.f32.mrf.mxu0
    %v487 = vadd.f32 %v168, %v486
    %488 = vmatmul.f32.gmra.mxu0 %v277
    %v489 = vpop.f32.mrf.mxu0
    %v490 = vadd.f32 %v168, %v489
    %491 = vmatmul.f32.gmra.mxu0 %v280
    %v492 = vpop.f32.mrf.mxu0
    %v493 = vadd.f32 %v168, %v492
    %494 = vmatmul.f32.gmra.mxu0 %v283
    %v495 = vpop.f32.mrf.mxu0
    %v496 = vadd.f32 %v168, %v495
    %497 = vmatmul.f32.gmra.mxu0 %v286
    %v498 = vpop.f32.mrf.mxu0
    %v499 = vadd.f32 %v168, %v498
    %500 = vmatmul.f32.gmra.mxu0 %v289
    %v501 = vpop.f32.mrf.mxu0
    %v502 = vadd.f32 %v168, %v501
    %503 = vmatmul.f32.gmra.mxu0 %v292
    %v504 = vpop.f32.mrf.mxu0
    %v505 = vadd.f32 %v168, %v504
    %506 = vmatmul.f32.gmra.mxu0 %v295
    %v507 = vpop.f32.mrf.mxu0
    %v508 = vadd.f32 %v168, %v507
    %509 = vmatmul.f32.gmra.mxu0 %v298
    %v510 = vpop.f32.mrf.mxu0
    %v511 = vadd.f32 %v168, %v510
    %512 = vmatmul.f32.gmra.mxu0 %v301
    %v513 = vpop.f32.mrf.mxu0
    %v514 = vadd.f32 %v168, %v513
    %515 = vmatmul.f32.gmra.mxu0 %v304
    %v516 = vpop.f32.mrf.mxu0
    %v517 = vadd.f32 %v168, %v516
    %518 = vmatmul.f32.gmra.mxu0 %v307
    %v519 = vpop.f32.mrf.mxu0
    %v520 = vadd.f32 %v168, %v519
    %521 = vmatmul.f32.gmra.mxu0 %v310
    %v522 = vpop.f32.mrf.mxu0
    %v523 = vadd.f32 %v168, %v522
    %524 = vmatmul.f32.gmra.mxu0 %v313
    %v525 = vpop.f32.mrf.mxu0
    %v526 = vadd.f32 %v168, %v525
    %527 = vmatmul.f32.gmra.mxu0 %v316
    %v528 = vpop.f32.mrf.mxu0
    %v529 = vadd.f32 %v168, %v528
    %530 = vmatmul.f32.gmra.mxu0 %v319
    %v531 = vpop.f32.mrf.mxu0
    %v532 = vadd.f32 %v168, %v531
    %533 = vmatmul.f32.gmra.mxu0 %v322
    %v534 = vpop.f32.mrf.mxu0
    %v535 = vadd.f32 %v168, %v534
    %536 = vmatmul.f32.gmra.mxu0 %v325
    %v537 = vpop.f32.mrf.mxu0
    %v538 = vadd.f32 %v168, %v537
    %539 = vmatmul.f32.gmra.mxu0 %v328
    %v540 = vpop.f32.mrf.mxu0
    %v541 = vadd.f32 %v168, %v540
    %542 = vmatmul.f32.gmra.mxu0 %v331
    %v543 = vpop.f32.mrf.mxu0
    %v544 = vadd.f32 %v168, %v543
    %545 = vmatmul.f32.gmra.mxu0 %v334
    %v546 = vpop.f32.mrf.mxu0
    %v547 = vadd.f32 %v168, %v546
    %548 = vmatmul.f32.gmra.mxu0 %v337
    %v549 = vpop.f32.mrf.mxu0
    %v550 = vadd.f32 %v168, %v549
    %551 = vmatmul.f32.gmra.mxu0 %v340
    %v552 = vpop.f32.mrf.mxu0
    %v553 = vadd.f32 %v168, %v552
    %554 = vmatmul.f32.gmra.mxu0 %v343
    %v555 = vpop.f32.mrf.mxu0
    %v556 = vadd.f32 %v168, %v555
    %557 = vmatmul.f32.gmra.mxu0 %v346
    %v558 = vpop.f32.mrf.mxu0
    %v559 = vadd.f32 %v168, %v558
    %560 = vmatmul.f32.gmra.mxu0 %v349
    %v561 = vpop.f32.mrf.mxu0
    %v562 = vadd.f32 %v168, %v561
    %563 = vmatmul.f32.gmra.mxu0 %v352
    %v564 = vpop.f32.mrf.mxu0
    %v565 = vadd.f32 %v168, %v564
    %566 = vmatmul.f32.gmra.mxu0 %v355
    %v567 = vpop.f32.mrf.mxu0
    %v568 = vadd.f32 %v168, %v567
    %569 = vmatmul.f32.gmra.mxu0 %v358
    %v570 = vpop.f32.mrf.mxu0
    %v571 = vadd.f32 %v168, %v570
    %572 = vmatmul.f32.gmra.mxu0 %v361
    %v573 = vpop.f32.mrf.mxu0
    %v574 = vadd.f32 %v168, %v573
    %575 = vdwg.mxu0
    %vm576 = vcmask 293888
    %577 = vst.msk [vmem:[#allocation2] sm:$0xff] %vm576, 0.0
    %578 = vst.msk [vmem:[#allocation2 + $0x8] sm:$0xff] %vm576, 0.0
    %vm579 = vcmask 287744
    %580 = vst.msk [vmem:[#allocation2 + $0x10] sm:$0x3] %vm579, 0.0
    %581 = vst.msk [vmem:[#allocation2 + $0x18] sm:$0xff] %vm576, 0.0
    %582 = vst.msk [vmem:[#allocation2 + $0x20] sm:$0xff] %vm576, 0.0
    %583 = vst.msk [vmem:[#allocation2 + $0x28] sm:$0x3] %vm579, 0.0
    %584 = vst.msk [vmem:[#allocation2 + $0x30] sm:$0xff] %vm576, 0.0
    %585 = vst.msk [vmem:[#allocation2 + $0x38] sm:$0xff] %vm576, 0.0
    %586 = vst.msk [vmem:[#allocation2 + $0x40] sm:$0x3] %vm579, 0.0
    %587 = vst.msk [vmem:[#allocation2 + $0x48] sm:$0xff] %vm576, 0.0
    %588 = vst.msk [vmem:[#allocation2 + $0x50] sm:$0xff] %vm576, 0.0
    %589 = vst.msk [vmem:[#allocation2 + $0x58] sm:$0x3] %vm579, 0.0
    %590 = vst.msk [vmem:[#allocation2 + $0x60] sm:$0xff] %vm576, 0.0
    %591 = vst.msk [vmem:[#allocation2 + $0x68] sm:$0xff] %vm576, 0.0
    %592 = vst.msk [vmem:[#allocation2 + $0x70] sm:$0x3] %vm579, 0.0
    %593 = vst.msk [vmem:[#allocation2 + $0x78] sm:$0xff] %vm576, 0.0
    %594 = vst.msk [vmem:[#allocation2 + $0x80] sm:$0xff] %vm576, 0.0
    %595 = vst.msk [vmem:[#allocation2 + $0x88] sm:$0x3] %vm579, 0.0
    %596 = vst.msk [vmem:[#allocation2 + $0x90] sm:$0xff] %vm576, 0.0
    %597 = vst.msk [vmem:[#allocation2 + $0x98] sm:$0xff] %vm576, 0.0
    %598 = vst.msk [vmem:[#allocation2 + $0xa0] sm:$0x3] %vm579, 0.0
    %599 = vst.msk [vmem:[#allocation2 + $0xa8] sm:$0xff] %vm576, 0.0
    %600 = vst.msk [vmem:[#allocation2 + $0xb0] sm:$0xff] %vm576, 0.0
    %601 = vst.msk [vmem:[#allocation2 + $0xb8] sm:$0x3] %vm579, 0.0
    %602 = vst.msk [vmem:[#allocation2 + $0xc0] sm:$0xff] %vm576, 0.0
    %603 = vst.msk [vmem:[#allocation2 + $0xc8] sm:$0xff] %vm576, 0.0
    %604 = vst.msk [vmem:[#allocation2 + $0xd0] sm:$0x3] %vm579, 0.0
    %605 = vst.msk [vmem:[#allocation2 + $0xd8] sm:$0xff] %vm576, 0.0
    %606 = vst.msk [vmem:[#allocation2 + $0xe0] sm:$0xff] %vm576, 0.0
    %607 = vst.msk [vmem:[#allocation2 + $0xe8] sm:$0x3] %vm579, 0.0
    %608 = vst.msk [vmem:[#allocation2 + $0xf0] sm:$0xff] %vm576, 0.0
    %609 = vst.msk [vmem:[#allocation2 + $0xf8] sm:$0xff] %vm576, 0.0
    %610 = vst.msk [vmem:[#allocation2 + $0x100] sm:$0x3] %vm579, 0.0
    %611 = vst.msk [vmem:[#allocation2 + $0x108] sm:$0xff] %vm576, 0.0
    %612 = vst.msk [vmem:[#allocation2 + $0x110] sm:$0xff] %vm576, 0.0
    %613 = vst.msk [vmem:[#allocation2 + $0x118] sm:$0x3] %vm579, 0.0
    %614 = vst.msk [vmem:[#allocation2 + $0x120] sm:$0xff] %vm576, 0.0
    %615 = vst.msk [vmem:[#allocation2 + $0x128] sm:$0xff] %vm576, 0.0
    %616 = vst.msk [vmem:[#allocation2 + $0x130] sm:$0x3] %vm579, 0.0
    %617 = vst.msk [vmem:[#allocation2 + $0x138] sm:$0xff] %vm576, 0.0
    %618 = vst.msk [vmem:[#allocation2 + $0x140] sm:$0xff] %vm576, 0.0
    %619 = vst.msk [vmem:[#allocation2 + $0x148] sm:$0x3] %vm579, 0.0
    %620 = vst.msk [vmem:[#allocation2 + $0x150] sm:$0xff] %vm576, 0.0
    %621 = vst.msk [vmem:[#allocation2 + $0x158] sm:$0xff] %vm576, 0.0
    %622 = vst.msk [vmem:[#allocation2 + $0x160] sm:$0x3] %vm579, 0.0
    %623 = vst.msk [vmem:[#allocation2 + $0x168] sm:$0xff] %vm576, 0.0
    %624 = vst.msk [vmem:[#allocation2 + $0x170] sm:$0xff] %vm576, 0.0
    %625 = vst.msk [vmem:[#allocation2 + $0x178] sm:$0x3] %vm579, 0.0
    %626 = vst.msk [vmem:[#allocation2 + $0x180] sm:$0xff] %vm576, 0.0
    %627 = vst.msk [vmem:[#allocation2 + $0x188] sm:$0xff] %vm576, 0.0
    %628 = vst.msk [vmem:[#allocation2 + $0x190] sm:$0x3] %vm579, 0.0
    %629 = vst.msk [vmem:[#allocation2 + $0x198] sm:$0xff] %vm576, 0.0
    %630 = vst.msk [vmem:[#allocation2 + $0x1a0] sm:$0xff] %vm576, 0.0
    %631 = vst.msk [vmem:[#allocation2 + $0x1a8] sm:$0x3] %vm579, 0.0
    %632 = vst.msk [vmem:[#allocation2 + $0x1b0] sm:$0xff] %vm576, 0.0
    %633 = vst.msk [vmem:[#allocation2 + $0x1b8] sm:$0xff] %vm576, 0.0
    %634 = vst.msk [vmem:[#allocation2 + $0x1c0] sm:$0x3] %vm579, 0.0
    %635 = vst.msk [vmem:[#allocation2 + $0x1c8] sm:$0xff] %vm576, 0.0
    %636 = vst.msk [vmem:[#allocation2 + $0x1d0] sm:$0xff] %vm576, 0.0
    %637 = vst.msk [vmem:[#allocation2 + $0x1d8] sm:$0x3] %vm579, 0.0
    %638 = vst.msk [vmem:[#allocation2 + $0x1e0] sm:$0xff] %vm576, 0.0
    %639 = vst.msk [vmem:[#allocation2 + $0x1e8] sm:$0xff] %vm576, 0.0
    %640 = vst.msk [vmem:[#allocation2 + $0x1f0] sm:$0x3] %vm579, 0.0
    %641 = vst.msk [vmem:[#allocation2 + $0x1f8] sm:$0xff] %vm576, 0.0
    %642 = vst.msk [vmem:[#allocation2 + $0x200] sm:$0xff] %vm576, 0.0
    %643 = vst.msk [vmem:[#allocation2 + $0x208] sm:$0x3] %vm579, 0.0
    %644 = vst.msk [vmem:[#allocation2 + $0x210] sm:$0xff] %vm576, 0.0
    %645 = vst.msk [vmem:[#allocation2 + $0x218] sm:$0xff] %vm576, 0.0
    %646 = vst.msk [vmem:[#allocation2 + $0x220] sm:$0x3] %vm579, 0.0
    %647 = vst.msk [vmem:[#allocation2 + $0x228] sm:$0xff] %vm576, 0.0
    %648 = vst.msk [vmem:[#allocation2 + $0x230] sm:$0xff] %vm576, 0.0
    %649 = vst.msk [vmem:[#allocation2 + $0x238] sm:$0x3] %vm579, 0.0
    %650 = vst.msk [vmem:[#allocation2 + $0x240] sm:$0xff] %vm576, 0.0
    %651 = vst.msk [vmem:[#allocation2 + $0x248] sm:$0xff] %vm576, 0.0
    %652 = vst.msk [vmem:[#allocation2 + $0x250] sm:$0x3] %vm579, 0.0
    %653 = vst.msk [vmem:[#allocation2 + $0x258] sm:$0xff] %vm576, 0.0
    %654 = vst.msk [vmem:[#allocation2 + $0x260] sm:$0xff] %vm576, 0.0
    %655 = vst.msk [vmem:[#allocation2 + $0x268] sm:$0x3] %vm579, 0.0
    %656 = vst.msk [vmem:[#allocation2 + $0x270] sm:$0xff] %vm576, 0.0
    %657 = vst.msk [vmem:[#allocation2 + $0x278] sm:$0xff] %vm576, 0.0
    %658 = vst.msk [vmem:[#allocation2 + $0x280] sm:$0x3] %vm579, 0.0
    %659 = vst.msk [vmem:[#allocation2 + $0x288] sm:$0xff] %vm576, 0.0
    %660 = vst.msk [vmem:[#allocation2 + $0x290] sm:$0xff] %vm576, 0.0
    %661 = vst.msk [vmem:[#allocation2 + $0x298] sm:$0x3] %vm579, 0.0
    %662 = vst.msk [vmem:[#allocation2 + $0x2a0] sm:$0xff] %vm576, 0.0
    %663 = vst.msk [vmem:[#allocation2 + $0x2a8] sm:$0xff] %vm576, 0.0
    %664 = vst.msk [vmem:[#allocation2 + $0x2b0] sm:$0x3] %vm579, 0.0
    %665 = vst.msk [vmem:[#allocation2 + $0x2b8] sm:$0xff] %vm576, 0.0
    %666 = vst.msk [vmem:[#allocation2 + $0x2c0] sm:$0xff] %vm576, 0.0
    %667 = vst.msk [vmem:[#allocation2 + $0x2c8] sm:$0x3] %vm579, 0.0
    %668 = vst.msk [vmem:[#allocation2 + $0x2d0] sm:$0xff] %vm576, 0.0
    %669 = vst.msk [vmem:[#allocation2 + $0x2d8] sm:$0xff] %vm576, 0.0
    %670 = vst.msk [vmem:[#allocation2 + $0x2e0] sm:$0x3] %vm579, 0.0
    %671 = vst.msk [vmem:[#allocation2 + $0x2e8] sm:$0xff] %vm576, 0.0
    %672 = vst.msk [vmem:[#allocation2 + $0x2f0] sm:$0xff] %vm576, 0.0
    %673 = vst.msk [vmem:[#allocation2 + $0x2f8] sm:$0x3] %vm579, 0.0
    %674 = vst.msk [vmem:[#allocation2 + $0x300] sm:$0xff] %vm576, 0.0
    %675 = vst.msk [vmem:[#allocation2 + $0x308] sm:$0xff] %vm576, 0.0
    %676 = vst.msk [vmem:[#allocation2 + $0x310] sm:$0x3] %vm579, 0.0
    %677 = vst.msk [vmem:[#allocation2 + $0x318] sm:$0xff] %vm576, 0.0
    %678 = vst.msk [vmem:[#allocation2 + $0x320] sm:$0xff] %vm576, 0.0
    %679 = vst.msk [vmem:[#allocation2 + $0x328] sm:$0x3] %vm579, 0.0
    %680 = vst.msk [vmem:[#allocation2 + $0x330] sm:$0xff] %vm576, 0.0
    %681 = vst.msk [vmem:[#allocation2 + $0x338] sm:$0xff] %vm576, 0.0
    %682 = vst.msk [vmem:[#allocation2 + $0x340] sm:$0x3] %vm579, 0.0
    %683 = vst.msk [vmem:[#allocation2 + $0x348] sm:$0xff] %vm576, 0.0
    %684 = vst.msk [vmem:[#allocation2 + $0x350] sm:$0xff] %vm576, 0.0
    %685 = vst.msk [vmem:[#allocation2 + $0x358] sm:$0x3] %vm579, 0.0
    %s686 = scalar_lea.vmem [#allocation2], 24
    %687 = vst.msk [vmem:[%s686 + $0x1] sm:$0xff] %vm576, %v385
    %688 = vst.msk [vmem:[%s686 + $0x9] sm:$0xff] %vm576, %v388
    %689 = vst.msk [vmem:[%s686 + $0x19] sm:$0xff] %vm576, %v391
    %690 = vst.msk [vmem:[%s686 + $0x21] sm:$0xff] %vm576, %v394
    %691 = vst.msk [vmem:[%s686 + $0x31] sm:$0xff] %vm576, %v397
    %692 = vst.msk [vmem:[%s686 + $0x39] sm:$0xff] %vm576, %v400
    %693 = vst.msk [vmem:[%s686 + $0x49] sm:$0xff] %vm576, %v403
    %694 = vst.msk [vmem:[%s686 + $0x51] sm:$0xff] %vm576, %v406
    %695 = vst.msk [vmem:[%s686 + $0x61] sm:$0xff] %vm576, %v409
    %696 = vst.msk [vmem:[%s686 + $0x69] sm:$0xff] %vm576, %v412
    %697 = vst.msk [vmem:[%s686 + $0x79] sm:$0xff] %vm576, %v415
    %698 = vst.msk [vmem:[%s686 + $0x81] sm:$0xff] %vm576, %v418
    %699 = vst.msk [vmem:[%s686 + $0x91] sm:$0xff] %vm576, %v421
    %700 = vst.msk [vmem:[%s686 + $0x99] sm:$0xff] %vm576, %v424
    %701 = vst.msk [vmem:[%s686 + $0xa9] sm:$0xff] %vm576, %v427
    %702 = vst.msk [vmem:[%s686 + $0xb1] sm:$0xff] %vm576, %v430
    %703 = vst.msk [vmem:[%s686 + $0xc1] sm:$0xff] %vm576, %v433
    %704 = vst.msk [vmem:[%s686 + $0xc9] sm:$0xff] %vm576, %v436
    %705 = vst.msk [vmem:[%s686 + $0xd9] sm:$0xff] %vm576, %v439
    %706 = vst.msk [vmem:[%s686 + $0xe1] sm:$0xff] %vm576, %v442
    %707 = vst.msk [vmem:[%s686 + $0xf1] sm:$0xff] %vm576, %v445
    %708 = vst.msk [vmem:[%s686 + $0xf9] sm:$0xff] %vm576, %v448
    %709 = vst.msk [vmem:[%s686 + $0x109] sm:$0xff] %vm576, %v451
    %710 = vst.msk [vmem:[%s686 + $0x111] sm:$0xff] %vm576, %v454
    %711 = vst.msk [vmem:[%s686 + $0x121] sm:$0xff] %vm576, %v457
    %712 = vst.msk [vmem:[%s686 + $0x129] sm:$0xff] %vm576, %v460
    %713 = vst.msk [vmem:[%s686 + $0x139] sm:$0xff] %vm576, %v463
    %714 = vst.msk [vmem:[%s686 + $0x141] sm:$0xff] %vm576, %v466
    %715 = vst.msk [vmem:[%s686 + $0x151] sm:$0xff] %vm576, %v469
    %716 = vst.msk [vmem:[%s686 + $0x159] sm:$0xff] %vm576, %v472
    %717 = vst.msk [vmem:[%s686 + $0x169] sm:$0xff] %vm576, %v475
    %718 = vst.msk [vmem:[%s686 + $0x171] sm:$0xff] %vm576, %v478
    %719 = vst.msk [vmem:[%s686 + $0x1b1] sm:$0xff] %vm576, %v481
    %720 = vst.msk [vmem:[%s686 + $0x1b9] sm:$0xff] %vm576, %v484
    %721 = vst.msk [vmem:[%s686 + $0x1c9] sm:$0xff] %vm576, %v487
    %722 = vst.msk [vmem:[%s686 + $0x1d1] sm:$0xff] %vm576, %v490
    %723 = vst.msk [vmem:[%s686 + $0x1e1] sm:$0xff] %vm576, %v493
    %724 = vst.msk [vmem:[%s686 + $0x1e9] sm:$0xff] %vm576, %v496
    %725 = vst.msk [vmem:[%s686 + $0x1f9] sm:$0xff] %vm576, %v499
    %726 = vst.msk [vmem:[%s686 + $0x201] sm:$0xff] %vm576, %v502
    %727 = vst.msk [vmem:[%s686 + $0x211] sm:$0xff] %vm576, %v505
    %728 = vst.msk [vmem:[%s686 + $0x219] sm:$0xff] %vm576, %v508
    %729 = vst.msk [vmem:[%s686 + $0x229] sm:$0xff] %vm576, %v511
    %730 = vst.msk [vmem:[%s686 + $0x231] sm:$0xff] %vm576, %v514
    %731 = vst.msk [vmem:[%s686 + $0x241] sm:$0xff] %vm576, %v517
    %732 = vst.msk [vmem:[%s686 + $0x249] sm:$0xff] %vm576, %v520
    %733 = vst.msk [vmem:[%s686 + $0x259] sm:$0xff] %vm576, %v523
    %734 = vst.msk [vmem:[%s686 + $0x261] sm:$0xff] %vm576, %v526
    %735 = vst.msk [vmem:[%s686 + $0x271] sm:$0xff] %vm576, %v529
    %736 = vst.msk [vmem:[%s686 + $0x279] sm:$0xff] %vm576, %v532
    %737 = vst.msk [vmem:[%s686 + $0x289] sm:$0xff] %vm576, %v535
    %738 = vst.msk [vmem:[%s686 + $0x291] sm:$0xff] %vm576, %v538
    %739 = vst.msk [vmem:[%s686 + $0x2a1] sm:$0xff] %vm576, %v541
    %740 = vst.msk [vmem:[%s686 + $0x2a9] sm:$0xff] %vm576, %v544
    %741 = vst.msk [vmem:[%s686 + $0x2b9] sm:$0xff] %vm576, %v547
    %742 = vst.msk [vmem:[%s686 + $0x2c1] sm:$0xff] %vm576, %v550
    %743 = vst.msk [vmem:[%s686 + $0x2d1] sm:$0xff] %vm576, %v553
    %744 = vst.msk [vmem:[%s686 + $0x2d9] sm:$0xff] %vm576, %v556
    %745 = vst.msk [vmem:[%s686 + $0x2e9] sm:$0xff] %vm576, %v559
    %746 = vst.msk [vmem:[%s686 + $0x2f1] sm:$0xff] %vm576, %v562
    %747 = vst.msk [vmem:[%s686 + $0x301] sm:$0xff] %vm576, %v565
    %748 = vst.msk [vmem:[%s686 + $0x309] sm:$0xff] %vm576, %v568
    %749 = vst.msk [vmem:[%s686 + $0x319] sm:$0xff] %vm576, %v571
    %750 = vst.msk [vmem:[%s686 + $0x321] sm:$0xff] %vm576, %v574
    %v751 = vld [vmem:[#allocation2] ss:$2 sm:$0xff]
    %s752 = scalar_lea.vmem [#allocation2], 48
    %v753 = vld [vmem:[%s752] ss:$2 sm:$0xff]
    %s754 = scalar_lea.vmem [#allocation2], 96
    %v755 = vld [vmem:[%s754] ss:$2 sm:$0xff]
    %s756 = scalar_lea.vmem [#allocation2], 144
    %v757 = vld [vmem:[%s756] ss:$2 sm:$0xff]
    %s758 = scalar_lea.vmem [#allocation2], 192
    %v759 = vld [vmem:[%s758] ss:$2 sm:$0xff]
    %s760 = scalar_lea.vmem [#allocation2], 240
    %v761 = vld [vmem:[%s760] ss:$2 sm:$0xff]
    %s762 = scalar_lea.vmem [#allocation2], 288
    %v763 = vld [vmem:[%s762] ss:$2 sm:$0xff]
    %s764 = scalar_lea.vmem [#allocation2], 336
    %v765 = vld [vmem:[%s764] ss:$2 sm:$0xff]
    %s766 = scalar_lea.vmem [#allocation2], 432
    %v767 = vld [vmem:[%s766] ss:$2 sm:$0xff]
    %s768 = scalar_lea.vmem [#allocation2], 480
    %v769 = vld [vmem:[%s768] ss:$2 sm:$0xff]
    %s770 = scalar_lea.vmem [#allocation2], 528
    %v771 = vld [vmem:[%s770] ss:$2 sm:$0xff]
    %s772 = scalar_lea.vmem [#allocation2], 576
    %v773 = vld [vmem:[%s772] ss:$2 sm:$0xff]
    %s774 = scalar_lea.vmem [#allocation2], 624
    %v775 = vld [vmem:[%s774] ss:$2 sm:$0xff]
    %s776 = scalar_lea.vmem [#allocation2], 672
    %v777 = vld [vmem:[%s776] ss:$2 sm:$0xff]
    %s778 = scalar_lea.vmem [#allocation2], 720
    %v779 = vld [vmem:[%s778] ss:$2 sm:$0xff]
    %s780 = scalar_lea.vmem [#allocation2], 768
    %v781 = vld [vmem:[%s780] ss:$2 sm:$0xff]
    %v782 = vld [vmem:[%s3] sm:$0x1]
    %v784 = vperm.slane %v782, 0
    %v786 = vmul.f32 %v751, %v784
    %v787 = vmul.f32 %v753, %v784
    %v788 = vmul.f32 %v755, %v784
    %v789 = vmul.f32 %v757, %v784
    %v790 = vmul.f32 %v759, %v784
    %v791 = vmul.f32 %v761, %v784
    %v792 = vmul.f32 %v763, %v784
    %v793 = vmul.f32 %v765, %v784
    %v794 = vmul.f32 %v767, %v784
    %v795 = vmul.f32 %v769, %v784
    %v796 = vmul.f32 %v771, %v784
    %v797 = vmul.f32 %v773, %v784
    %v798 = vmul.f32 %v775, %v784
    %v799 = vmul.f32 %v777, %v784
    %v800 = vmul.f32 %v779, %v784
    %v801 = vmul.f32 %v781, %v784
    %v802 = vadd.f32 %v786, 0.0
    %v803 = vadd.f32 %v787, 0.0
    %v804 = vadd.f32 %v788, 0.0
    %v805 = vadd.f32 %v789, 0.0
    %v806 = vadd.f32 %v790, 0.0
    %v807 = vadd.f32 %v791, 0.0
    %v808 = vadd.f32 %v792, 0.0
    %v809 = vadd.f32 %v793, 0.0
    %v810 = vadd.f32 %v794, 0.0
    %v811 = vadd.f32 %v795, 0.0
    %v812 = vadd.f32 %v796, 0.0
    %v813 = vadd.f32 %v797, 0.0
    %v814 = vadd.f32 %v798, 0.0
    %v815 = vadd.f32 %v799, 0.0
    %v816 = vadd.f32 %v800, 0.0
    %v817 = vadd.f32 %v801, 0.0
    %s818 = scalar_lea.vmem [#allocation2], 1
    %v819 = vld [vmem:[%s818] ss:$2 sm:$0xff]
    %s820 = scalar_lea.vmem [#allocation2], 49
    %v821 = vld [vmem:[%s820] ss:$2 sm:$0xff]
    %s822 = scalar_lea.vmem [#allocation2], 97
    %v823 = vld [vmem:[%s822] ss:$2 sm:$0xff]
    %s824 = scalar_lea.vmem [#allocation2], 145
    %v825 = vld [vmem:[%s824] ss:$2 sm:$0xff]
    %s826 = scalar_lea.vmem [#allocation2], 193
    %v827 = vld [vmem:[%s826] ss:$2 sm:$0xff]
    %s828 = scalar_lea.vmem [#allocation2], 241
    %v829 = vld [vmem:[%s828] ss:$2 sm:$0xff]
    %s830 = scalar_lea.vmem [#allocation2], 289
    %v831 = vld [vmem:[%s830] ss:$2 sm:$0xff]
    %s832 = scalar_lea.vmem [#allocation2], 337
    %v833 = vld [vmem:[%s832] ss:$2 sm:$0xff]
    %s834 = scalar_lea.vmem [#allocation2], 433
    %v835 = vld [vmem:[%s834] ss:$2 sm:$0xff]
    %s836 = scalar_lea.vmem [#allocation2], 481
    %v837 = vld [vmem:[%s836] ss:$2 sm:$0xff]
    %s838 = scalar_lea.vmem [#allocation2], 529
    %v839 = vld [vmem:[%s838] ss:$2 sm:$0xff]
    %s840 = scalar_lea.vmem [#allocation2], 577
    %v841 = vld [vmem:[%s840] ss:$2 sm:$0xff]
    %s842 = scalar_lea.vmem [#allocation2], 625
    %v843 = vld [vmem:[%s842] ss:$2 sm:$0xff]
    %s844 = scalar_lea.vmem [#allocation2], 673
    %v845 = vld [vmem:[%s844] ss:$2 sm:$0xff]
    %s846 = scalar_lea.vmem [#allocation2], 721
    %v847 = vld [vmem:[%s846] ss:$2 sm:$0xff]
    %s848 = scalar_lea.vmem [#allocation2], 769
    %v849 = vld [vmem:[%s848] ss:$2 sm:$0xff]
    %s850 = scalar_lea.vmem %s3, 1
    %v851 = vld [vmem:[%s850] sm:$0x1]
    %v853 = vperm.slane %v851, 0
    %v855 = vmul.f32 %v819, %v853
    %v856 = vmul.f32 %v821, %v853
    %v857 = vmul.f32 %v823, %v853
    %v858 = vmul.f32 %v825, %v853
    %v859 = vmul.f32 %v827, %v853
    %v860 = vmul.f32 %v829, %v853
    %v861 = vmul.f32 %v831, %v853
    %v862 = vmul.f32 %v833, %v853
    %v863 = vmul.f32 %v835, %v853
    %v864 = vmul.f32 %v837, %v853
    %v865 = vmul.f32 %v839, %v853
    %v866 = vmul.f32 %v841, %v853
    %v867 = vmul.f32 %v843, %v853
    %v868 = vmul.f32 %v845, %v853
    %v869 = vmul.f32 %v847, %v853
    %v870 = vmul.f32 %v849, %v853
    %v871 = vadd.f32 %v802, %v855
    %v872 = vadd.f32 %v803, %v856
    %v873 = vadd.f32 %v804, %v857
    %v874 = vadd.f32 %v805, %v858
    %v875 = vadd.f32 %v806, %v859
    %v876 = vadd.f32 %v807, %v860
    %v877 = vadd.f32 %v808, %v861
    %v878 = vadd.f32 %v809, %v862
    %v879 = vadd.f32 %v810, %v863
    %v880 = vadd.f32 %v811, %v864
    %v881 = vadd.f32 %v812, %v865
    %v882 = vadd.f32 %v813, %v866
    %v883 = vadd.f32 %v814, %v867
    %v884 = vadd.f32 %v815, %v868
    %v885 = vadd.f32 %v816, %v869
    %v886 = vadd.f32 %v817, %v870
    %s887 = scalar_lea.vmem [#allocation2], 2
    %v888 = vld [vmem:[%s887] ss:$2 sm:$0xff]
    %s889 = scalar_lea.vmem [#allocation2], 50
    %v890 = vld [vmem:[%s889] ss:$2 sm:$0xff]
    %s891 = scalar_lea.vmem [#allocation2], 98
    %v892 = vld [vmem:[%s891] ss:$2 sm:$0xff]
    %s893 = scalar_lea.vmem [#allocation2], 146
    %v894 = vld [vmem:[%s893] ss:$2 sm:$0xff]
    %s895 = scalar_lea.vmem [#allocation2], 194
    %v896 = vld [vmem:[%s895] ss:$2 sm:$0xff]
    %s897 = scalar_lea.vmem [#allocation2], 242
    %v898 = vld [vmem:[%s897] ss:$2 sm:$0xff]
    %s899 = scalar_lea.vmem [#allocation2], 290
    %v900 = vld [vmem:[%s899] ss:$2 sm:$0xff]
    %s901 = scalar_lea.vmem [#allocation2], 338
    %v902 = vld [vmem:[%s901] ss:$2 sm:$0xff]
    %s903 = scalar_lea.vmem [#allocation2], 434
    %v904 = vld [vmem:[%s903] ss:$2 sm:$0xff]
    %s905 = scalar_lea.vmem [#allocation2], 482
    %v906 = vld [vmem:[%s905] ss:$2 sm:$0xff]
    %s907 = scalar_lea.vmem [#allocation2], 530
    %v908 = vld [vmem:[%s907] ss:$2 sm:$0xff]
    %s909 = scalar_lea.vmem [#allocation2], 578
    %v910 = vld [vmem:[%s909] ss:$2 sm:$0xff]
    %s911 = scalar_lea.vmem [#allocation2], 626
    %v912 = vld [vmem:[%s911] ss:$2 sm:$0xff]
    %s913 = scalar_lea.vmem [#allocation2], 674
    %v914 = vld [vmem:[%s913] ss:$2 sm:$0xff]
    %s915 = scalar_lea.vmem [#allocation2], 722
    %v916 = vld [vmem:[%s915] ss:$2 sm:$0xff]
    %s917 = scalar_lea.vmem [#allocation2], 770
    %v918 = vld [vmem:[%s917] ss:$2 sm:$0xff]
    %s919 = scalar_lea.vmem %s3, 2
    %v920 = vld [vmem:[%s919] sm:$0x1]
    %v922 = vperm.slane %v920, 0
    %v924 = vmul.f32 %v888, %v922
    %v925 = vmul.f32 %v890, %v922
    %v926 = vmul.f32 %v892, %v922
    %v927 = vmul.f32 %v894, %v922
    %v928 = vmul.f32 %v896, %v922
    %v929 = vmul.f32 %v898, %v922
    %v930 = vmul.f32 %v900, %v922
    %v931 = vmul.f32 %v902, %v922
    %v932 = vmul.f32 %v904, %v922
    %v933 = vmul.f32 %v906, %v922
    %v934 = vmul.f32 %v908, %v922
    %v935 = vmul.f32 %v910, %v922
    %v936 = vmul.f32 %v912, %v922
    %v937 = vmul.f32 %v914, %v922
    %v938 = vmul.f32 %v916, %v922
    %v939 = vmul.f32 %v918, %v922
    %v940 = vadd.f32 %v871, %v924
    %v941 = vadd.f32 %v872, %v925
    %v942 = vadd.f32 %v873, %v926
    %v943 = vadd.f32 %v874, %v927
    %v944 = vadd.f32 %v875, %v928
    %v945 = vadd.f32 %v876, %v929
    %v946 = vadd.f32 %v877, %v930
    %v947 = vadd.f32 %v878, %v931
    %v948 = vadd.f32 %v879, %v932
    %v949 = vadd.f32 %v880, %v933
    %v950 = vadd.f32 %v881, %v934
    %v951 = vadd.f32 %v882, %v935
    %v952 = vadd.f32 %v883, %v936
    %v953 = vadd.f32 %v884, %v937
    %v954 = vadd.f32 %v885, %v938
    %v955 = vadd.f32 %v886, %v939
    %v956 = vld [vmem:[%s686] ss:$2 sm:$0xff]
    %s957 = scalar_lea.vmem %s686, 48 [#allocation2]
    %v958 = vld [vmem:[%s957] ss:$2 sm:$0xff]
    %s959 = scalar_lea.vmem %s686, 96 [#allocation2]
    %v960 = vld [vmem:[%s959] ss:$2 sm:$0xff]
    %s961 = scalar_lea.vmem %s686, 144 [#allocation2]
    %v962 = vld [vmem:[%s961] ss:$2 sm:$0xff]
    %s963 = scalar_lea.vmem %s686, 192 [#allocation2]
    %v964 = vld [vmem:[%s963] ss:$2 sm:$0xff]
    %s965 = scalar_lea.vmem %s686, 240 [#allocation2]
    %v966 = vld [vmem:[%s965] ss:$2 sm:$0xff]
    %s967 = scalar_lea.vmem %s686, 288 [#allocation2]
    %v968 = vld [vmem:[%s967] ss:$2 sm:$0xff]
    %s969 = scalar_lea.vmem %s686, 336 [#allocation2]
    %v970 = vld [vmem:[%s969] ss:$2 sm:$0xff]
    %s971 = scalar_lea.vmem %s686, 432 [#allocation2]
    %v972 = vld [vmem:[%s971] ss:$2 sm:$0xff]
    %s973 = scalar_lea.vmem %s686, 480 [#allocation2]
    %v974 = vld [vmem:[%s973] ss:$2 sm:$0xff]
    %s975 = scalar_lea.vmem %s686, 528 [#allocation2]
    %v976 = vld [vmem:[%s975] ss:$2 sm:$0xff]
    %s977 = scalar_lea.vmem %s686, 576 [#allocation2]
    %v978 = vld [vmem:[%s977] ss:$2 sm:$0xff]
    %s979 = scalar_lea.vmem %s686, 624 [#allocation2]
    %v980 = vld [vmem:[%s979] ss:$2 sm:$0xff]
    %s981 = scalar_lea.vmem %s686, 672 [#allocation2]
    %v982 = vld [vmem:[%s981] ss:$2 sm:$0xff]
    %s983 = scalar_lea.vmem %s686, 720 [#allocation2]
    %v984 = vld [vmem:[%s983] ss:$2 sm:$0xff]
    %s985 = scalar_lea.vmem %s686, 768 [#allocation2]
    %v986 = vld [vmem:[%s985] ss:$2 sm:$0xff]
    %s987 = scalar_lea.vmem %s3, 3
    %v988 = vld [vmem:[%s987] sm:$0x1]
    %v990 = vperm.slane %v988, 0
    %v992 = vmul.f32 %v956, %v990
    %v993 = vmul.f32 %v958, %v990
    %v994 = vmul.f32 %v960, %v990
    %v995 = vmul.f32 %v962, %v990
    %v996 = vmul.f32 %v964, %v990
    %v997 = vmul.f32 %v966, %v990
    %v998 = vmul.f32 %v968, %v990
    %v999 = vmul.f32 %v970, %v990
    %v1000 = vmul.f32 %v972, %v990
    %v1001 = vmul.f32 %v974, %v990
    %v1002 = vmul.f32 %v976, %v990
    %v1003 = vmul.f32 %v978, %v990
    %v1004 = vmul.f32 %v980, %v990
    %v1005 = vmul.f32 %v982, %v990
    %v1006 = vmul.f32 %v984, %v990
    %v1007 = vmul.f32 %v986, %v990
    %v1008 = vadd.f32 %v940, %v992
    %v1009 = vadd.f32 %v941, %v993
    %v1010 = vadd.f32 %v942, %v994
    %v1011 = vadd.f32 %v943, %v995
    %v1012 = vadd.f32 %v944, %v996
    %v1013 = vadd.f32 %v945, %v997
    %v1014 = vadd.f32 %v946, %v998
    %v1015 = vadd.f32 %v947, %v999
    %v1016 = vadd.f32 %v948, %v1000
    %v1017 = vadd.f32 %v949, %v1001
    %v1018 = vadd.f32 %v950, %v1002
    %v1019 = vadd.f32 %v951, %v1003
    %v1020 = vadd.f32 %v952, %v1004
    %v1021 = vadd.f32 %v953, %v1005
    %v1022 = vadd.f32 %v954, %v1006
    %v1023 = vadd.f32 %v955, %v1007
    %s1024 = scalar_lea.vmem %s686, 1 [#allocation2]
    %v1025 = vld [vmem:[%s1024] ss:$2 sm:$0xff]
    %s1026 = scalar_lea.vmem %s686, 49 [#allocation2]
    %v1027 = vld [vmem:[%s1026] ss:$2 sm:$0xff]
    %s1028 = scalar_lea.vmem %s686, 97 [#allocation2]
    %v1029 = vld [vmem:[%s1028] ss:$2 sm:$0xff]
    %s1030 = scalar_lea.vmem %s686, 145 [#allocation2]
    %v1031 = vld [vmem:[%s1030] ss:$2 sm:$0xff]
    %s1032 = scalar_lea.vmem %s686, 193 [#allocation2]
    %v1033 = vld [vmem:[%s1032] ss:$2 sm:$0xff]
    %s1034 = scalar_lea.vmem %s686, 241 [#allocation2]
    %v1035 = vld [vmem:[%s1034] ss:$2 sm:$0xff]
    %s1036 = scalar_lea.vmem %s686, 289 [#allocation2]
    %v1037 = vld [vmem:[%s1036] ss:$2 sm:$0xff]
    %s1038 = scalar_lea.vmem %s686, 337 [#allocation2]
    %v1039 = vld [vmem:[%s1038] ss:$2 sm:$0xff]
    %s1040 = scalar_lea.vmem %s686, 433 [#allocation2]
    %v1041 = vld [vmem:[%s1040] ss:$2 sm:$0xff]
    %s1042 = scalar_lea.vmem %s686, 481 [#allocation2]
    %v1043 = vld [vmem:[%s1042] ss:$2 sm:$0xff]
    %s1044 = scalar_lea.vmem %s686, 529 [#allocation2]
    %v1045 = vld [vmem:[%s1044] ss:$2 sm:$0xff]
    %s1046 = scalar_lea.vmem %s686, 577 [#allocation2]
    %v1047 = vld [vmem:[%s1046] ss:$2 sm:$0xff]
    %s1048 = scalar_lea.vmem %s686, 625 [#allocation2]
    %v1049 = vld [vmem:[%s1048] ss:$2 sm:$0xff]
    %s1050 = scalar_lea.vmem %s686, 673 [#allocation2]
    %v1051 = vld [vmem:[%s1050] ss:$2 sm:$0xff]
    %s1052 = scalar_lea.vmem %s686, 721 [#allocation2]
    %v1053 = vld [vmem:[%s1052] ss:$2 sm:$0xff]
    %s1054 = scalar_lea.vmem %s686, 769 [#allocation2]
    %v1055 = vld [vmem:[%s1054] ss:$2 sm:$0xff]
    %s1056 = scalar_lea.vmem %s3, 4
    %v1057 = vld [vmem:[%s1056] sm:$0x1]
    %v1059 = vperm.slane %v1057, 0
    %v1061 = vmul.f32 %v1025, %v1059
    %v1062 = vmul.f32 %v1027, %v1059
    %v1063 = vmul.f32 %v1029, %v1059
    %v1064 = vmul.f32 %v1031, %v1059
    %v1065 = vmul.f32 %v1033, %v1059
    %v1066 = vmul.f32 %v1035, %v1059
    %v1067 = vmul.f32 %v1037, %v1059
    %v1068 = vmul.f32 %v1039, %v1059
    %v1069 = vmul.f32 %v1041, %v1059
    %v1070 = vmul.f32 %v1043, %v1059
    %v1071 = vmul.f32 %v1045, %v1059
    %v1072 = vmul.f32 %v1047, %v1059
    %v1073 = vmul.f32 %v1049, %v1059
    %v1074 = vmul.f32 %v1051, %v1059
    %v1075 = vmul.f32 %v1053, %v1059
    %v1076 = vmul.f32 %v1055, %v1059
    %v1077 = vadd.f32 %v1008, %v1061
    %v1078 = vadd.f32 %v1009, %v1062
    %v1079 = vadd.f32 %v1010, %v1063
    %v1080 = vadd.f32 %v1011, %v1064
    %v1081 = vadd.f32 %v1012, %v1065
    %v1082 = vadd.f32 %v1013, %v1066
    %v1083 = vadd.f32 %v1014, %v1067
    %v1084 = vadd.f32 %v1015, %v1068
    %v1085 = vadd.f32 %v1016, %v1069
    %v1086 = vadd.f32 %v1017, %v1070
    %v1087 = vadd.f32 %v1018, %v1071
    %v1088 = vadd.f32 %v1019, %v1072
    %v1089 = vadd.f32 %v1020, %v1073
    %v1090 = vadd.f32 %v1021, %v1074
    %v1091 = vadd.f32 %v1022, %v1075
    %v1092 = vadd.f32 %v1023, %v1076
    %s1093 = scalar_lea.vmem %s686, 2 [#allocation2]
    %v1094 = vld [vmem:[%s1093] ss:$2 sm:$0xff]
    %s1095 = scalar_lea.vmem %s686, 50 [#allocation2]
    %v1096 = vld [vmem:[%s1095] ss:$2 sm:$0xff]
    %s1097 = scalar_lea.vmem %s686, 98 [#allocation2]
    %v1098 = vld [vmem:[%s1097] ss:$2 sm:$0xff]
    %s1099 = scalar_lea.vmem %s686, 146 [#allocation2]
    %v1100 = vld [vmem:[%s1099] ss:$2 sm:$0xff]
    %s1101 = scalar_lea.vmem %s686, 194 [#allocation2]
    %v1102 = vld [vmem:[%s1101] ss:$2 sm:$0xff]
    %s1103 = scalar_lea.vmem %s686, 242 [#allocation2]
    %v1104 = vld [vmem:[%s1103] ss:$2 sm:$0xff]
    %s1105 = scalar_lea.vmem %s686, 290 [#allocation2]
    %v1106 = vld [vmem:[%s1105] ss:$2 sm:$0xff]
    %s1107 = scalar_lea.vmem %s686, 338 [#allocation2]
    %v1108 = vld [vmem:[%s1107] ss:$2 sm:$0xff]
    %s1109 = scalar_lea.vmem %s686, 434 [#allocation2]
    %v1110 = vld [vmem:[%s1109] ss:$2 sm:$0xff]
    %s1111 = scalar_lea.vmem %s686, 482 [#allocation2]
    %v1112 = vld [vmem:[%s1111] ss:$2 sm:$0xff]
    %s1113 = scalar_lea.vmem %s686, 530 [#allocation2]
    %v1114 = vld [vmem:[%s1113] ss:$2 sm:$0xff]
    %s1115 = scalar_lea.vmem %s686, 578 [#allocation2]
    %v1116 = vld [vmem:[%s1115] ss:$2 sm:$0xff]
    %s1117 = scalar_lea.vmem %s686, 626 [#allocation2]
    %v1118 = vld [vmem:[%s1117] ss:$2 sm:$0xff]
    %s1119 = scalar_lea.vmem %s686, 674 [#allocation2]
    %v1120 = vld [vmem:[%s1119] ss:$2 sm:$0xff]
    %s1121 = scalar_lea.vmem %s686, 722 [#allocation2]
    %v1122 = vld [vmem:[%s1121] ss:$2 sm:$0xff]
    %s1123 = scalar_lea.vmem %s686, 770 [#allocation2]
    %v1124 = vld [vmem:[%s1123] ss:$2 sm:$0xff]
    %s1125 = scalar_lea.vmem %s3, 5
    %v1126 = vld [vmem:[%s1125] sm:$0x1]
    %v1128 = vperm.slane %v1126, 0
    %v1130 = vmul.f32 %v1094, %v1128
    %v1131 = vmul.f32 %v1096, %v1128
    %v1132 = vmul.f32 %v1098, %v1128
    %v1133 = vmul.f32 %v1100, %v1128
    %v1134 = vmul.f32 %v1102, %v1128
    %v1135 = vmul.f32 %v1104, %v1128
    %v1136 = vmul.f32 %v1106, %v1128
    %v1137 = vmul.f32 %v1108, %v1128
    %v1138 = vmul.f32 %v1110, %v1128
    %v1139 = vmul.f32 %v1112, %v1128
    %v1140 = vmul.f32 %v1114, %v1128
    %v1141 = vmul.f32 %v1116, %v1128
    %v1142 = vmul.f32 %v1118, %v1128
    %v1143 = vmul.f32 %v1120, %v1128
    %v1144 = vmul.f32 %v1122, %v1128
    %v1145 = vmul.f32 %v1124, %v1128
    %v1146 = vadd.f32 %v1077, %v1130
    %v1147 = vadd.f32 %v1078, %v1131
    %v1148 = vadd.f32 %v1079, %v1132
    %v1149 = vadd.f32 %v1080, %v1133
    %v1150 = vadd.f32 %v1081, %v1134
    %v1151 = vadd.f32 %v1082, %v1135
    %v1152 = vadd.f32 %v1083, %v1136
    %v1153 = vadd.f32 %v1084, %v1137
    %v1154 = vadd.f32 %v1085, %v1138
    %v1155 = vadd.f32 %v1086, %v1139
    %v1156 = vadd.f32 %v1087, %v1140
    %v1157 = vadd.f32 %v1088, %v1141
    %v1158 = vadd.f32 %v1089, %v1142
    %v1159 = vadd.f32 %v1090, %v1143
    %v1160 = vadd.f32 %v1091, %v1144
    %v1161 = vadd.f32 %v1092, %v1145
    %s1162 = scalar_lea.vmem [#allocation2], 48
    %v1163 = vld [vmem:[%s1162] ss:$2 sm:$0xff]
    %s1164 = scalar_lea.vmem %s1162, 48 [#allocation2]
    %v1165 = vld [vmem:[%s1164] ss:$2 sm:$0xff]
    %s1166 = scalar_lea.vmem %s1162, 96 [#allocation2]
    %v1167 = vld [vmem:[%s1166] ss:$2 sm:$0xff]
    %s1168 = scalar_lea.vmem %s1162, 144 [#allocation2]
    %v1169 = vld [vmem:[%s1168] ss:$2 sm:$0xff]
    %s1170 = scalar_lea.vmem %s1162, 192 [#allocation2]
    %v1171 = vld [vmem:[%s1170] ss:$2 sm:$0xff]
    %s1172 = scalar_lea.vmem %s1162, 240 [#allocation2]
    %v1173 = vld [vmem:[%s1172] ss:$2 sm:$0xff]
    %s1174 = scalar_lea.vmem %s1162, 288 [#allocation2]
    %v1175 = vld [vmem:[%s1174] ss:$2 sm:$0xff]
    %s1176 = scalar_lea.vmem %s1162, 336 [#allocation2]
    %v1177 = vld [vmem:[%s1176] ss:$2 sm:$0xff]
    %s1178 = scalar_lea.vmem %s1162, 432 [#allocation2]
    %v1179 = vld [vmem:[%s1178] ss:$2 sm:$0xff]
    %s1180 = scalar_lea.vmem %s1162, 480 [#allocation2]
    %v1181 = vld [vmem:[%s1180] ss:$2 sm:$0xff]
    %s1182 = scalar_lea.vmem %s1162, 528 [#allocation2]
    %v1183 = vld [vmem:[%s1182] ss:$2 sm:$0xff]
    %s1184 = scalar_lea.vmem %s1162, 576 [#allocation2]
    %v1185 = vld [vmem:[%s1184] ss:$2 sm:$0xff]
    %s1186 = scalar_lea.vmem %s1162, 624 [#allocation2]
    %v1187 = vld [vmem:[%s1186] ss:$2 sm:$0xff]
    %s1188 = scalar_lea.vmem %s1162, 672 [#allocation2]
    %v1189 = vld [vmem:[%s1188] ss:$2 sm:$0xff]
    %s1190 = scalar_lea.vmem %s1162, 720 [#allocation2]
    %v1191 = vld [vmem:[%s1190] ss:$2 sm:$0xff]
    %s1192 = scalar_lea.vmem %s1162, 768 [#allocation2]
    %v1193 = vld [vmem:[%s1192] ss:$2 sm:$0xff]
    %s1194 = scalar_lea.vmem %s3, 6
    %v1195 = vld [vmem:[%s1194] sm:$0x1]
    %v1197 = vperm.slane %v1195, 0
    %v1199 = vmul.f32 %v1163, %v1197
    %v1200 = vmul.f32 %v1165, %v1197
    %v1201 = vmul.f32 %v1167, %v1197
    %v1202 = vmul.f32 %v1169, %v1197
    %v1203 = vmul.f32 %v1171, %v1197
    %v1204 = vmul.f32 %v1173, %v1197
    %v1205 = vmul.f32 %v1175, %v1197
    %v1206 = vmul.f32 %v1177, %v1197
    %v1207 = vmul.f32 %v1179, %v1197
    %v1208 = vmul.f32 %v1181, %v1197
    %v1209 = vmul.f32 %v1183, %v1197
    %v1210 = vmul.f32 %v1185, %v1197
    %v1211 = vmul.f32 %v1187, %v1197
    %v1212 = vmul.f32 %v1189, %v1197
    %v1213 = vmul.f32 %v1191, %v1197
    %v1214 = vmul.f32 %v1193, %v1197
    %v1215 = vadd.f32 %v1146, %v1199
    %v1216 = vadd.f32 %v1147, %v1200
    %v1217 = vadd.f32 %v1148, %v1201
    %v1218 = vadd.f32 %v1149, %v1202
    %v1219 = vadd.f32 %v1150, %v1203
    %v1220 = vadd.f32 %v1151, %v1204
    %v1221 = vadd.f32 %v1152, %v1205
    %v1222 = vadd.f32 %v1153, %v1206
    %v1223 = vadd.f32 %v1154, %v1207
    %v1224 = vadd.f32 %v1155, %v1208
    %v1225 = vadd.f32 %v1156, %v1209
    %v1226 = vadd.f32 %v1157, %v1210
    %v1227 = vadd.f32 %v1158, %v1211
    %v1228 = vadd.f32 %v1159, %v1212
    %v1229 = vadd.f32 %v1160, %v1213
    %v1230 = vadd.f32 %v1161, %v1214
    %s1231 = scalar_lea.vmem %s1162, 1 [#allocation2]
    %v1232 = vld [vmem:[%s1231] ss:$2 sm:$0xff]
    %s1233 = scalar_lea.vmem %s1162, 49 [#allocation2]
    %v1234 = vld [vmem:[%s1233] ss:$2 sm:$0xff]
    %s1235 = scalar_lea.vmem %s1162, 97 [#allocation2]
    %v1236 = vld [vmem:[%s1235] ss:$2 sm:$0xff]
    %s1237 = scalar_lea.vmem %s1162, 145 [#allocation2]
    %v1238 = vld [vmem:[%s1237] ss:$2 sm:$0xff]
    %s1239 = scalar_lea.vmem %s1162, 193 [#allocation2]
    %v1240 = vld [vmem:[%s1239] ss:$2 sm:$0xff]
    %s1241 = scalar_lea.vmem %s1162, 241 [#allocation2]
    %v1242 = vld [vmem:[%s1241] ss:$2 sm:$0xff]
    %s1243 = scalar_lea.vmem %s1162, 289 [#allocation2]
    %v1244 = vld [vmem:[%s1243] ss:$2 sm:$0xff]
    %s1245 = scalar_lea.vmem %s1162, 337 [#allocation2]
    %v1246 = vld [vmem:[%s1245] ss:$2 sm:$0xff]
    %s1247 = scalar_lea.vmem %s1162, 433 [#allocation2]
    %v1248 = vld [vmem:[%s1247] ss:$2 sm:$0xff]
    %s1249 = scalar_lea.vmem %s1162, 481 [#allocation2]
    %v1250 = vld [vmem:[%s1249] ss:$2 sm:$0xff]
    %s1251 = scalar_lea.vmem %s1162, 529 [#allocation2]
    %v1252 = vld [vmem:[%s1251] ss:$2 sm:$0xff]
    %s1253 = scalar_lea.vmem %s1162, 577 [#allocation2]
    %v1254 = vld [vmem:[%s1253] ss:$2 sm:$0xff]
    %s1255 = scalar_lea.vmem %s1162, 625 [#allocation2]
    %v1256 = vld [vmem:[%s1255] ss:$2 sm:$0xff]
    %s1257 = scalar_lea.vmem %s1162, 673 [#allocation2]
    %v1258 = vld [vmem:[%s1257] ss:$2 sm:$0xff]
    %s1259 = scalar_lea.vmem %s1162, 721 [#allocation2]
    %v1260 = vld [vmem:[%s1259] ss:$2 sm:$0xff]
    %s1261 = scalar_lea.vmem %s1162, 769 [#allocation2]
    %v1262 = vld [vmem:[%s1261] ss:$2 sm:$0xff]
    %s1263 = scalar_lea.vmem %s3, 7
    %v1264 = vld [vmem:[%s1263] sm:$0x1]
    %v1266 = vperm.slane %v1264, 0
    %v1268 = vmul.f32 %v1232, %v1266
    %v1269 = vmul.f32 %v1234, %v1266
    %v1270 = vmul.f32 %v1236, %v1266
    %v1271 = vmul.f32 %v1238, %v1266
    %v1272 = vmul.f32 %v1240, %v1266
    %v1273 = vmul.f32 %v1242, %v1266
    %v1274 = vmul.f32 %v1244, %v1266
    %v1275 = vmul.f32 %v1246, %v1266
    %v1276 = vmul.f32 %v1248, %v1266
    %v1277 = vmul.f32 %v1250, %v1266
    %v1278 = vmul.f32 %v1252, %v1266
    %v1279 = vmul.f32 %v1254, %v1266
    %v1280 = vmul.f32 %v1256, %v1266
    %v1281 = vmul.f32 %v1258, %v1266
    %v1282 = vmul.f32 %v1260, %v1266
    %v1283 = vmul.f32 %v1262, %v1266
    %v1284 = vadd.f32 %v1215, %v1268
    %v1285 = vadd.f32 %v1216, %v1269
    %v1286 = vadd.f32 %v1217, %v1270
    %v1287 = vadd.f32 %v1218, %v1271
    %v1288 = vadd.f32 %v1219, %v1272
    %v1289 = vadd.f32 %v1220, %v1273
    %v1290 = vadd.f32 %v1221, %v1274
    %v1291 = vadd.f32 %v1222, %v1275
    %v1292 = vadd.f32 %v1223, %v1276
    %v1293 = vadd.f32 %v1224, %v1277
    %v1294 = vadd.f32 %v1225, %v1278
    %v1295 = vadd.f32 %v1226, %v1279
    %v1296 = vadd.f32 %v1227, %v1280
    %v1297 = vadd.f32 %v1228, %v1281
    %v1298 = vadd.f32 %v1229, %v1282
    %v1299 = vadd.f32 %v1230, %v1283
    %s1300 = scalar_lea.vmem %s1162, 2 [#allocation2]
    %v1301 = vld [vmem:[%s1300] ss:$2 sm:$0xff]
    %s1302 = scalar_lea.vmem %s1162, 50 [#allocation2]
    %v1303 = vld [vmem:[%s1302] ss:$2 sm:$0xff]
    %s1304 = scalar_lea.vmem %s1162, 98 [#allocation2]
    %v1305 = vld [vmem:[%s1304] ss:$2 sm:$0xff]
    %s1306 = scalar_lea.vmem %s1162, 146 [#allocation2]
    %v1307 = vld [vmem:[%s1306] ss:$2 sm:$0xff]
    %s1308 = scalar_lea.vmem %s1162, 194 [#allocation2]
    %v1309 = vld [vmem:[%s1308] ss:$2 sm:$0xff]
    %s1310 = scalar_lea.vmem %s1162, 242 [#allocation2]
    %v1311 = vld [vmem:[%s1310] ss:$2 sm:$0xff]
    %s1312 = scalar_lea.vmem %s1162, 290 [#allocation2]
    %v1313 = vld [vmem:[%s1312] ss:$2 sm:$0xff]
    %s1314 = scalar_lea.vmem %s1162, 338 [#allocation2]
    %v1315 = vld [vmem:[%s1314] ss:$2 sm:$0xff]
    %s1316 = scalar_lea.vmem %s1162, 434 [#allocation2]
    %v1317 = vld [vmem:[%s1316] ss:$2 sm:$0xff]
    %s1318 = scalar_lea.vmem %s1162, 482 [#allocation2]
    %v1319 = vld [vmem:[%s1318] ss:$2 sm:$0xff]
    %s1320 = scalar_lea.vmem %s1162, 530 [#allocation2]
    %v1321 = vld [vmem:[%s1320] ss:$2 sm:$0xff]
    %s1322 = scalar_lea.vmem %s1162, 578 [#allocation2]
    %v1323 = vld [vmem:[%s1322] ss:$2 sm:$0xff]
    %s1324 = scalar_lea.vmem %s1162, 626 [#allocation2]
    %v1325 = vld [vmem:[%s1324] ss:$2 sm:$0xff]
    %s1326 = scalar_lea.vmem %s1162, 674 [#allocation2]
    %v1327 = vld [vmem:[%s1326] ss:$2 sm:$0xff]
    %s1328 = scalar_lea.vmem %s1162, 722 [#allocation2]
    %v1329 = vld [vmem:[%s1328] ss:$2 sm:$0xff]
    %s1330 = scalar_lea.vmem %s1162, 770 [#allocation2]
    %v1331 = vld [vmem:[%s1330] ss:$2 sm:$0xff]
    %s1332 = scalar_lea.vmem %s3, 8
    %v1333 = vld [vmem:[%s1332] sm:$0x1]
    %v1335 = vperm.slane %v1333, 0
    %v1337 = vmul.f32 %v1301, %v1335
    %v1338 = vmul.f32 %v1303, %v1335
    %v1339 = vmul.f32 %v1305, %v1335
    %v1340 = vmul.f32 %v1307, %v1335
    %v1341 = vmul.f32 %v1309, %v1335
    %v1342 = vmul.f32 %v1311, %v1335
    %v1343 = vmul.f32 %v1313, %v1335
    %v1344 = vmul.f32 %v1315, %v1335
    %v1345 = vmul.f32 %v1317, %v1335
    %v1346 = vmul.f32 %v1319, %v1335
    %v1347 = vmul.f32 %v1321, %v1335
    %v1348 = vmul.f32 %v1323, %v1335
    %v1349 = vmul.f32 %v1325, %v1335
    %v1350 = vmul.f32 %v1327, %v1335
    %v1351 = vmul.f32 %v1329, %v1335
    %v1352 = vmul.f32 %v1331, %v1335
    %v1353 = vadd.f32 %v1284, %v1337
    %v1354 = vadd.f32 %v1285, %v1338
    %v1355 = vadd.f32 %v1286, %v1339
    %v1356 = vadd.f32 %v1287, %v1340
    %v1357 = vadd.f32 %v1288, %v1341
    %v1358 = vadd.f32 %v1289, %v1342
    %v1359 = vadd.f32 %v1290, %v1343
    %v1360 = vadd.f32 %v1291, %v1344
    %v1361 = vadd.f32 %v1292, %v1345
    %v1362 = vadd.f32 %v1293, %v1346
    %v1363 = vadd.f32 %v1294, %v1347
    %v1364 = vadd.f32 %v1295, %v1348
    %v1365 = vadd.f32 %v1296, %v1349
    %v1366 = vadd.f32 %v1297, %v1350
    %v1367 = vadd.f32 %v1298, %v1351
    %v1368 = vadd.f32 %v1299, %v1352
    %v1369 = vld [vmem:[%s4] sm:$0x1]
    %v1371 = vperm.slane %v1369, 0
    %v1373 = vadd.f32 %v1353, %v1371
    %v1374 = vadd.f32 %v1354, %v1371
    %v1375 = vadd.f32 %v1355, %v1371
    %v1376 = vadd.f32 %v1356, %v1371
    %v1377 = vadd.f32 %v1357, %v1371
    %v1378 = vadd.f32 %v1358, %v1371
    %v1379 = vadd.f32 %v1359, %v1371
    %v1380 = vadd.f32 %v1360, %v1371
    %v1381 = vadd.f32 %v1361, %v1371
    %v1382 = vadd.f32 %v1362, %v1371
    %v1383 = vadd.f32 %v1363, %v1371
    %v1384 = vadd.f32 %v1364, %v1371
    %v1385 = vadd.f32 %v1365, %v1371
    %v1386 = vadd.f32 %v1366, %v1371
    %v1387 = vadd.f32 %v1367, %v1371
    %v1388 = vadd.f32 %v1368, %v1371
    %v1389 = vmax.f32 %v1373, 0.0
    %v1390 = vmax.f32 %v1374, 0.0
    %v1391 = vmax.f32 %v1375, 0.0
    %v1392 = vmax.f32 %v1376, 0.0
    %v1393 = vmax.f32 %v1377, 0.0
    %v1394 = vmax.f32 %v1378, 0.0
    %v1395 = vmax.f32 %v1379, 0.0
    %v1396 = vmax.f32 %v1380, 0.0
    %v1397 = vmax.f32 %v1381, 0.0
    %v1398 = vmax.f32 %v1382, 0.0
    %v1399 = vmax.f32 %v1383, 0.0
    %v1400 = vmax.f32 %v1384, 0.0
    %v1401 = vmax.f32 %v1385, 0.0
    %v1402 = vmax.f32 %v1386, 0.0
    %v1403 = vmax.f32 %v1387, 0.0
    %v1404 = vmax.f32 %v1388, 0.0
    %v1405 = vld [vmem:[%s5] sm:$0xff]
    %v1406 = vld [vmem:[%s5 + $0x8] sm:$0xff]
    %v1407 = vld [vmem:[%s5 + $0x10] sm:$0xff]
    %v1408 = vld [vmem:[%s5 + $0x18] sm:$0xff]
    %v1409 = vld [vmem:[%s5 + $0x20] sm:$0xf]
    %v1410 = vld [vmem:[%s6] sm:$0x1]
    %v1412 = vperm.slane %v1410, 0
    %v1415 = vsel %vm576, %v1389, 0
    %v1418 = vsel %vm576, %v1390, 0
    %v1421 = vsel %vm576, %v1391, 0
    %v1424 = vsel %vm576, %v1392, 0
    %v1427 = vsel %vm576, %v1393, 0
    %v1430 = vsel %vm576, %v1394, 0
    %v1433 = vsel %vm576, %v1395, 0
    %v1436 = vsel %vm576, %v1396, 0
    %v1439 = vsel %vm576, %v1397, 0
    %v1442 = vsel %vm576, %v1398, 0
    %v1445 = vsel %vm576, %v1399, 0
    %v1448 = vsel %vm576, %v1400, 0
    %v1451 = vsel %vm576, %v1401, 0
    %v1454 = vsel %vm576, %v1402, 0
    %v1457 = vsel %vm576, %v1403, 0
    %v1460 = vsel %vm576, %v1404, 0
    %v1463 = vsel %vm363, %v1409, 0
    %1465 = vmatpush.msra.mxu0 0.0
    %1466 = vmatpush.msra.mxu0 0.0
    %1467 = vmatpush.msra.mxu0 0.0
    %1468 = vmatpush.msra.mxu0 0.0
    %1469 = vmatpush.msra.mxu0 0.0
    %1470 = vmatpush.msra.mxu0 0.0
    %1471 = vmatpush.msra.mxu0 0.0
    %1472 = vmatpush.msra.mxu0 0.0
    %1473 = vmatpush.msra.mxu0 0.0
    %1474 = vmatpush.msra.mxu0 0.0
    %1475 = vmatpush.msra.mxu0 0.0
    %1476 = vmatpush.msra.mxu0 %v1463
    %1477 = vmatpush.msra.mxu0 %v1408
    %1478 = vmatpush.msra.mxu0 %v1407
    %1479 = vmatpush.msra.mxu0 %v1406
    %1480 = vmatpush.msra.mxu0 %v1405
    %1481 = vmatmul.f32.gmra.mxu0 %v1415
    %v1482 = vpop.f32.mrf.mxu0
    %v1483 = vadd.f32 %v1412, %v1482
    %1484 = vmatmul.f32.gmra.mxu0 %v1418
    %v1485 = vpop.f32.mrf.mxu0
    %v1486 = vadd.f32 %v1412, %v1485
    %1487 = vmatmul.f32.gmra.mxu0 %v1421
    %v1488 = vpop.f32.mrf.mxu0
    %v1489 = vadd.f32 %v1412, %v1488
    %1490 = vmatmul.f32.gmra.mxu0 %v1424
    %v1491 = vpop.f32.mrf.mxu0
    %v1492 = vadd.f32 %v1412, %v1491
    %1493 = vmatmul.f32.gmra.mxu0 %v1427
    %v1494 = vpop.f32.mrf.mxu0
    %v1495 = vadd.f32 %v1412, %v1494
    %1496 = vmatmul.f32.gmra.mxu0 %v1430
    %v1497 = vpop.f32.mrf.mxu0
    %v1498 = vadd.f32 %v1412, %v1497
    %1499 = vmatmul.f32.gmra.mxu0 %v1433
    %v1500 = vpop.f32.mrf.mxu0
    %v1501 = vadd.f32 %v1412, %v1500
    %1502 = vmatmul.f32.gmra.mxu0 %v1436
    %v1503 = vpop.f32.mrf.mxu0
    %v1504 = vadd.f32 %v1412, %v1503
    %1505 = vmatmul.f32.gmra.mxu0 %v1439
    %v1506 = vpop.f32.mrf.mxu0
    %v1507 = vadd.f32 %v1412, %v1506
    %1508 = vmatmul.f32.gmra.mxu0 %v1442
    %v1509 = vpop.f32.mrf.mxu0
    %v1510 = vadd.f32 %v1412, %v1509
    %1511 = vmatmul.f32.gmra.mxu0 %v1445
    %v1512 = vpop.f32.mrf.mxu0
    %v1513 = vadd.f32 %v1412, %v1512
    %1514 = vmatmul.f32.gmra.mxu0 %v1448
    %v1515 = vpop.f32.mrf.mxu0
    %v1516 = vadd.f32 %v1412, %v1515
    %1517 = vmatmul.f32.gmra.mxu0 %v1451
    %v1518 = vpop.f32.mrf.mxu0
    %v1519 = vadd.f32 %v1412, %v1518
    %1520 = vmatmul.f32.gmra.mxu0 %v1454
    %v1521 = vpop.f32.mrf.mxu0
    %v1522 = vadd.f32 %v1412, %v1521
    %1523 = vmatmul.f32.gmra.mxu0 %v1457
    %v1524 = vpop.f32.mrf.mxu0
    %v1525 = vadd.f32 %v1412, %v1524
    %1526 = vmatmul.f32.gmra.mxu0 %v1460
    %v1527 = vpop.f32.mrf.mxu0
    %v1528 = vadd.f32 %v1412, %v1527
    %1529 = vdwg.mxu0
    %v1530 = vmax.f32 %v1483, 0.0
    %v1531 = vmax.f32 %v1486, 0.0
    %v1532 = vmax.f32 %v1489, 0.0
    %v1533 = vmax.f32 %v1492, 0.0
    %v1534 = vmax.f32 %v1495, 0.0
    %v1535 = vmax.f32 %v1498, 0.0
    %v1536 = vmax.f32 %v1501, 0.0
    %v1537 = vmax.f32 %v1504, 0.0
    %v1538 = vmax.f32 %v1507, 0.0
    %v1539 = vmax.f32 %v1510, 0.0
    %v1540 = vmax.f32 %v1513, 0.0
    %v1541 = vmax.f32 %v1516, 0.0
    %v1542 = vmax.f32 %v1519, 0.0
    %v1543 = vmax.f32 %v1522, 0.0
    %v1544 = vmax.f32 %v1525, 0.0
    %v1545 = vmax.f32 %v1528, 0.0
    %vm1546 = vcmask 261120
    %v1547 = vsel %vm1546, %v1530, 0.0
    %v1548 = vsel %vm1546, %v1531, 0.0
    %v1549 = vadd.f32 %v1547, %v1548
    %v1550 = vsel %vm1546, %v1532, 0.0
    %v1551 = vadd.f32 %v1549, %v1550
    %v1552 = vsel %vm1546, %v1533, 0.0
    %v1553 = vadd.f32 %v1551, %v1552
    %v1554 = vsel %vm1546, %v1534, 0.0
    %v1555 = vadd.f32 %v1553, %v1554
    %v1556 = vsel %vm1546, %v1535, 0.0
    %v1557 = vadd.f32 %v1555, %v1556
    %v1558 = vsel %vm1546, %v1536, 0.0
    %v1559 = vadd.f32 %v1557, %v1558
    %v1560 = vsel %vm1546, %v1537, 0.0
    %v1561 = vadd.f32 %v1559, %v1560
    %v1562 = vrot.slane %v1561, 4
    %v1563 = vadd.f32 %v1561, %v1562
    %v1564 = vrot.slane %v1563, 2
    %v1565 = vadd.f32 %v1563, %v1564
    %v1566 = vrot.slane %v1565, 1
    %v1567 = vadd.f32 %v1565, %v1566
    %v1568 = vsel %vm1546, %v1538, 0.0
    %v1569 = vsel %vm1546, %v1539, 0.0
    %v1570 = vadd.f32 %v1568, %v1569
    %v1571 = vsel %vm1546, %v1540, 0.0
    %v1572 = vadd.f32 %v1570, %v1571
    %v1573 = vsel %vm1546, %v1541, 0.0
    %v1574 = vadd.f32 %v1572, %v1573
    %v1575 = vsel %vm1546, %v1542, 0.0
    %v1576 = vadd.f32 %v1574, %v1575
    %v1577 = vsel %vm1546, %v1543, 0.0
    %v1578 = vadd.f32 %v1576, %v1577
    %v1579 = vsel %vm1546, %v1544, 0.0
    %v1580 = vadd.f32 %v1578, %v1579
    %v1581 = vsel %vm1546, %v1545, 0.0
    %v1582 = vadd.f32 %v1580, %v1581
    %v1583 = vrot.slane %v1582, 4
    %v1584 = vadd.f32 %v1582, %v1583
    %v1585 = vrot.slane %v1584, 2
    %v1586 = vadd.f32 %v1584, %v1585
    %v1587 = vrot.slane %v1586, 1
    %v1588 = vadd.f32 %v1586, %v1587
    %v1589 = vrcp.pop 64.0
    %v1590 = vmul.f32 64.0, %v1589
    %v1591 = vsub.f32 1.0, %v1590
    %v1592 = vmul.f32 %v1589, %v1591
    %v1593 = vadd.f32 %v1589, %v1592
    %vm1594 = vweird.f32 %v1589
    %v1595 = vsel %vm1594, %v1589, %v1593
    %v1596 = vmul.f32 %v1567, %v1595
    %v1597 = vmul.f32 %v1588, %v1595
    %v1598 = vlaneseq
    %v1599 = vshrl.u32 %v1598, 7
    %v1600 = vadd.s32 %v1599, 8
    %v1601 = vadd.s32 %v1599, 16
    %v1602 = vadd.s32 %v1599, 24
    %v1603 = vlaneseq
    %v1604 = vand.u32 %v1603, 127
    %s1605 = sld [smem:[#allocation5]]
    %v1606 = vadd.s32 %v1604, 4294967295
    %vm1607 = vcmp.eq.s32.totalorder %v1599, %v1606
    %vm1608 = vcmp.eq.s32.totalorder %v1600, %v1606
    %vm1609 = vcmp.eq.s32.totalorder %v1601, %v1606
    %vm1610 = vcmp.eq.s32.totalorder %v1602, %v1606
    %v1611 = vsel %vm1607, 1, 0
    %v1612 = vsel %vm1608, 1, 0
    %v1613 = vsel %vm1609, 1, 0
    %v1614 = vsel %vm1610, 1, 0
    %v1615 = vcvt.s32.f32 %v1611
    %v1616 = vcvt.s32.f32 %v1612
    %v1617 = vcvt.s32.f32 %v1613
    %v1618 = vcvt.s32.f32 %v1614
    %v1619 = vstv %s1605
    %v1620 = vmul.f32 %v1619, %v1615
    %v1621 = vmul.f32 %v1619, %v1616
    %v1622 = vmul.f32 %v1619, %v1617
    %v1623 = vmul.f32 %v1619, %v1618
    %v1624 = vadd.f32 %v1620, 0.0
    %v1625 = vadd.f32 %v1621, 0.0
    %v1626 = vadd.f32 %v1622, 0.0
    %v1627 = vadd.f32 %v1623, 0.0
    %s1628 = sld [smem:[#allocation5 + $0x1]]
    %vm1629 = vcmp.eq.s32.totalorder %v1599, %v1604
    %vm1630 = vcmp.eq.s32.totalorder %v1600, %v1604
    %vm1631 = vcmp.eq.s32.totalorder %v1601, %v1604
    %vm1632 = vcmp.eq.s32.totalorder %v1602, %v1604
    %v1633 = vsel %vm1629, 1, 0
    %v1634 = vsel %vm1630, 1, 0
    %v1635 = vsel %vm1631, 1, 0
    %v1636 = vsel %vm1632, 1, 0
    %v1637 = vcvt.s32.f32 %v1633
    %v1638 = vcvt.s32.f32 %v1634
    %v1639 = vcvt.s32.f32 %v1635
    %v1640 = vcvt.s32.f32 %v1636
    %v1641 = vstv %s1628
    %v1642 = vmul.f32 %v1641, %v1637
    %v1643 = vmul.f32 %v1641, %v1638
    %v1644 = vmul.f32 %v1641, %v1639
    %v1645 = vmul.f32 %v1641, %v1640
    %v1646 = vadd.f32 %v1624, %v1642
    %v1647 = vadd.f32 %v1625, %v1643
    %v1648 = vadd.f32 %v1626, %v1644
    %v1649 = vadd.f32 %v1627, %v1645
    %s1650 = sld [smem:[#allocation5 + $0x2]]
    %v1651 = vadd.s32 %v1604, 1
    %vm1652 = vcmp.eq.s32.totalorder %v1599, %v1651
    %vm1653 = vcmp.eq.s32.totalorder %v1600, %v1651
    %vm1654 = vcmp.eq.s32.totalorder %v1601, %v1651
    %vm1655 = vcmp.eq.s32.totalorder %v1602, %v1651
    %v1656 = vsel %vm1652, 1, 0
    %v1657 = vsel %vm1653, 1, 0
    %v1658 = vsel %vm1654, 1, 0
    %v1659 = vsel %vm1655, 1, 0
    %v1660 = vcvt.s32.f32 %v1656
    %v1661 = vcvt.s32.f32 %v1657
    %v1662 = vcvt.s32.f32 %v1658
    %v1663 = vcvt.s32.f32 %v1659
    %v1664 = vstv %s1650
    %v1665 = vmul.f32 %v1664, %v1660
    %v1666 = vmul.f32 %v1664, %v1661
    %v1667 = vmul.f32 %v1664, %v1662
    %v1668 = vmul.f32 %v1664, %v1663
    %v1669 = vadd.f32 %v1646, %v1665
    %v1670 = vadd.f32 %v1647, %v1666
    %v1671 = vadd.f32 %v1648, %v1667
    %v1672 = vadd.f32 %v1649, %v1668
    %vm1675 = vcmask 1041409
    %v1676 = vsel %vm1675, %v1597, %v1596
    %v1677 = vsel %vm1546, %v1676, 0
    %1679 = vmatpush.msra.mxu0 0.0
    %1680 = vmatpush.msra.mxu0 0.0
    %1681 = vmatpush.msra.mxu0 0.0
    %1682 = vmatpush.msra.mxu0 0.0
    %1683 = vmatpush.msra.mxu0 0.0
    %1684 = vmatpush.msra.mxu0 0.0
    %1685 = vmatpush.msra.mxu0 0.0
    %1686 = vmatpush.msra.mxu0 0.0
    %1687 = vmatpush.msra.mxu0 0.0
    %1688 = vmatpush.msra.mxu0 0.0
    %1689 = vmatpush.msra.mxu0 0.0
    %1690 = vmatpush.msra.mxu0 0.0
    %1691 = vmatpush.msra.mxu0 %v1672
    %1692 = vmatpush.msra.mxu0 %v1671
    %1693 = vmatpush.msra.mxu0 %v1670
    %1694 = vmatpush.msra.mxu0 %v1669
    %1695 = vmatmul.f32.gmra.mxu0 %v1677
    %v1696 = vpop.f32.mrf.mxu0
    %v1697 = vadd.f32 0.0, %v1696
    %1698 = vdwg.mxu0
    %v1699 = vxor.u32 %v1697, 2147483648
    %v1700 = vmul.f32 %v1699, 1.442695
    %v1701 = vpow.pop %v1700
    %v1702 = vadd.f32 %v1701, 1.0
    %v1703 = vrcp.pop %v1702
    %v1704 = vmul.f32 %v1702, %v1703
    %v1705 = vsub.f32 1.0, %v1704
    %v1706 = vmul.f32 %v1703, %v1705
    %v1707 = vadd.f32 %v1703, %v1706
    %vm1708 = vweird.f32 %v1702
    %vm1709 = vweird.f32 %v1703
    %vm1710 = vmor %vm1708, %vm1709
    %v1711 = vsel %vm1710, %v1703, %v1707
    %v1712 = vand.u32 2147483647, %v1702
    %vm1713 = vcmp.eq.f32.partialorder %v1712, 8.507059e+37
    %v1714 = vand.u32 %v1702, 2147483648
    %v1715 = vor.u32 1.1754944e-38, %v1714
    %v1716 = vsel %vm1713, %v1715, %v1711
    %v1717 = vmul.f32 1.0, %v1716
    %v1719 = vrot.slane %v1717, 1
    %v1720 = vperm.slane %v1717, 0
    %v1721 = vperm.slane %v1719, 0
    %v1724 = vmul.f32 %v1530, %v1720
    %v1725 = vmul.f32 %v1531, %v1720
    %v1726 = vmul.f32 %v1532, %v1720
    %v1727 = vmul.f32 %v1533, %v1720
    %v1728 = vmul.f32 %v1534, %v1720
    %v1729 = vmul.f32 %v1535, %v1720
    %v1730 = vmul.f32 %v1536, %v1720
    %v1731 = vmul.f32 %v1537, %v1720
    %v1732 = vmul.f32 %v1538, %v1721
    %v1733 = vmul.f32 %v1539, %v1721
    %v1734 = vmul.f32 %v1540, %v1721
    %v1735 = vmul.f32 %v1541, %v1721
    %v1736 = vmul.f32 %v1542, %v1721
    %v1737 = vmul.f32 %v1543, %v1721
    %v1738 = vmul.f32 %v1544, %v1721
    %v1739 = vmul.f32 %v1545, %v1721
    %1740 = vst.msk [vmem:[#allocation11] sm:$0xff] %vm1546, %v1724
    %1741 = vst.msk [vmem:[#allocation11 + $0x8] sm:$0xff] %vm1546, %v1725
    %1742 = vst.msk [vmem:[#allocation11 + $0x10] sm:$0xff] %vm1546, %v1726
    %1743 = vst.msk [vmem:[#allocation11 + $0x18] sm:$0xff] %vm1546, %v1727
    %1744 = vst.msk [vmem:[#allocation11 + $0x20] sm:$0xff] %vm1546, %v1728
    %1745 = vst.msk [vmem:[#allocation11 + $0x28] sm:$0xff] %vm1546, %v1729
    %1746 = vst.msk [vmem:[#allocation11 + $0x30] sm:$0xff] %vm1546, %v1730
    %1747 = vst.msk [vmem:[#allocation11 + $0x38] sm:$0xff] %vm1546, %v1731
    %1748 = vst.msk [vmem:[#allocation11 + $0x40] sm:$0xff] %vm1546, %v1732
    %1749 = vst.msk [vmem:[#allocation11 + $0x48] sm:$0xff] %vm1546, %v1733
    %1750 = vst.msk [vmem:[#allocation11 + $0x50] sm:$0xff] %vm1546, %v1734
    %1751 = vst.msk [vmem:[#allocation11 + $0x58] sm:$0xff] %vm1546, %v1735
    %1752 = vst.msk [vmem:[#allocation11 + $0x60] sm:$0xff] %vm1546, %v1736
    %1753 = vst.msk [vmem:[#allocation11 + $0x68] sm:$0xff] %vm1546, %v1737
    %1754 = vst.msk [vmem:[#allocation11 + $0x70] sm:$0xff] %vm1546, %v1738
    %1755 = vst.msk [vmem:[#allocation11 + $0x78] sm:$0xff] %vm1546, %v1739
    %1756 = vst.msk [vmem:[#allocation3] sm:$0xff] %vm1546, 0.0
    %vm1757 = vcmask 254976
    %1758 = vst.msk [vmem:[#allocation3 + $0x8] sm:$0x3] %vm1757, 0.0
    %1759 = vst.msk [vmem:[#allocation3 + $0x10] sm:$0xff] %vm1546, 0.0
    %1760 = vst.msk [vmem:[#allocation3 + $0x18] sm:$0x3] %vm1757, 0.0
    %1761 = vst.msk [vmem:[#allocation3 + $0x20] sm:$0xff] %vm1546, 0.0
    %1762 = vst.msk [vmem:[#allocation3 + $0x28] sm:$0x3] %vm1757, 0.0
    %1763 = vst.msk [vmem:[#allocation3 + $0x30] sm:$0xff] %vm1546, 0.0
    %1764 = vst.msk [vmem:[#allocation3 + $0x38] sm:$0x3] %vm1757, 0.0
    %1765 = vst.msk [vmem:[#allocation3 + $0x40] sm:$0xff] %vm1546, 0.0
    %1766 = vst.msk [vmem:[#allocation3 + $0x48] sm:$0x3] %vm1757, 0.0
    %1767 = vst.msk [vmem:[#allocation3 + $0x50] sm:$0xff] %vm1546, 0.0
    %1768 = vst.msk [vmem:[#allocation3 + $0x58] sm:$0x3] %vm1757, 0.0
    %1769 = vst.msk [vmem:[#allocation3 + $0x60] sm:$0xff] %vm1546, 0.0
    %1770 = vst.msk [vmem:[#allocation3 + $0x68] sm:$0x3] %vm1757, 0.0
    %1771 = vst.msk [vmem:[#allocation3 + $0x70] sm:$0xff] %vm1546, 0.0
    %1772 = vst.msk [vmem:[#allocation3 + $0x78] sm:$0x3] %vm1757, 0.0
    %1773 = vst.msk [vmem:[#allocation3 + $0x80] sm:$0xff] %vm1546, 0.0
    %1774 = vst.msk [vmem:[#allocation3 + $0x88] sm:$0x3] %vm1757, 0.0
    %1775 = vst.msk [vmem:[#allocation3 + $0x90] sm:$0xff] %vm1546, 0.0
    %1776 = vst.msk [vmem:[#allocation3 + $0x98] sm:$0x3] %vm1757, 0.0
    %1777 = vst.msk [vmem:[#allocation3 + $0xa0] sm:$0xff] %vm1546, 0.0
    %1778 = vst.msk [vmem:[#allocation3 + $0xa8] sm:$0x3] %vm1757, 0.0
    %1779 = vst.msk [vmem:[#allocation3 + $0xb0] sm:$0xff] %vm1546, 0.0
    %1780 = vst.msk [vmem:[#allocation3 + $0xb8] sm:$0x3] %vm1757, 0.0
    %1781 = vst.msk [vmem:[#allocation3 + $0xc0] sm:$0xff] %vm1546, 0.0
    %1782 = vst.msk [vmem:[#allocation3 + $0xc8] sm:$0x3] %vm1757, 0.0
    %1783 = vst.msk [vmem:[#allocation3 + $0xd0] sm:$0xff] %vm1546, 0.0
    %1784 = vst.msk [vmem:[#allocation3 + $0xd8] sm:$0x3] %vm1757, 0.0
    %1785 = vst.msk [vmem:[#allocation3 + $0xe0] sm:$0xff] %vm1546, 0.0
    %1786 = vst.msk [vmem:[#allocation3 + $0xe8] sm:$0x3] %vm1757, 0.0
    %1787 = vst.msk [vmem:[#allocation3 + $0xf0] sm:$0xff] %vm1546, 0.0
    %1788 = vst.msk [vmem:[#allocation3 + $0xf8] sm:$0x3] %vm1757, 0.0
    %1789 = vst.msk [vmem:[#allocation3 + $0x100] sm:$0xff] %vm1546, 0.0
    %1790 = vst.msk [vmem:[#allocation3 + $0x108] sm:$0x3] %vm1757, 0.0
    %1791 = vst.msk [vmem:[#allocation3 + $0x110] sm:$0xff] %vm1546, 0.0
    %1792 = vst.msk [vmem:[#allocation3 + $0x118] sm:$0x3] %vm1757, 0.0
    %1793 = vst.msk [vmem:[#allocation3 + $0x120] sm:$0xff] %vm1546, 0.0
    %1794 = vst.msk [vmem:[#allocation3 + $0x128] sm:$0x3] %vm1757, 0.0
    %1795 = vst.msk [vmem:[#allocation3 + $0x130] sm:$0xff] %vm1546, 0.0
    %1796 = vst.msk [vmem:[#allocation3 + $0x138] sm:$0x3] %vm1757, 0.0
    %s1797 = scalar_lea.vmem [#allocation3], 16
    %1798 = vst.msk [vmem:[%s1797 + $0x1] sm:$0xff] %vm1546, %v1724
    %1799 = vst.msk [vmem:[%s1797 + $0x11] sm:$0xff] %vm1546, %v1725
    %1800 = vst.msk [vmem:[%s1797 + $0x21] sm:$0xff] %vm1546, %v1726
    %1801 = vst.msk [vmem:[%s1797 + $0x31] sm:$0xff] %vm1546, %v1727
    %1802 = vst.msk [vmem:[%s1797 + $0x41] sm:$0xff] %vm1546, %v1728
    %1803 = vst.msk [vmem:[%s1797 + $0x51] sm:$0xff] %vm1546, %v1729
    %1804 = vst.msk [vmem:[%s1797 + $0x61] sm:$0xff] %vm1546, %v1730
    %1805 = vst.msk [vmem:[%s1797 + $0x71] sm:$0xff] %vm1546, %v1731
    %1806 = vst.msk [vmem:[%s1797 + $0xa1] sm:$0xff] %vm1546, %v1732
    %1807 = vst.msk [vmem:[%s1797 + $0xb1] sm:$0xff] %vm1546, %v1733
    %1808 = vst.msk [vmem:[%s1797 + $0xc1] sm:$0xff] %vm1546, %v1734
    %1809 = vst.msk [vmem:[%s1797 + $0xd1] sm:$0xff] %vm1546, %v1735
    %1810 = vst.msk [vmem:[%s1797 + $0xe1] sm:$0xff] %vm1546, %v1736
    %1811 = vst.msk [vmem:[%s1797 + $0xf1] sm:$0xff] %vm1546, %v1737
    %1812 = vst.msk [vmem:[%s1797 + $0x101] sm:$0xff] %vm1546, %v1738
    %1813 = vst.msk [vmem:[%s1797 + $0x111] sm:$0xff] %vm1546, %v1739
    %v1814 = vld [vmem:[#allocation3] ss:$2 sm:$0xf]
    %s1815 = scalar_lea.vmem [#allocation3], 32
    %v1816 = vld [vmem:[%s1815] ss:$2 sm:$0xf]
    %s1817 = scalar_lea.vmem [#allocation3], 64
    %v1818 = vld [vmem:[%s1817] ss:$2 sm:$0xf]
    %s1819 = scalar_lea.vmem [#allocation3], 96
    %v1820 = vld [vmem:[%s1819] ss:$2 sm:$0xf]
    %s1821 = scalar_lea.vmem [#allocation3], 160
    %v1822 = vld [vmem:[%s1821] ss:$2 sm:$0xf]
    %s1823 = scalar_lea.vmem [#allocation3], 192
    %v1824 = vld [vmem:[%s1823] ss:$2 sm:$0xf]
    %s1825 = scalar_lea.vmem [#allocation3], 224
    %v1826 = vld [vmem:[%s1825] ss:$2 sm:$0xf]
    %s1827 = scalar_lea.vmem [#allocation3], 256
    %v1828 = vld [vmem:[%s1827] ss:$2 sm:$0xf]
    %v1829 = vld [vmem:[%s7] sm:$0x1]
    %v1831 = vperm.slane %v1829, 0
    %v1833 = vmul.f32 %v1814, %v1831
    %v1834 = vmul.f32 %v1816, %v1831
    %v1835 = vmul.f32 %v1818, %v1831
    %v1836 = vmul.f32 %v1820, %v1831
    %v1837 = vmul.f32 %v1822, %v1831
    %v1838 = vmul.f32 %v1824, %v1831
    %v1839 = vmul.f32 %v1826, %v1831
    %v1840 = vmul.f32 %v1828, %v1831
    %v1841 = vadd.f32 %v1833, 0.0
    %v1842 = vadd.f32 %v1834, 0.0
    %v1843 = vadd.f32 %v1835, 0.0
    %v1844 = vadd.f32 %v1836, 0.0
    %v1845 = vadd.f32 %v1837, 0.0
    %v1846 = vadd.f32 %v1838, 0.0
    %v1847 = vadd.f32 %v1839, 0.0
    %v1848 = vadd.f32 %v1840, 0.0
    %s1849 = scalar_lea.vmem [#allocation3], 1
    %v1850 = vld [vmem:[%s1849] ss:$2 sm:$0xf]
    %s1851 = scalar_lea.vmem [#allocation3], 33
    %v1852 = vld [vmem:[%s1851] ss:$2 sm:$0xf]
    %s1853 = scalar_lea.vmem [#allocation3], 65
    %v1854 = vld [vmem:[%s1853] ss:$2 sm:$0xf]
    %s1855 = scalar_lea.vmem [#allocation3], 97
    %v1856 = vld [vmem:[%s1855] ss:$2 sm:$0xf]
    %s1857 = scalar_lea.vmem [#allocation3], 161
    %v1858 = vld [vmem:[%s1857] ss:$2 sm:$0xf]
    %s1859 = scalar_lea.vmem [#allocation3], 193
    %v1860 = vld [vmem:[%s1859] ss:$2 sm:$0xf]
    %s1861 = scalar_lea.vmem [#allocation3], 225
    %v1862 = vld [vmem:[%s1861] ss:$2 sm:$0xf]
    %s1863 = scalar_lea.vmem [#allocation3], 257
    %v1864 = vld [vmem:[%s1863] ss:$2 sm:$0xf]
    %s1865 = scalar_lea.vmem %s7, 1
    %v1866 = vld [vmem:[%s1865] sm:$0x1]
    %v1868 = vperm.slane %v1866, 0
    %v1870 = vmul.f32 %v1850, %v1868
    %v1871 = vmul.f32 %v1852, %v1868
    %v1872 = vmul.f32 %v1854, %v1868
    %v1873 = vmul.f32 %v1856, %v1868
    %v1874 = vmul.f32 %v1858, %v1868
    %v1875 = vmul.f32 %v1860, %v1868
    %v1876 = vmul.f32 %v1862, %v1868
    %v1877 = vmul.f32 %v1864, %v1868
    %v1878 = vadd.f32 %v1841, %v1870
    %v1879 = vadd.f32 %v1842, %v1871
    %v1880 = vadd.f32 %v1843, %v1872
    %v1881 = vadd.f32 %v1844, %v1873
    %v1882 = vadd.f32 %v1845, %v1874
    %v1883 = vadd.f32 %v1846, %v1875
    %v1884 = vadd.f32 %v1847, %v1876
    %v1885 = vadd.f32 %v1848, %v1877
    %s1886 = scalar_lea.vmem [#allocation3], 2
    %v1887 = vld [vmem:[%s1886] ss:$2 sm:$0xf]
    %s1888 = scalar_lea.vmem [#allocation3], 34
    %v1889 = vld [vmem:[%s1888] ss:$2 sm:$0xf]
    %s1890 = scalar_lea.vmem [#allocation3], 66
    %v1891 = vld [vmem:[%s1890] ss:$2 sm:$0xf]
    %s1892 = scalar_lea.vmem [#allocation3], 98
    %v1893 = vld [vmem:[%s1892] ss:$2 sm:$0xf]
    %s1894 = scalar_lea.vmem [#allocation3], 162
    %v1895 = vld [vmem:[%s1894] ss:$2 sm:$0xf]
    %s1896 = scalar_lea.vmem [#allocation3], 194
    %v1897 = vld [vmem:[%s1896] ss:$2 sm:$0xf]
    %s1898 = scalar_lea.vmem [#allocation3], 226
    %v1899 = vld [vmem:[%s1898] ss:$2 sm:$0xf]
    %s1900 = scalar_lea.vmem [#allocation3], 258
    %v1901 = vld [vmem:[%s1900] ss:$2 sm:$0xf]
    %s1902 = scalar_lea.vmem %s7, 2
    %v1903 = vld [vmem:[%s1902] sm:$0x1]
    %v1905 = vperm.slane %v1903, 0
    %v1907 = vmul.f32 %v1887, %v1905
    %v1908 = vmul.f32 %v1889, %v1905
    %v1909 = vmul.f32 %v1891, %v1905
    %v1910 = vmul.f32 %v1893, %v1905
    %v1911 = vmul.f32 %v1895, %v1905
    %v1912 = vmul.f32 %v1897, %v1905
    %v1913 = vmul.f32 %v1899, %v1905
    %v1914 = vmul.f32 %v1901, %v1905
    %v1915 = vadd.f32 %v1878, %v1907
    %v1916 = vadd.f32 %v1879, %v1908
    %v1917 = vadd.f32 %v1880, %v1909
    %v1918 = vadd.f32 %v1881, %v1910
    %v1919 = vadd.f32 %v1882, %v1911
    %v1920 = vadd.f32 %v1883, %v1912
    %v1921 = vadd.f32 %v1884, %v1913
    %v1922 = vadd.f32 %v1885, %v1914
    %v1923 = vld [vmem:[%s1797] ss:$2 sm:$0xf]
    %s1924 = scalar_lea.vmem %s1797, 32 [#allocation3]
    %v1925 = vld [vmem:[%s1924] ss:$2 sm:$0xf]
    %s1926 = scalar_lea.vmem %s1797, 64 [#allocation3]
    %v1927 = vld [vmem:[%s1926] ss:$2 sm:$0xf]
    %s1928 = scalar_lea.vmem %s1797, 96 [#allocation3]
    %v1929 = vld [vmem:[%s1928] ss:$2 sm:$0xf]
    %s1930 = scalar_lea.vmem %s1797, 160 [#allocation3]
    %v1931 = vld [vmem:[%s1930] ss:$2 sm:$0xf]
    %s1932 = scalar_lea.vmem %s1797, 192 [#allocation3]
    %v1933 = vld [vmem:[%s1932] ss:$2 sm:$0xf]
    %s1934 = scalar_lea.vmem %s1797, 224 [#allocation3]
    %v1935 = vld [vmem:[%s1934] ss:$2 sm:$0xf]
    %s1936 = scalar_lea.vmem %s1797, 256 [#allocation3]
    %v1937 = vld [vmem:[%s1936] ss:$2 sm:$0xf]
    %s1938 = scalar_lea.vmem %s7, 3
    %v1939 = vld [vmem:[%s1938] sm:$0x1]
    %v1941 = vperm.slane %v1939, 0
    %v1943 = vmul.f32 %v1923, %v1941
    %v1944 = vmul.f32 %v1925, %v1941
    %v1945 = vmul.f32 %v1927, %v1941
    %v1946 = vmul.f32 %v1929, %v1941
    %v1947 = vmul.f32 %v1931, %v1941
    %v1948 = vmul.f32 %v1933, %v1941
    %v1949 = vmul.f32 %v1935, %v1941
    %v1950 = vmul.f32 %v1937, %v1941
    %v1951 = vadd.f32 %v1915, %v1943
    %v1952 = vadd.f32 %v1916, %v1944
    %v1953 = vadd.f32 %v1917, %v1945
    %v1954 = vadd.f32 %v1918, %v1946
    %v1955 = vadd.f32 %v1919, %v1947
    %v1956 = vadd.f32 %v1920, %v1948
    %v1957 = vadd.f32 %v1921, %v1949
    %v1958 = vadd.f32 %v1922, %v1950
    %s1959 = scalar_lea.vmem %s1797, 1 [#allocation3]
    %v1960 = vld [vmem:[%s1959] ss:$2 sm:$0xf]
    %s1961 = scalar_lea.vmem %s1797, 33 [#allocation3]
    %v1962 = vld [vmem:[%s1961] ss:$2 sm:$0xf]
    %s1963 = scalar_lea.vmem %s1797, 65 [#allocation3]
    %v1964 = vld [vmem:[%s1963] ss:$2 sm:$0xf]
    %s1965 = scalar_lea.vmem %s1797, 97 [#allocation3]
    %v1966 = vld [vmem:[%s1965] ss:$2 sm:$0xf]
    %s1967 = scalar_lea.vmem %s1797, 161 [#allocation3]
    %v1968 = vld [vmem:[%s1967] ss:$2 sm:$0xf]
    %s1969 = scalar_lea.vmem %s1797, 193 [#allocation3]
    %v1970 = vld [vmem:[%s1969] ss:$2 sm:$0xf]
    %s1971 = scalar_lea.vmem %s1797, 225 [#allocation3]
    %v1972 = vld [vmem:[%s1971] ss:$2 sm:$0xf]
    %s1973 = scalar_lea.vmem %s1797, 257 [#allocation3]
    %v1974 = vld [vmem:[%s1973] ss:$2 sm:$0xf]
    %s1975 = scalar_lea.vmem %s7, 4
    %v1976 = vld [vmem:[%s1975] sm:$0x1]
    %v1978 = vperm.slane %v1976, 0
    %v1980 = vmul.f32 %v1960, %v1978
    %v1981 = vmul.f32 %v1962, %v1978
    %v1982 = vmul.f32 %v1964, %v1978
    %v1983 = vmul.f32 %v1966, %v1978
    %v1984 = vmul.f32 %v1968, %v1978
    %v1985 = vmul.f32 %v1970, %v1978
    %v1986 = vmul.f32 %v1972, %v1978
    %v1987 = vmul.f32 %v1974, %v1978
    %v1988 = vadd.f32 %v1951, %v1980
    %v1989 = vadd.f32 %v1952, %v1981
    %v1990 = vadd.f32 %v1953, %v1982
    %v1991 = vadd.f32 %v1954, %v1983
    %v1992 = vadd.f32 %v1955, %v1984
    %v1993 = vadd.f32 %v1956, %v1985
    %v1994 = vadd.f32 %v1957, %v1986
    %v1995 = vadd.f32 %v1958, %v1987
    %s1996 = scalar_lea.vmem %s1797, 2 [#allocation3]
    %v1997 = vld [vmem:[%s1996] ss:$2 sm:$0xf]
    %s1998 = scalar_lea.vmem %s1797, 34 [#allocation3]
    %v1999 = vld [vmem:[%s1998] ss:$2 sm:$0xf]
    %s2000 = scalar_lea.vmem %s1797, 66 [#allocation3]
    %v2001 = vld [vmem:[%s2000] ss:$2 sm:$0xf]
    %s2002 = scalar_lea.vmem %s1797, 98 [#allocation3]
    %v2003 = vld [vmem:[%s2002] ss:$2 sm:$0xf]
    %s2004 = scalar_lea.vmem %s1797, 162 [#allocation3]
    %v2005 = vld [vmem:[%s2004] ss:$2 sm:$0xf]
    %s2006 = scalar_lea.vmem %s1797, 194 [#allocation3]
    %v2007 = vld [vmem:[%s2006] ss:$2 sm:$0xf]
    %s2008 = scalar_lea.vmem %s1797, 226 [#allocation3]
    %v2009 = vld [vmem:[%s2008] ss:$2 sm:$0xf]
    %s2010 = scalar_lea.vmem %s1797, 258 [#allocation3]
    %v2011 = vld [vmem:[%s2010] ss:$2 sm:$0xf]
    %s2012 = scalar_lea.vmem %s7, 5
    %v2013 = vld [vmem:[%s2012] sm:$0x1]
    %v2015 = vperm.slane %v2013, 0
    %v2017 = vmul.f32 %v1997, %v2015
    %v2018 = vmul.f32 %v1999, %v2015
    %v2019 = vmul.f32 %v2001, %v2015
    %v2020 = vmul.f32 %v2003, %v2015
    %v2021 = vmul.f32 %v2005, %v2015
    %v2022 = vmul.f32 %v2007, %v2015
    %v2023 = vmul.f32 %v2009, %v2015
    %v2024 = vmul.f32 %v2011, %v2015
    %v2025 = vadd.f32 %v1988, %v2017
    %v2026 = vadd.f32 %v1989, %v2018
    %v2027 = vadd.f32 %v1990, %v2019
    %v2028 = vadd.f32 %v1991, %v2020
    %v2029 = vadd.f32 %v1992, %v2021
    %v2030 = vadd.f32 %v1993, %v2022
    %v2031 = vadd.f32 %v1994, %v2023
    %v2032 = vadd.f32 %v1995, %v2024
    %s2033 = scalar_lea.vmem [#allocation3], 32
    %v2034 = vld [vmem:[%s2033] ss:$2 sm:$0xf]
    %s2035 = scalar_lea.vmem %s2033, 32 [#allocation3]
    %v2036 = vld [vmem:[%s2035] ss:$2 sm:$0xf]
    %s2037 = scalar_lea.vmem %s2033, 64 [#allocation3]
    %v2038 = vld [vmem:[%s2037] ss:$2 sm:$0xf]
    %s2039 = scalar_lea.vmem %s2033, 96 [#allocation3]
    %v2040 = vld [vmem:[%s2039] ss:$2 sm:$0xf]
    %s2041 = scalar_lea.vmem %s2033, 160 [#allocation3]
    %v2042 = vld [vmem:[%s2041] ss:$2 sm:$0xf]
    %s2043 = scalar_lea.vmem %s2033, 192 [#allocation3]
    %v2044 = vld [vmem:[%s2043] ss:$2 sm:$0xf]
    %s2045 = scalar_lea.vmem %s2033, 224 [#allocation3]
    %v2046 = vld [vmem:[%s2045] ss:$2 sm:$0xf]
    %s2047 = scalar_lea.vmem %s2033, 256 [#allocation3]
    %v2048 = vld [vmem:[%s2047] ss:$2 sm:$0xf]
    %s2049 = scalar_lea.vmem %s7, 6
    %v2050 = vld [vmem:[%s2049] sm:$0x1]
    %v2052 = vperm.slane %v2050, 0
    %v2054 = vmul.f32 %v2034, %v2052
    %v2055 = vmul.f32 %v2036, %v2052
    %v2056 = vmul.f32 %v2038, %v2052
    %v2057 = vmul.f32 %v2040, %v2052
    %v2058 = vmul.f32 %v2042, %v2052
    %v2059 = vmul.f32 %v2044, %v2052
    %v2060 = vmul.f32 %v2046, %v2052
    %v2061 = vmul.f32 %v2048, %v2052
    %v2062 = vadd.f32 %v2025, %v2054
    %v2063 = vadd.f32 %v2026, %v2055
    %v2064 = vadd.f32 %v2027, %v2056
    %v2065 = vadd.f32 %v2028, %v2057
    %v2066 = vadd.f32 %v2029, %v2058
    %v2067 = vadd.f32 %v2030, %v2059
    %v2068 = vadd.f32 %v2031, %v2060
    %v2069 = vadd.f32 %v2032, %v2061
    %s2070 = scalar_lea.vmem %s2033, 1 [#allocation3]
    %v2071 = vld [vmem:[%s2070] ss:$2 sm:$0xf]
    %s2072 = scalar_lea.vmem %s2033, 33 [#allocation3]
    %v2073 = vld [vmem:[%s2072] ss:$2 sm:$0xf]
    %s2074 = scalar_lea.vmem %s2033, 65 [#allocation3]
    %v2075 = vld [vmem:[%s2074] ss:$2 sm:$0xf]
    %s2076 = scalar_lea.vmem %s2033, 97 [#allocation3]
    %v2077 = vld [vmem:[%s2076] ss:$2 sm:$0xf]
    %s2078 = scalar_lea.vmem %s2033, 161 [#allocation3]
    %v2079 = vld [vmem:[%s2078] ss:$2 sm:$0xf]
    %s2080 = scalar_lea.vmem %s2033, 193 [#allocation3]
    %v2081 = vld [vmem:[%s2080] ss:$2 sm:$0xf]
    %s2082 = scalar_lea.vmem %s2033, 225 [#allocation3]
    %v2083 = vld [vmem:[%s2082] ss:$2 sm:$0xf]
    %s2084 = scalar_lea.vmem %s2033, 257 [#allocation3]
    %v2085 = vld [vmem:[%s2084] ss:$2 sm:$0xf]
    %s2086 = scalar_lea.vmem %s7, 7
    %v2087 = vld [vmem:[%s2086] sm:$0x1]
    %v2089 = vperm.slane %v2087, 0
    %v2091 = vmul.f32 %v2071, %v2089
    %v2092 = vmul.f32 %v2073, %v2089
    %v2093 = vmul.f32 %v2075, %v2089
    %v2094 = vmul.f32 %v2077, %v2089
    %v2095 = vmul.f32 %v2079, %v2089
    %v2096 = vmul.f32 %v2081, %v2089
    %v2097 = vmul.f32 %v2083, %v2089
    %v2098 = vmul.f32 %v2085, %v2089
    %v2099 = vadd.f32 %v2062, %v2091
    %v2100 = vadd.f32 %v2063, %v2092
    %v2101 = vadd.f32 %v2064, %v2093
    %v2102 = vadd.f32 %v2065, %v2094
    %v2103 = vadd.f32 %v2066, %v2095
    %v2104 = vadd.f32 %v2067, %v2096
    %v2105 = vadd.f32 %v2068, %v2097
    %v2106 = vadd.f32 %v2069, %v2098
    %s2107 = scalar_lea.vmem %s2033, 2 [#allocation3]
    %v2108 = vld [vmem:[%s2107] ss:$2 sm:$0xf]
    %s2109 = scalar_lea.vmem %s2033, 34 [#allocation3]
    %v2110 = vld [vmem:[%s2109] ss:$2 sm:$0xf]
    %s2111 = scalar_lea.vmem %s2033, 66 [#allocation3]
    %v2112 = vld [vmem:[%s2111] ss:$2 sm:$0xf]
    %s2113 = scalar_lea.vmem %s2033, 98 [#allocation3]
    %v2114 = vld [vmem:[%s2113] ss:$2 sm:$0xf]
    %s2115 = scalar_lea.vmem %s2033, 162 [#allocation3]
    %v2116 = vld [vmem:[%s2115] ss:$2 sm:$0xf]
    %s2117 = scalar_lea.vmem %s2033, 194 [#allocation3]
    %v2118 = vld [vmem:[%s2117] ss:$2 sm:$0xf]
    %s2119 = scalar_lea.vmem %s2033, 226 [#allocation3]
    %v2120 = vld [vmem:[%s2119] ss:$2 sm:$0xf]
    %s2121 = scalar_lea.vmem %s2033, 258 [#allocation3]
    %v2122 = vld [vmem:[%s2121] ss:$2 sm:$0xf]
    %s2123 = scalar_lea.vmem %s7, 8
    %v2124 = vld [vmem:[%s2123] sm:$0x1]
    %v2126 = vperm.slane %v2124, 0
    %v2128 = vmul.f32 %v2108, %v2126
    %v2129 = vmul.f32 %v2110, %v2126
    %v2130 = vmul.f32 %v2112, %v2126
    %v2131 = vmul.f32 %v2114, %v2126
    %v2132 = vmul.f32 %v2116, %v2126
    %v2133 = vmul.f32 %v2118, %v2126
    %v2134 = vmul.f32 %v2120, %v2126
    %v2135 = vmul.f32 %v2122, %v2126
    %v2136 = vadd.f32 %v2099, %v2128
    %v2137 = vadd.f32 %v2100, %v2129
    %v2138 = vadd.f32 %v2101, %v2130
    %v2139 = vadd.f32 %v2102, %v2131
    %v2140 = vadd.f32 %v2103, %v2132
    %v2141 = vadd.f32 %v2104, %v2133
    %v2142 = vadd.f32 %v2105, %v2134
    %v2143 = vadd.f32 %v2106, %v2135
    %v2144 = vld [vmem:[%s8] sm:$0x1]
    %v2146 = vperm.slane %v2144, 0
    %v2148 = vadd.f32 %v2136, %v2146
    %v2149 = vadd.f32 %v2137, %v2146
    %v2150 = vadd.f32 %v2138, %v2146
    %v2151 = vadd.f32 %v2139, %v2146
    %v2152 = vadd.f32 %v2140, %v2146
    %v2153 = vadd.f32 %v2141, %v2146
    %v2154 = vadd.f32 %v2142, %v2146
    %v2155 = vadd.f32 %v2143, %v2146
    %v2156 = vmax.f32 %v2148, 0.0
    %v2157 = vmax.f32 %v2149, 0.0
    %v2158 = vmax.f32 %v2150, 0.0
    %v2159 = vmax.f32 %v2151, 0.0
    %v2160 = vmax.f32 %v2152, 0.0
    %v2161 = vmax.f32 %v2153, 0.0
    %v2162 = vmax.f32 %v2154, 0.0
    %v2163 = vmax.f32 %v2155, 0.0
    %v2164 = vld [vmem:[%s9] sm:$0xff]
    %v2165 = vld [vmem:[%s9 + $0x8] sm:$0xff]
    %v2166 = vld [vmem:[%s9 + $0x10] sm:$0xff]
    %v2167 = vld [vmem:[%s9 + $0x18] sm:$0xff]
    %v2168 = vld [vmem:[%s10] sm:$0x1]
    %v2170 = vperm.slane %v2168, 0
    %2180 = vst [vmem:[#allocation1] ss:$2 sm:$0xff] %v2156
    %s2181 = scalar_lea.vmem [#allocation1], 1
    %2182 = vst [vmem:[%s2181] ss:$2 sm:$0xff] %v2157
    %s2183 = scalar_lea.vmem [#allocation1], 16
    %2184 = vst [vmem:[%s2183] ss:$2 sm:$0xff] %v2158
    %s2185 = scalar_lea.vmem [#allocation1], 17
    %2186 = vst [vmem:[%s2185] ss:$2 sm:$0xff] %v2159
    %s2187 = scalar_lea.vmem [#allocation1], 32
    %2188 = vst [vmem:[%s2187] ss:$2 sm:$0xff] %v2160
    %s2189 = scalar_lea.vmem [#allocation1], 33
    %2190 = vst [vmem:[%s2189] ss:$2 sm:$0xff] %v2161
    %s2191 = scalar_lea.vmem [#allocation1], 48
    %2192 = vst [vmem:[%s2191] ss:$2 sm:$0xff] %v2162
    %s2193 = scalar_lea.vmem [#allocation1], 49
    %2194 = vst [vmem:[%s2193] ss:$2 sm:$0xff] %v2163
    %v2195 = vld.sshfl [vmem:[#allocation1] sm:$0xff pattern:$0x75316420]
    %v2196 = vld.sshfl [vmem:[#allocation1 + $0x10] sm:$0xff pattern:$0x75316420]
    %v2197 = vld.sshfl [vmem:[#allocation1 + $0x20] sm:$0xff pattern:$0x75316420]
    %v2198 = vld.sshfl [vmem:[#allocation1 + $0x30] sm:$0xff pattern:$0x75316420]
    %v2199 = vsel %vm1546, %v2195, 0
    %v2201 = vsel %vm1546, %v2196, 0
    %v2203 = vsel %vm1546, %v2197, 0
    %v2205 = vsel %vm1546, %v2198, 0
    %2207 = vmatpush.msra.mxu0 0.0
    %2208 = vmatpush.msra.mxu0 0.0
    %2209 = vmatpush.msra.mxu0 0.0
    %2210 = vmatpush.msra.mxu0 0.0
    %2211 = vmatpush.msra.mxu0 0.0
    %2212 = vmatpush.msra.mxu0 0.0
    %2213 = vmatpush.msra.mxu0 0.0
    %2214 = vmatpush.msra.mxu0 0.0
    %2215 = vmatpush.msra.mxu0 0.0
    %2216 = vmatpush.msra.mxu0 0.0
    %2217 = vmatpush.msra.mxu0 0.0
    %2218 = vmatpush.msra.mxu0 0.0
    %2219 = vmatpush.msra.mxu0 %v2167
    %2220 = vmatpush.msra.mxu0 %v2166
    %2221 = vmatpush.msra.mxu0 %v2165
    %2222 = vmatpush.msra.mxu0 %v2164
    %2223 = vmatmul.f32.gmra.mxu0 %v2199
    %v2224 = vpop.f32.mrf.mxu0
    %v2225 = vadd.f32 %v2170, %v2224
    %2226 = vmatmul.f32.gmra.mxu0 %v2201
    %v2227 = vpop.f32.mrf.mxu0
    %v2228 = vadd.f32 %v2170, %v2227
    %2229 = vmatmul.f32.gmra.mxu0 %v2203
    %v2230 = vpop.f32.mrf.mxu0
    %v2231 = vadd.f32 %v2170, %v2230
    %2232 = vmatmul.f32.gmra.mxu0 %v2205
    %v2233 = vpop.f32.mrf.mxu0
    %v2234 = vadd.f32 %v2170, %v2233
    %2235 = vdwg.mxu0
    %v2236 = vmax.f32 %v2225, 0.0
    %v2237 = vmax.f32 %v2228, 0.0
    %v2238 = vmax.f32 %v2231, 0.0
    %v2239 = vmax.f32 %v2234, 0.0
    %vm2240 = vcmask 523264
    %v2241 = vsel %vm2240, %v2236, 0.0
    %v2242 = vsel %vm2240, %v2237, 0.0
    %v2243 = vadd.f32 %v2241, %v2242
    %v2244 = vrot.slane %v2243, 4
    %v2245 = vadd.f32 %v2243, %v2244
    %v2246 = vrot.slane %v2245, 2
    %v2247 = vadd.f32 %v2245, %v2246
    %v2248 = vrot.slane %v2247, 1
    %v2249 = vadd.f32 %v2247, %v2248
    %v2250 = vsel %vm2240, %v2238, 0.0
    %v2251 = vsel %vm2240, %v2239, 0.0
    %v2252 = vadd.f32 %v2250, %v2251
    %v2253 = vrot.slane %v2252, 4
    %v2254 = vadd.f32 %v2252, %v2253
    %v2255 = vrot.slane %v2254, 2
    %v2256 = vadd.f32 %v2254, %v2255
    %v2257 = vrot.slane %v2256, 1
    %v2258 = vadd.f32 %v2256, %v2257
    %v2259 = vrcp.pop 16.0
    %v2260 = vmul.f32 16.0, %v2259
    %v2261 = vsub.f32 1.0, %v2260
    %v2262 = vmul.f32 %v2259, %v2261
    %v2263 = vadd.f32 %v2259, %v2262
    %vm2264 = vweird.f32 %v2259
    %v2265 = vsel %vm2264, %v2259, %v2263
    %v2266 = vmul.f32 %v2249, %v2265
    %v2267 = vmul.f32 %v2258, %v2265
    %v2268 = vadd.s32 %v1599, 32
    %v2269 = vadd.s32 %v1599, 40
    %v2270 = vadd.s32 %v1599, 48
    %v2271 = vadd.s32 %v1599, 56
    %s2272 = sld [smem:[#allocation8]]
    %vm2273 = vcmp.eq.s32.totalorder %v2268, %v1606
    %vm2274 = vcmp.eq.s32.totalorder %v2269, %v1606
    %vm2275 = vcmp.eq.s32.totalorder %v2270, %v1606
    %vm2276 = vcmp.eq.s32.totalorder %v2271, %v1606
    %v2277 = vsel %vm2273, 1, 0
    %v2278 = vsel %vm2274, 1, 0
    %v2279 = vsel %vm2275, 1, 0
    %v2280 = vsel %vm2276, 1, 0
    %v2281 = vcvt.s32.f32 %v2277
    %v2282 = vcvt.s32.f32 %v2278
    %v2283 = vcvt.s32.f32 %v2279
    %v2284 = vcvt.s32.f32 %v2280
    %v2285 = vstv %s2272
    %v2286 = vmul.f32 %v2285, %v1615
    %v2287 = vmul.f32 %v2285, %v1616
    %v2288 = vmul.f32 %v2285, %v1617
    %v2289 = vmul.f32 %v2285, %v1618
    %v2290 = vmul.f32 %v2285, %v2281
    %v2291 = vmul.f32 %v2285, %v2282
    %v2292 = vmul.f32 %v2285, %v2283
    %v2293 = vmul.f32 %v2285, %v2284
    %v2294 = vadd.f32 %v2286, 0.0
    %v2295 = vadd.f32 %v2287, 0.0
    %v2296 = vadd.f32 %v2288, 0.0
    %v2297 = vadd.f32 %v2289, 0.0
    %v2298 = vadd.f32 %v2290, 0.0
    %v2299 = vadd.f32 %v2291, 0.0
    %v2300 = vadd.f32 %v2292, 0.0
    %v2301 = vadd.f32 %v2293, 0.0
    %s2302 = sld [smem:[#allocation8 + $0x1]]
    %vm2303 = vcmp.eq.s32.totalorder %v2268, %v1604
    %vm2304 = vcmp.eq.s32.totalorder %v2269, %v1604
    %vm2305 = vcmp.eq.s32.totalorder %v2270, %v1604
    %vm2306 = vcmp.eq.s32.totalorder %v2271, %v1604
    %v2307 = vsel %vm2303, 1, 0
    %v2308 = vsel %vm2304, 1, 0
    %v2309 = vsel %vm2305, 1, 0
    %v2310 = vsel %vm2306, 1, 0
    %v2311 = vcvt.s32.f32 %v2307
    %v2312 = vcvt.s32.f32 %v2308
    %v2313 = vcvt.s32.f32 %v2309
    %v2314 = vcvt.s32.f32 %v2310
    %v2315 = vstv %s2302
    %v2316 = vmul.f32 %v2315, %v1637
    %v2317 = vmul.f32 %v2315, %v1638
    %v2318 = vmul.f32 %v2315, %v1639
    %v2319 = vmul.f32 %v2315, %v1640
    %v2320 = vmul.f32 %v2315, %v2311
    %v2321 = vmul.f32 %v2315, %v2312
    %v2322 = vmul.f32 %v2315, %v2313
    %v2323 = vmul.f32 %v2315, %v2314
    %v2324 = vadd.f32 %v2294, %v2316
    %v2325 = vadd.f32 %v2295, %v2317
    %v2326 = vadd.f32 %v2296, %v2318
    %v2327 = vadd.f32 %v2297, %v2319
    %v2328 = vadd.f32 %v2298, %v2320
    %v2329 = vadd.f32 %v2299, %v2321
    %v2330 = vadd.f32 %v2300, %v2322
    %v2331 = vadd.f32 %v2301, %v2323
    %s2332 = sld [smem:[#allocation8 + $0x2]]
    %vm2333 = vcmp.eq.s32.totalorder %v2268, %v1651
    %vm2334 = vcmp.eq.s32.totalorder %v2269, %v1651
    %vm2335 = vcmp.eq.s32.totalorder %v2270, %v1651
    %vm2336 = vcmp.eq.s32.totalorder %v2271, %v1651
    %v2337 = vsel %vm2333, 1, 0
    %v2338 = vsel %vm2334, 1, 0
    %v2339 = vsel %vm2335, 1, 0
    %v2340 = vsel %vm2336, 1, 0
    %v2341 = vcvt.s32.f32 %v2337
    %v2342 = vcvt.s32.f32 %v2338
    %v2343 = vcvt.s32.f32 %v2339
    %v2344 = vcvt.s32.f32 %v2340
    %v2345 = vstv %s2332
    %v2346 = vmul.f32 %v2345, %v1660
    %v2347 = vmul.f32 %v2345, %v1661
    %v2348 = vmul.f32 %v2345, %v1662
    %v2349 = vmul.f32 %v2345, %v1663
    %v2350 = vmul.f32 %v2345, %v2341
    %v2351 = vmul.f32 %v2345, %v2342
    %v2352 = vmul.f32 %v2345, %v2343
    %v2353 = vmul.f32 %v2345, %v2344
    %v2354 = vadd.f32 %v2324, %v2346
    %v2355 = vadd.f32 %v2325, %v2347
    %v2356 = vadd.f32 %v2326, %v2348
    %v2357 = vadd.f32 %v2327, %v2349
    %v2358 = vadd.f32 %v2328, %v2350
    %v2359 = vadd.f32 %v2329, %v2351
    %v2360 = vadd.f32 %v2330, %v2352
    %v2361 = vadd.f32 %v2331, %v2353
    %v2364 = vsel %vm1675, %v2267, %v2266
    %v2365 = vsel %vm2240, %v2364, 0
    %2367 = vmatpush.msra.mxu0 0.0
    %2368 = vmatpush.msra.mxu0 0.0
    %2369 = vmatpush.msra.mxu0 0.0
    %2370 = vmatpush.msra.mxu0 0.0
    %2371 = vmatpush.msra.mxu0 0.0
    %2372 = vmatpush.msra.mxu0 0.0
    %2373 = vmatpush.msra.mxu0 0.0
    %2374 = vmatpush.msra.mxu0 0.0
    %2375 = vmatpush.msra.mxu0 %v2361
    %2376 = vmatpush.msra.mxu0 %v2360
    %2377 = vmatpush.msra.mxu0 %v2359
    %2378 = vmatpush.msra.mxu0 %v2358
    %2379 = vmatpush.msra.mxu0 %v2357
    %2380 = vmatpush.msra.mxu0 %v2356
    %2381 = vmatpush.msra.mxu0 %v2355
    %2382 = vmatpush.msra.mxu0 %v2354
    %2383 = vmatmul.f32.gmra.mxu0 %v2365
    %v2384 = vpop.f32.mrf.mxu0
    %v2385 = vadd.f32 0.0, %v2384
    %2386 = vdwg.mxu0
    %v2387 = vxor.u32 %v2385, 2147483648
    %v2388 = vmul.f32 %v2387, 1.442695
    %v2389 = vpow.pop %v2388
    %v2390 = vadd.f32 %v2389, 1.0
    %v2391 = vrcp.pop %v2390
    %v2392 = vmul.f32 %v2390, %v2391
    %v2393 = vsub.f32 1.0, %v2392
    %v2394 = vmul.f32 %v2391, %v2393
    %v2395 = vadd.f32 %v2391, %v2394
    %vm2396 = vweird.f32 %v2390
    %vm2397 = vweird.f32 %v2391
    %vm2398 = vmor %vm2396, %vm2397
    %v2399 = vsel %vm2398, %v2391, %v2395
    %v2400 = vand.u32 2147483647, %v2390
    %vm2401 = vcmp.eq.f32.partialorder %v2400, 8.507059e+37
    %v2402 = vand.u32 %v2390, 2147483648
    %v2403 = vor.u32 1.1754944e-38, %v2402
    %v2404 = vsel %vm2401, %v2403, %v2399
    %v2405 = vmul.f32 1.0, %v2404
    %v2407 = vrot.slane %v2405, 1
    %v2408 = vperm.slane %v2405, 0
    %v2409 = vperm.slane %v2407, 0
    %v2412 = vmul.f32 %v2236, %v2408
    %v2413 = vmul.f32 %v2237, %v2408
    %v2414 = vmul.f32 %v2238, %v2409
    %v2415 = vmul.f32 %v2239, %v2409
    %v2420 = vrot.slane %v2412, 4
    %v2421 = vrot.slane %v2413, 4
    %v2422 = vrot.slane %v2414, 4
    %v2423 = vrot.slane %v2415, 4
    %vm2428 = vcmask 519168
    %2429 = vst.msk [vmem:[#allocation12] sm:$0xf] %vm2428, %v2412
    %2430 = vst.msk [vmem:[#allocation12 + $0x4] sm:$0xf] %vm2428, %v2420
    %2431 = vst.msk [vmem:[#allocation12 + $0x8] sm:$0xf] %vm2428, %v2413
    %2432 = vst.msk [vmem:[#allocation12 + $0xc] sm:$0xf] %vm2428, %v2421
    %2433 = vst.msk [vmem:[#allocation12 + $0x10] sm:$0xf] %vm2428, %v2414
    %2434 = vst.msk [vmem:[#allocation12 + $0x14] sm:$0xf] %vm2428, %v2422
    %2435 = vst.msk [vmem:[#allocation12 + $0x18] sm:$0xf] %vm2428, %v2415
    %2436 = vst.msk [vmem:[#allocation12 + $0x1c] sm:$0xf] %vm2428, %v2423
    %vm2437 = vcmask 521216
    %2438 = vst.msk [vmem:[#allocation4] sm:$0x3f] %vm2437, 0.0
    %2439 = vst.msk [vmem:[#allocation4 + $0x8] sm:$0x3f] %vm2437, 0.0
    %2440 = vst.msk [vmem:[#allocation4 + $0x10] sm:$0x3f] %vm2437, 0.0
    %2441 = vst.msk [vmem:[#allocation4 + $0x18] sm:$0x3f] %vm2437, 0.0
    %2442 = vst.msk [vmem:[#allocation4 + $0x20] sm:$0x3f] %vm2437, 0.0
    %2443 = vst.msk [vmem:[#allocation4 + $0x28] sm:$0x3f] %vm2437, 0.0
    %2444 = vst.msk [vmem:[#allocation4 + $0x30] sm:$0x3f] %vm2437, 0.0
    %2445 = vst.msk [vmem:[#allocation4 + $0x38] sm:$0x3f] %vm2437, 0.0
    %2446 = vst.msk [vmem:[#allocation4 + $0x40] sm:$0x3f] %vm2437, 0.0
    %2447 = vst.msk [vmem:[#allocation4 + $0x48] sm:$0x3f] %vm2437, 0.0
    %2448 = vst.msk [vmem:[#allocation4 + $0x50] sm:$0x3f] %vm2437, 0.0
    %2449 = vst.msk [vmem:[#allocation4 + $0x58] sm:$0x3f] %vm2437, 0.0
    %s2450 = scalar_lea.vmem [#allocation4], 8
    %2451 = vst.msk [vmem:[%s2450 + $0x1] sm:$0xf] %vm2428, %v2412
    %2452 = vst.msk [vmem:[%s2450 + $0x9] sm:$0xf] %vm2428, %v2420
    %2453 = vst.msk [vmem:[%s2450 + $0x11] sm:$0xf] %vm2428, %v2413
    %2454 = vst.msk [vmem:[%s2450 + $0x19] sm:$0xf] %vm2428, %v2421
    %2455 = vst.msk [vmem:[%s2450 + $0x31] sm:$0xf] %vm2428, %v2414
    %2456 = vst.msk [vmem:[%s2450 + $0x39] sm:$0xf] %vm2428, %v2422
    %2457 = vst.msk [vmem:[%s2450 + $0x41] sm:$0xf] %vm2428, %v2415
    %2458 = vst.msk [vmem:[%s2450 + $0x49] sm:$0xf] %vm2428, %v2423
    %v2459 = vld [vmem:[#allocation4] ss:$2 sm:$0x3]
    %s2460 = scalar_lea.vmem [#allocation4], 16
    %v2461 = vld [vmem:[%s2460] ss:$2 sm:$0x3]
    %s2462 = scalar_lea.vmem [#allocation4], 48
    %v2463 = vld [vmem:[%s2462] ss:$2 sm:$0x3]
    %s2464 = scalar_lea.vmem [#allocation4], 64
    %v2465 = vld [vmem:[%s2464] ss:$2 sm:$0x3]
    %v2466 = vld [vmem:[%s11] sm:$0x1]
    %v2468 = vperm.slane %v2466, 0
    %v2470 = vmul.f32 %v2459, %v2468
    %v2471 = vmul.f32 %v2461, %v2468
    %v2472 = vmul.f32 %v2463, %v2468
    %v2473 = vmul.f32 %v2465, %v2468
    %v2474 = vadd.f32 %v2470, 0.0
    %v2475 = vadd.f32 %v2471, 0.0
    %v2476 = vadd.f32 %v2472, 0.0
    %v2477 = vadd.f32 %v2473, 0.0
    %s2478 = scalar_lea.vmem [#allocation4], 1
    %v2479 = vld [vmem:[%s2478] ss:$2 sm:$0x3]
    %s2480 = scalar_lea.vmem [#allocation4], 17
    %v2481 = vld [vmem:[%s2480] ss:$2 sm:$0x3]
    %s2482 = scalar_lea.vmem [#allocation4], 49
    %v2483 = vld [vmem:[%s2482] ss:$2 sm:$0x3]
    %s2484 = scalar_lea.vmem [#allocation4], 65
    %v2485 = vld [vmem:[%s2484] ss:$2 sm:$0x3]
    %s2486 = scalar_lea.vmem %s11, 1
    %v2487 = vld [vmem:[%s2486] sm:$0x1]
    %v2489 = vperm.slane %v2487, 0
    %v2491 = vmul.f32 %v2479, %v2489
    %v2492 = vmul.f32 %v2481, %v2489
    %v2493 = vmul.f32 %v2483, %v2489
    %v2494 = vmul.f32 %v2485, %v2489
    %v2495 = vadd.f32 %v2474, %v2491
    %v2496 = vadd.f32 %v2475, %v2492
    %v2497 = vadd.f32 %v2476, %v2493
    %v2498 = vadd.f32 %v2477, %v2494
    %s2499 = scalar_lea.vmem [#allocation4], 2
    %v2500 = vld [vmem:[%s2499] ss:$2 sm:$0x3]
    %s2501 = scalar_lea.vmem [#allocation4], 18
    %v2502 = vld [vmem:[%s2501] ss:$2 sm:$0x3]
    %s2503 = scalar_lea.vmem [#allocation4], 50
    %v2504 = vld [vmem:[%s2503] ss:$2 sm:$0x3]
    %s2505 = scalar_lea.vmem [#allocation4], 66
    %v2506 = vld [vmem:[%s2505] ss:$2 sm:$0x3]
    %s2507 = scalar_lea.vmem %s11, 2
    %v2508 = vld [vmem:[%s2507] sm:$0x1]
    %v2510 = vperm.slane %v2508, 0
    %v2512 = vmul.f32 %v2500, %v2510
    %v2513 = vmul.f32 %v2502, %v2510
    %v2514 = vmul.f32 %v2504, %v2510
    %v2515 = vmul.f32 %v2506, %v2510
    %v2516 = vadd.f32 %v2495, %v2512
    %v2517 = vadd.f32 %v2496, %v2513
    %v2518 = vadd.f32 %v2497, %v2514
    %v2519 = vadd.f32 %v2498, %v2515
    %v2520 = vld [vmem:[%s2450] ss:$2 sm:$0x3]
    %s2521 = scalar_lea.vmem %s2450, 16 [#allocation4]
    %v2522 = vld [vmem:[%s2521] ss:$2 sm:$0x3]
    %s2523 = scalar_lea.vmem %s2450, 48 [#allocation4]
    %v2524 = vld [vmem:[%s2523] ss:$2 sm:$0x3]
    %s2525 = scalar_lea.vmem %s2450, 64 [#allocation4]
    %v2526 = vld [vmem:[%s2525] ss:$2 sm:$0x3]
    %s2527 = scalar_lea.vmem %s11, 3
    %v2528 = vld [vmem:[%s2527] sm:$0x1]
    %v2530 = vperm.slane %v2528, 0
    %v2532 = vmul.f32 %v2520, %v2530
    %v2533 = vmul.f32 %v2522, %v2530
    %v2534 = vmul.f32 %v2524, %v2530
    %v2535 = vmul.f32 %v2526, %v2530
    %v2536 = vadd.f32 %v2516, %v2532
    %v2537 = vadd.f32 %v2517, %v2533
    %v2538 = vadd.f32 %v2518, %v2534
    %v2539 = vadd.f32 %v2519, %v2535
    %s2540 = scalar_lea.vmem %s2450, 1 [#allocation4]
    %v2541 = vld [vmem:[%s2540] ss:$2 sm:$0x3]
    %s2542 = scalar_lea.vmem %s2450, 17 [#allocation4]
    %v2543 = vld [vmem:[%s2542] ss:$2 sm:$0x3]
    %s2544 = scalar_lea.vmem %s2450, 49 [#allocation4]
    %v2545 = vld [vmem:[%s2544] ss:$2 sm:$0x3]
    %s2546 = scalar_lea.vmem %s2450, 65 [#allocation4]
    %v2547 = vld [vmem:[%s2546] ss:$2 sm:$0x3]
    %s2548 = scalar_lea.vmem %s11, 4
    %v2549 = vld [vmem:[%s2548] sm:$0x1]
    %v2551 = vperm.slane %v2549, 0
    %v2553 = vmul.f32 %v2541, %v2551
    %v2554 = vmul.f32 %v2543, %v2551
    %v2555 = vmul.f32 %v2545, %v2551
    %v2556 = vmul.f32 %v2547, %v2551
    %v2557 = vadd.f32 %v2536, %v2553
    %v2558 = vadd.f32 %v2537, %v2554
    %v2559 = vadd.f32 %v2538, %v2555
    %v2560 = vadd.f32 %v2539, %v2556
    %s2561 = scalar_lea.vmem %s2450, 2 [#allocation4]
    %v2562 = vld [vmem:[%s2561] ss:$2 sm:$0x3]
    %s2563 = scalar_lea.vmem %s2450, 18 [#allocation4]
    %v2564 = vld [vmem:[%s2563] ss:$2 sm:$0x3]
    %s2565 = scalar_lea.vmem %s2450, 50 [#allocation4]
    %v2566 = vld [vmem:[%s2565] ss:$2 sm:$0x3]
    %s2567 = scalar_lea.vmem %s2450, 66 [#allocation4]
    %v2568 = vld [vmem:[%s2567] ss:$2 sm:$0x3]
    %s2569 = scalar_lea.vmem %s11, 5
    %v2570 = vld [vmem:[%s2569] sm:$0x1]
    %v2572 = vperm.slane %v2570, 0
    %v2574 = vmul.f32 %v2562, %v2572
    %v2575 = vmul.f32 %v2564, %v2572
    %v2576 = vmul.f32 %v2566, %v2572
    %v2577 = vmul.f32 %v2568, %v2572
    %v2578 = vadd.f32 %v2557, %v2574
    %v2579 = vadd.f32 %v2558, %v2575
    %v2580 = vadd.f32 %v2559, %v2576
    %v2581 = vadd.f32 %v2560, %v2577
    %s2582 = scalar_lea.vmem [#allocation4], 16
    %v2583 = vld [vmem:[%s2582] ss:$2 sm:$0x3]
    %s2584 = scalar_lea.vmem %s2582, 16 [#allocation4]
    %v2585 = vld [vmem:[%s2584] ss:$2 sm:$0x3]
    %s2586 = scalar_lea.vmem %s2582, 48 [#allocation4]
    %v2587 = vld [vmem:[%s2586] ss:$2 sm:$0x3]
    %s2588 = scalar_lea.vmem %s2582, 64 [#allocation4]
    %v2589 = vld [vmem:[%s2588] ss:$2 sm:$0x3]
    %s2590 = scalar_lea.vmem %s11, 6
    %v2591 = vld [vmem:[%s2590] sm:$0x1]
    %v2593 = vperm.slane %v2591, 0
    %v2595 = vmul.f32 %v2583, %v2593
    %v2596 = vmul.f32 %v2585, %v2593
    %v2597 = vmul.f32 %v2587, %v2593
    %v2598 = vmul.f32 %v2589, %v2593
    %v2599 = vadd.f32 %v2578, %v2595
    %v2600 = vadd.f32 %v2579, %v2596
    %v2601 = vadd.f32 %v2580, %v2597
    %v2602 = vadd.f32 %v2581, %v2598
    %s2603 = scalar_lea.vmem %s2582, 1 [#allocation4]
    %v2604 = vld [vmem:[%s2603] ss:$2 sm:$0x3]
    %s2605 = scalar_lea.vmem %s2582, 17 [#allocation4]
    %v2606 = vld [vmem:[%s2605] ss:$2 sm:$0x3]
    %s2607 = scalar_lea.vmem %s2582, 49 [#allocation4]
    %v2608 = vld [vmem:[%s2607] ss:$2 sm:$0x3]
    %s2609 = scalar_lea.vmem %s2582, 65 [#allocation4]
    %v2610 = vld [vmem:[%s2609] ss:$2 sm:$0x3]
    %s2611 = scalar_lea.vmem %s11, 7
    %v2612 = vld [vmem:[%s2611] sm:$0x1]
    %v2614 = vperm.slane %v2612, 0
    %v2616 = vmul.f32 %v2604, %v2614
    %v2617 = vmul.f32 %v2606, %v2614
    %v2618 = vmul.f32 %v2608, %v2614
    %v2619 = vmul.f32 %v2610, %v2614
    %v2620 = vadd.f32 %v2599, %v2616
    %v2621 = vadd.f32 %v2600, %v2617
    %v2622 = vadd.f32 %v2601, %v2618
    %v2623 = vadd.f32 %v2602, %v2619
    %s2624 = scalar_lea.vmem %s2582, 2 [#allocation4]
    %v2625 = vld [vmem:[%s2624] ss:$2 sm:$0x3]
    %s2626 = scalar_lea.vmem %s2582, 18 [#allocation4]
    %v2627 = vld [vmem:[%s2626] ss:$2 sm:$0x3]
    %s2628 = scalar_lea.vmem %s2582, 50 [#allocation4]
    %v2629 = vld [vmem:[%s2628] ss:$2 sm:$0x3]
    %s2630 = scalar_lea.vmem %s2582, 66 [#allocation4]
    %v2631 = vld [vmem:[%s2630] ss:$2 sm:$0x3]
    %s2632 = scalar_lea.vmem %s11, 8
    %v2633 = vld [vmem:[%s2632] sm:$0x1]
    %v2635 = vperm.slane %v2633, 0
    %v2637 = vmul.f32 %v2625, %v2635
    %v2638 = vmul.f32 %v2627, %v2635
    %v2639 = vmul.f32 %v2629, %v2635
    %v2640 = vmul.f32 %v2631, %v2635
    %v2641 = vadd.f32 %v2620, %v2637
    %v2642 = vadd.f32 %v2621, %v2638
    %v2643 = vadd.f32 %v2622, %v2639
    %v2644 = vadd.f32 %v2623, %v2640
    %v2645 = vld [vmem:[%s12] sm:$0x1]
    %v2647 = vperm.slane %v2645, 0
    %v2649 = vadd.f32 %v2641, %v2647
    %v2650 = vadd.f32 %v2642, %v2647
    %v2651 = vadd.f32 %v2643, %v2647
    %v2652 = vadd.f32 %v2644, %v2647
    %v2653 = vmax.f32 %v2649, 0.0
    %v2654 = vmax.f32 %v2650, 0.0
    %v2655 = vmax.f32 %v2651, 0.0
    %v2656 = vmax.f32 %v2652, 0.0
    %v2657 = vld [vmem:[%s13] sm:$0xff]
    %v2658 = vld [vmem:[%s13 + $0x8] sm:$0xff]
    %v2659 = vld [vmem:[%s13 + $0x10] sm:$0xff]
    %v2660 = vld [vmem:[%s13 + $0x18] sm:$0xff]
    %v2661 = vld [vmem:[%s13 + $0x20] sm:$0xff]
    %v2662 = vld [vmem:[%s13 + $0x28] sm:$0xff]
    %v2663 = vld [vmem:[%s13 + $0x30] sm:$0xff]
    %v2664 = vld [vmem:[%s13 + $0x38] sm:$0xff]
    %v2665 = vld [vmem:[%s14] sm:$0x1]
    %v2667 = vperm.slane %v2665, 0
    %2673 = vst [vmem:[#allocation1] ss:$4 sm:$0xff] %v2653
    %s2674 = scalar_lea.vmem [#allocation1], 1
    %2675 = vst [vmem:[%s2674] ss:$4 sm:$0xff] %v2654
    %s2676 = scalar_lea.vmem [#allocation1], 2
    %2677 = vst [vmem:[%s2676] ss:$4 sm:$0xff] %v2655
    %s2678 = scalar_lea.vmem [#allocation1], 3
    %2679 = vst [vmem:[%s2678] ss:$4 sm:$0xff] %v2656
    %v2680 = vld.sshfl [vmem:[#allocation1] sm:$0xff pattern:$0x73625140]
    %v2681 = vsel %vm2240, %v2680, 0
    %2683 = vmatpush.msra.mxu0 0.0
    %2684 = vmatpush.msra.mxu0 0.0
    %2685 = vmatpush.msra.mxu0 0.0
    %2686 = vmatpush.msra.mxu0 0.0
    %2687 = vmatpush.msra.mxu0 0.0
    %2688 = vmatpush.msra.mxu0 0.0
    %2689 = vmatpush.msra.mxu0 0.0
    %2690 = vmatpush.msra.mxu0 0.0
    %2691 = vmatpush.msra.mxu0 %v2664
    %2692 = vmatpush.msra.mxu0 %v2663
    %2693 = vmatpush.msra.mxu0 %v2662
    %2694 = vmatpush.msra.mxu0 %v2661
    %2695 = vmatpush.msra.mxu0 %v2660
    %2696 = vmatpush.msra.mxu0 %v2659
    %2697 = vmatpush.msra.mxu0 %v2658
    %2698 = vmatpush.msra.mxu0 %v2657
    %2699 = vmatmul.f32.gmra.mxu0 %v2681
    %v2700 = vpop.f32.mrf.mxu0
    %v2701 = vadd.f32 %v2667, %v2700
    %2702 = vdwg.mxu0
    %v2703 = vmax.f32 %v2701, 0.0
    %v2705 = vrot.slane %v2703, 4
    %vm2707 = vcmask 257024
    %v2708 = vsel %vm2707, %v2703, 0.0
    %v2709 = vrot.slane %v2708, 4
    %v2710 = vadd.f32 %v2708, %v2709
    %v2711 = vrot.slane %v2710, 2
    %v2712 = vadd.f32 %v2710, %v2711
    %v2713 = vrot.slane %v2712, 1
    %v2714 = vadd.f32 %v2712, %v2713
    %v2715 = vsel %vm2707, %v2705, 0.0
    %v2716 = vrot.slane %v2715, 4
    %v2717 = vadd.f32 %v2715, %v2716
    %v2718 = vrot.slane %v2717, 2
    %v2719 = vadd.f32 %v2717, %v2718
    %v2720 = vrot.slane %v2719, 1
    %v2721 = vadd.f32 %v2719, %v2720
    %v2722 = vrcp.pop 4.0
    %v2723 = vmul.f32 4.0, %v2722
    %v2724 = vsub.f32 1.0, %v2723
    %v2725 = vmul.f32 %v2722, %v2724
    %v2726 = vadd.f32 %v2722, %v2725
    %vm2727 = vweird.f32 %v2722
    %v2728 = vsel %vm2727, %v2722, %v2726
    %v2729 = vmul.f32 %v2714, %v2728
    %v2730 = vmul.f32 %v2721, %v2728
    %s2731 = sld [smem:[#allocation10]]
    %v2732 = vstv %s2731
    %v2733 = vmul.f32 %v2732, %v1615
    %v2734 = vmul.f32 %v2732, %v1616
    %v2735 = vmul.f32 %v2732, %v1617
    %v2736 = vmul.f32 %v2732, %v1618
    %v2737 = vadd.f32 %v2733, 0.0
    %v2738 = vadd.f32 %v2734, 0.0
    %v2739 = vadd.f32 %v2735, 0.0
    %v2740 = vadd.f32 %v2736, 0.0
    %s2741 = sld [smem:[#allocation10 + $0x1]]
    %v2742 = vstv %s2741
    %v2743 = vmul.f32 %v2742, %v1637
    %v2744 = vmul.f32 %v2742, %v1638
    %v2745 = vmul.f32 %v2742, %v1639
    %v2746 = vmul.f32 %v2742, %v1640
    %v2747 = vadd.f32 %v2737, %v2743
    %v2748 = vadd.f32 %v2738, %v2744
    %v2749 = vadd.f32 %v2739, %v2745
    %v2750 = vadd.f32 %v2740, %v2746
    %s2751 = sld [smem:[#allocation10 + $0x2]]
    %v2752 = vstv %s2751
    %v2753 = vmul.f32 %v2752, %v1660
    %v2754 = vmul.f32 %v2752, %v1661
    %v2755 = vmul.f32 %v2752, %v1662
    %v2756 = vmul.f32 %v2752, %v1663
    %v2757 = vadd.f32 %v2747, %v2753
    %v2758 = vadd.f32 %v2748, %v2754
    %v2759 = vadd.f32 %v2749, %v2755
    %v2760 = vadd.f32 %v2750, %v2756
    %v2763 = vsel %vm1675, %v2730, %v2729
    %v2764 = vsel %vm1546, %v2763, 0
    %2766 = vmatpush.msra.mxu0 0.0
    %2767 = vmatpush.msra.mxu0 0.0
    %2768 = vmatpush.msra.mxu0 0.0
    %2769 = vmatpush.msra.mxu0 0.0
    %2770 = vmatpush.msra.mxu0 0.0
    %2771 = vmatpush.msra.mxu0 0.0
    %2772 = vmatpush.msra.mxu0 0.0
    %2773 = vmatpush.msra.mxu0 0.0
    %2774 = vmatpush.msra.mxu0 0.0
    %2775 = vmatpush.msra.mxu0 0.0
    %2776 = vmatpush.msra.mxu0 0.0
    %2777 = vmatpush.msra.mxu0 0.0
    %2778 = vmatpush.msra.mxu0 %v2760
    %2779 = vmatpush.msra.mxu0 %v2759
    %2780 = vmatpush.msra.mxu0 %v2758
    %2781 = vmatpush.msra.mxu0 %v2757
    %2782 = vmatmul.f32.gmra.mxu0 %v2764
    %v2783 = vpop.f32.mrf.mxu0
    %v2784 = vadd.f32 0.0, %v2783
    %2785 = vdwg.mxu0
    %v2786 = vxor.u32 %v2784, 2147483648
    %v2787 = vmul.f32 %v2786, 1.442695
    %v2788 = vpow.pop %v2787
    %v2789 = vadd.f32 %v2788, 1.0
    %v2790 = vrcp.pop %v2789
    %v2791 = vmul.f32 %v2789, %v2790
    %v2792 = vsub.f32 1.0, %v2791
    %v2793 = vmul.f32 %v2790, %v2792
    %v2794 = vadd.f32 %v2790, %v2793
    %vm2795 = vweird.f32 %v2789
    %vm2796 = vweird.f32 %v2790
    %vm2797 = vmor %vm2795, %vm2796
    %v2798 = vsel %vm2797, %v2790, %v2794
    %v2799 = vand.u32 2147483647, %v2789
    %vm2800 = vcmp.eq.f32.partialorder %v2799, 8.507059e+37
    %v2801 = vand.u32 %v2789, 2147483648
    %v2802 = vor.u32 1.1754944e-38, %v2801
    %v2803 = vsel %vm2800, %v2802, %v2798
    %v2804 = vmul.f32 1.0, %v2803
    %v2806 = vrot.slane %v2804, 1
    %v2807 = vperm.slane %v2804, 0
    %v2808 = vperm.slane %v2806, 0
    %v2811 = vmul.f32 %v2703, %v2807
    %v2812 = vmul.f32 %v2705, %v2808
    %v2815 = vrot.slane %v2811, 2
    %v2816 = vrot.slane %v2812, 2
    %vm2817 = vcmask 1041408
    %v2818 = vsel %vm2817, %v2811, %v2815
    %vm2819 = vcmask 1043458
    %v2820 = vsel %vm2819, %v2811, %v2815
    %v2821 = vrot.slane %v2820, 2
    %v2822 = vsel %vm2817, %v2812, %v2816
    %v2823 = vsel %vm2819, %v2812, %v2816
    %v2824 = vrot.slane %v2823, 2
    %2829 = vst.msk [vmem:[#allocation14] sm:$0x3] %vm1757, %v2818
    %2830 = vst.msk [vmem:[#allocation14 + $0x2] sm:$0x3] %vm1757, %v2821
    %2831 = vst.msk [vmem:[#allocation14 + $0x4] sm:$0x3] %vm1757, %v2822
    %2832 = vst.msk [vmem:[#allocation14 + $0x6] sm:$0x3] %vm1757, %v2824
    // Predicated region
    $region86: #{mobile_encoder_forward.1} parent=1 // pred_check
      _
    $region87: #{mobile_encoder_forward.1} parent=1 // pred_check_branch
      %2834 = sbr.rel (0) target = $region89
    $region88: #{mobile_encoder_forward.1} parent=1 // pred_region
      %2836 = vsyncadd [#allocation6], 0
      %s2837 = sshll.u32 [#allocation11], 4
      %s2838 = int_to_ptr.vmem [resolvable:$true] %s2837
      %s2839 = sshll.u32 %s18, 4
      %s2840 = int_to_ptr.hbm [resolvable:$true] %s2839
      %2845 = dma.vmem_to_hbm [thread:$0]  %s2838, 2048, %s2840, [#allocation6], 128, 128, 8
    $region89: #{mobile_encoder_forward.1} parent=1 // pred_fallthru
      _
    // Predicated region
    $region90: #{mobile_encoder_forward.1} parent=1 // pred_check
      _
    $region91: #{mobile_encoder_forward.1} parent=1 // pred_check_branch
      %2847 = sbr.rel (0) target = $region93
    $region92: #{mobile_encoder_forward.1} parent=1 // pred_region
      %2849 = vsyncadd [#allocation13], 0
      %s2850 = sshll.u32 [#allocation12], 4
      %s2851 = int_to_ptr.vmem [resolvable:$true] %s2850
      %s2852 = sshll.u32 %s19, 4
      %s2853 = int_to_ptr.hbm [resolvable:$true] %s2852
      %2858 = dma.vmem_to_hbm [thread:$0]  %s2851, 512, %s2853, [#allocation13], 64, 64, 4
    $region93: #{mobile_encoder_forward.1} parent=1 // pred_fallthru
      _
    // Predicated region
    $region94: #{mobile_encoder_forward.1} parent=1 // pred_check
      _
    $region95: #{mobile_encoder_forward.1} parent=1 // pred_check_branch
      %2860 = sbr.rel (0) target = $region97
    $region96: #{mobile_encoder_forward.1} parent=1 // pred_region
      %2862 = vsyncadd [#allocation13], 0
      %s2863 = sshll.u32 [#allocation14], 4
      %s2864 = int_to_ptr.vmem [resolvable:$true] %s2863
      %s2865 = sshll.u32 %s20, 4
      %s2866 = int_to_ptr.hbm [resolvable:$true] %s2865
      %2871 = dma.vmem_to_hbm [thread:$0]  %s2864, 128, %s2866, [#allocation13], 32, 32, 2
    $region97: #{mobile_encoder_forward.1} parent=1 // pred_fallthru
      _
    // Predicated region
    $region98: #{mobile_encoder_forward.1} parent=1 // pred_check
      _
    $region99: #{mobile_encoder_forward.1} parent=1 // pred_check_branch
      %2873 = sbr.rel (0) target = $region101
    $region100: #{mobile_encoder_forward.1} parent=1 // pred_region
      %2875 = dma.done [#allocation6], 2048
    $region101: #{mobile_encoder_forward.1} parent=1 // pred_fallthru
      _
    // Predicated region
    $region102: #{mobile_encoder_forward.1} parent=1 // pred_check
      _
    $region103: #{mobile_encoder_forward.1} parent=1 // pred_check_branch
      %2877 = sbr.rel (0) target = $region105
    $region104: #{mobile_encoder_forward.1} parent=1 // pred_region
      %2879 = dma.done [#allocation13], 512
    $region105: #{mobile_encoder_forward.1} parent=1 // pred_fallthru
      _
    // Predicated region
    $region106: #{mobile_encoder_forward.1} parent=1 // pred_check
      _
    $region107: #{mobile_encoder_forward.1} parent=1 // pred_check_branch
      %2881 = sbr.rel (0) target = $region109
    $region108: #{mobile_encoder_forward.1} parent=1 // pred_region
      %2883 = dma.done [#allocation13], 128
    $region109: #{mobile_encoder_forward.1} parent=1 // pred_fallthru
      _
    %2884 = vsyncpa [#allocation6], 1
    %2885 = vsyncpa [#allocation13], 1
    %2886 = vsyncpa [#allocation7], 1
    %2887 = vsyncpa [#allocation9], 1

</llo_original>
